<compile_context>
chip_gen: v6e
topology: v6e:2x2x1
jax: 0.10.0
libtpu: 0.0.40
codegen_flags: <defaults>
</compile_context>

<pallas_src>
import functools

import jax
import jax.numpy as jnp
from jax.experimental import pallas as pl
from jax.experimental.pallas import tpu as pltpu

_BN_EPS = 1e-5                   # torch.nn.BatchNorm2d default
_INTER_DTYPE = jnp.bfloat16      # HBM storage dtype of the two raw conv results

_PAR = pltpu.CompilerParams(dimension_semantics=("parallel",))


# ------------------------------ in-kernel helpers -------------------------- #
def _conv3x3_channel_major(get_row, w9, halo_ref, h, w):
    """3x3 'same' conv for one image, channel-major, bf16 MXU operands / f32 accumulation.

    get_row : i -> (Cin, W) bf16 value holding the valid pixels of image row i
    w9      : (9, Cout, Cin) bf16 weights, tap index t = kh*3 + kw
    halo_ref: (Cin, (H+2)*(W+2)+2) bf16 VMEM scratch (flattened zero-padded image)
    returns : (Cout, H*(W+2)) f32 result in padded-width layout
              (columns j in [W, W+2) of every row are garbage; masked for stats / cropped later).
    """
    wp = w + 2
    length = h * wp

    # Zero the whole halo (ring + tail); the interior is rewritten just below.  Ring-only zeroing
    # saves store traffic on big images but costs many tiny masked stores at this size.
    halo_ref[...] = jnp.zeros_like(halo_ref)
    for i in range(h):                                   # image row i -> padded row i+1, col 1
        halo_ref[:, pl.ds((i + 1) * wp + 1, w)] = get_row(i)

    hp = halo_ref[...]
    cout = w9.shape[1]
    acc = jnp.zeros((cout, length), jnp.float32)
    # 9 taps = 9 contiguous lane-slices of the flat halo -> bf16 MXU dots accumulated in f32.
    for t in range(9):
        kh, kw = divmod(t, 3)
        off = kh * wp + kw
        acc = acc + jnp.dot(w9[t], hp[:, off:off + length],
                            preferred_element_type=jnp.float32)
    return acc


def _masked_stats(acc, mask):
    """Per-image channel (sum, sum-of-squares) over valid pixels (mask is 1.0 on valid lanes)."""
    s = jnp.sum(acc * mask, axis=1, keepdims=True)
    sq = jnp.sum(acc * acc * mask, axis=1, keepdims=True)
    return s, sq


# ------------------------------ kernels ------------------------------------ #
def _conv_stats_kernel(h, w, x_ref, w_ref, mask_ref, y_ref, sum_ref, sq_ref, halo_ref):
    """Stage 1: conv1 for one image + per-image channel stats.

    x_ref   : (Cin, H*W)          dense input image (f32)
    w_ref   : (9, C1, Cin)        conv1 weight (bf16)
    mask_ref: (1, H*(W+2))        1.0 on valid columns, 0.0 on the 2 pad columns per row (f32)
    y_ref   : (C1, H*(W+2))       raw conv1 output, padded-width layout (bf16)
    sum/sq  : (C1, 1)             f32 partial batch statistics
    halo_ref: (Cin, (H+2)*(W+2)+2) bf16 VMEM scratch
    """
    xb = x_ref[...].astype(jnp.bfloat16)
    acc = _conv3x3_channel_major(lambda i: xb[:, i * w:(i + 1) * w],
                                 w_ref[...], halo_ref, h, w)
    y_ref[...] = acc.astype(y_ref.dtype)
    s, sq = _masked_stats(acc, mask_ref[...])
    sum_ref[...] = s
    sq_ref[...] = sq


def _bn_relu_conv_stats_kernel(h, w, y1_ref, sc_ref, sh_ref, w_ref, mask_ref,
                               y2_ref, sum_ref, sq_ref, halo_ref):
    """Fused stage 2: BN1 affine + ReLU (VMEM only) -> conv2 -> per-image stats.

    y1_ref : (C1, H*(W+2)) bf16   raw conv1 output (padded-width layout)
    sc/sh  : (C1, 1)  f32         gamma1*rsqrt(var1+eps) / beta1 - mean1*scale1
    w_ref  : (9, C2, C1) bf16     conv2 weight
    y2_ref : (C2, H*(W+2)) bf16   raw conv2 output
    """
    wp = w + 2
    act = jnp.maximum(y1_ref[...].astype(jnp.float32) * sc_ref[...] + sh_ref[...], 0.0)
    actb = act.astype(jnp.bfloat16)
    acc = _conv3x3_channel_major(lambda i: actb[:, i * wp: i * wp + w],
                                 w_ref[...], halo_ref, h, w)
    y2_ref[...] = acc.astype(y2_ref.dtype)
    s, sq = _masked_stats(acc, mask_ref[...])
    sum_ref[...] = s
    sq_ref[...] = sq


def _bn_relu_crop_kernel(h, w, y_ref, sc_ref, sh_ref, o_ref):
    """Stage 3: BN2 affine + ReLU + crop padded-width rows to the dense NCHW layout.

    Dropout(p=0.0) is the identity and is omitted.
    """
    wp = w + 2
    v = jnp.maximum(y_ref[...].astype(jnp.float32) * sc_ref[...] + sh_ref[...], 0.0)
    for i in range(h):
        o_ref[:, pl.ds(i * w, w)] = v[:, i * wp: i * wp + w]


# ------------------------------ wrappers ------------------------------------ #
def _conv_stats(x, w9, mask, h, w):
    n, cin, hw = x.shape
    cout = w9.shape[1]
    length = mask.shape[1]
    flat = (h + 2) * (w + 2) + 2
    return pl.pallas_call(
        functools.partial(_conv_stats_kernel, h, w),
        grid=(n,),
        in_specs=[
            pl.BlockSpec((None, cin, hw), lambda i: (i, 0, 0)),
            pl.BlockSpec((9, cout, cin), lambda i: (0, 0, 0)),
            pl.BlockSpec((1, length), lambda i: (0, 0)),
        ],
        out_specs=(
            pl.BlockSpec((None, cout, length), lambda i: (i, 0, 0)),
            pl.BlockSpec((None, cout, 1), lambda i: (i, 0, 0)),
            pl.BlockSpec((None, cout, 1), lambda i: (i, 0, 0)),
        ),
        out_shape=(
            jax.ShapeDtypeStruct((n, cout, length), _INTER_DTYPE),
            jax.ShapeDtypeStruct((n, cout, 1), jnp.float32),
            jax.ShapeDtypeStruct((n, cout, 1), jnp.float32),
        ),
        scratch_shapes=[pltpu.VMEM((cin, flat), jnp.bfloat16)],
        compiler_params=_PAR,
    )(x, w9, mask)


def _bn_relu_conv_stats(y1, scale1, shift1, w9, mask, h, w):
    n, c1, length = y1.shape
    c2 = w9.shape[1]
    flat = (h + 2) * (w + 2) + 2
    return pl.pallas_call(
        functools.partial(_bn_relu_conv_stats_kernel, h, w),
        grid=(n,),
        in_specs=[
            pl.BlockSpec((None, c1, length), lambda i: (i, 0, 0)),
            pl.BlockSpec((c1, 1), lambda i: (0, 0)),
            pl.BlockSpec((c1, 1), lambda i: (0, 0)),
            pl.BlockSpec((9, c2, c1), lambda i: (0, 0, 0)),
            pl.BlockSpec((1, length), lambda i: (0, 0)),
        ],
        out_specs=(
            pl.BlockSpec((None, c2, length), lambda i: (i, 0, 0)),
            pl.BlockSpec((None, c2, 1), lambda i: (i, 0, 0)),
            pl.BlockSpec((None, c2, 1), lambda i: (i, 0, 0)),
        ),
        out_shape=(
            jax.ShapeDtypeStruct((n, c2, length), _INTER_DTYPE),
            jax.ShapeDtypeStruct((n, c2, 1), jnp.float32),
            jax.ShapeDtypeStruct((n, c2, 1), jnp.float32),
        ),
        scratch_shapes=[pltpu.VMEM((c1, flat), jnp.bfloat16)],
        compiler_params=_PAR,
    )(y1, scale1, shift1, w9, mask)


def _bn_relu_crop(y, scale, shift, h, w):
    n, c, length = y.shape
    return pl.pallas_call(
        functools.partial(_bn_relu_crop_kernel, h, w),
        grid=(n,),
        in_specs=[
            pl.BlockSpec((None, c, length), lambda i: (i, 0, 0)),
            pl.BlockSpec((c, 1), lambda i: (0, 0)),
            pl.BlockSpec((c, 1), lambda i: (0, 0)),
        ],
        out_specs=pl.BlockSpec((None, c, h * w), lambda i: (i, 0, 0)),
        out_shape=jax.ShapeDtypeStruct((n, c, h * w), jnp.float32),
        compiler_params=_PAR,
    )(y, scale, shift)


def _bn_affine(psum, psumsq, gamma, beta, count):
    """Fold training-mode batch stats + gamma/beta into per-channel (scale, shift). Tiny JAX glue."""
    total = jnp.sum(psum, axis=0)            # (C, 1)
    total_sq = jnp.sum(psumsq, axis=0)       # (C, 1)
    mean = total / count
    var = total_sq / count - mean * mean     # single-pass biased (training-mode) variance, f32
    scale = gamma.reshape(-1, 1) * jax.lax.rsqrt(var + _BN_EPS)
    shift = beta.reshape(-1, 1) - mean * scale
    return scale, shift


def conv_block_forward(x_nchw, params):
    """ConvBlock.forward: (conv3x3 'same', no bias -> BN(train stats) -> ReLU) x2; Dropout(p=0)=id."""
    n, cin, h, w = x_nchw.shape
    c1 = params["w1"].shape[0]
    c2 = params["w2"].shape[0]
    wp = w + 2
    length = h * wp
    count = n * h * w

    # NCHW is already channel-major: only a free contiguous reshape, no transpose / no HBM pad.
    x = x_nchw.reshape(n, cin, h * w).astype(jnp.float32)

    # torch (Cout, Cin, 3, 3) -> (kh*3+kw, Cout, Cin), bf16 MXU operands
    w1 = jnp.transpose(params["w1"], (2, 3, 0, 1)).reshape(9, c1, cin).astype(jnp.bfloat16)
    w2 = jnp.transpose(params["w2"], (2, 3, 0, 1)).reshape(9, c2, c1).astype(jnp.bfloat16)

    # 1.0 on valid columns of the padded-width layout, 0.0 on the 2 garbage columns per row.
    mask = (jnp.arange(length) % wp < w).astype(jnp.float32).reshape(1, length)

    # stage 1: conv1 + single-pass batch-stat partials
    y1, s1, ss1 = _conv_stats(x, w1, mask, h, w)
    scale1, shift1 = _bn_affine(s1, ss1, params["g1"], params["b1"], count)

    # stage 2 (fused): BN1 apply + ReLU + conv2 + stat partials; normalized act never leaves VMEM
    y2, s2, ss2 = _bn_relu_conv_stats(y1, scale1, shift1, w2, mask, h, w)
    scale2, shift2 = _bn_affine(s2, ss2, params["g2"], params["b2"], count)

    # stage 3: BN2 apply + ReLU + crop to dense NCHW
    out = _bn_relu_crop(y2, scale2, shift2, h, w)        # (N, C2, H*W) f32
    return out.reshape(n, c2, h, w)


# ------------------------------ reference ---------------------------------- #
def _reference(x_nchw, params):
    dn = ("NCHW", "OIHW", "NCHW")

    def bn_relu(y, g, b):
        mean = jnp.mean(y, axis=(0, 2, 3), keepdims=True)
        var = jnp.mean(jnp.square(y - mean), axis=(0, 2, 3), keepdims=True)
        y = (y - mean) * jax.lax.rsqrt(var + _BN_EPS)
        y = y * g.reshape(1, -1, 1, 1) + b.reshape(1, -1, 1, 1)
        return jnp.maximum(y, 0.0)

    y = jax.lax.conv_general_dilated(x_nchw, params["w1"], (1, 1), "SAME", dimension_numbers=dn)
    y = bn_relu(y, params["g1"], params["b1"])
    y = jax.lax.conv_general_dilated(y, params["w2"], (1, 1), "SAME", dimension_numbers=dn)
    return bn_relu(y, params["g2"], params["b2"])


# -------------------------------- main -------------------------------------- #
if __name__ == "__main__":
    N, Cin, Cout, H, W = 2, 4, 8, 16, 16

    key = jax.random.PRNGKey(0)
    kx, kw1, kw2 = jax.random.split(key, 3)

    x = jax.random.normal(kx, (N, Cin, H, W), jnp.float32)

    # Deterministic synthetic parameters (shapes per torch.nn.Conv2d / BatchNorm2d __init__).
    params = {
        "w1": 0.1 * jax.random.normal(kw1, (Cout, Cin, 3, 3), jnp.float32),
        "g1": jnp.ones((Cout,), jnp.float32),
        "b1": jnp.zeros((Cout,), jnp.float32),
        "w2": 0.1 * jax.random.normal(kw2, (Cout, Cout, 3, 3), jnp.float32),
        "g2": jnp.ones((Cout,), jnp.float32),
        "b2": jnp.zeros((Cout,), jnp.float32),
    }

    out = jax.block_until_ready(jax.jit(conv_block_forward)(x, params))
    assert out.shape == (N, Cout, H, W), out.shape

    ref = _reference(x, params)
    assert jnp.allclose(out, ref, atol=2e-2, rtol=2e-2), float(jnp.max(jnp.abs(out - ref)))

    print("KERNEL_OK")
</pallas_src>

<mosaic_0001>
module attributes {stable_mosaic.version = 11 : i64} {
  func.func @_conv_stats_kernel(%arg0: i32, %arg1: memref<1x4x256xf32, #tpu.memory_space<vmem>>, %arg2: memref<9x8x4xbf16, #tpu.memory_space<vmem>>, %arg3: memref<1x288xf32, #tpu.memory_space<vmem>>, %arg4: memref<1x8x288xbf16, #tpu.memory_space<vmem>>, %arg5: memref<1x8x1xf32, #tpu.memory_space<vmem>>, %arg6: memref<1x8x1xf32, #tpu.memory_space<vmem>>, %arg7: memref<4x326xbf16, #tpu.memory_space<vmem>>) attributes {dimension_semantics = [#tpu.dimension_semantics<parallel>], iteration_bounds = array<i64: 2>, scalar_prefetch = 0 : i64, scratch_operands = 1 : i64, tpu.core_type = #tpu.core_type<tc>, window_params = [{transform_indices = @transform_0, window_bounds = array<i64: 1, 4, 256>}, {pipeline_mode = #tpu.pipeline_mode<synchronous>, transform_indices = @transform_1, window_bounds = array<i64: 9, 8, 4>}, {pipeline_mode = #tpu.pipeline_mode<synchronous>, transform_indices = @transform_2, window_bounds = array<i64: 1, 288>}, {transform_indices = @transform_3, window_bounds = array<i64: 1, 8, 288>}, {transform_indices = @transform_4, window_bounds = array<i64: 1, 8, 1>}, {transform_indices = @transform_5, window_bounds = array<i64: 1, 8, 1>}]} {
    %c0 = arith.constant 0 : index
    %c0_0 = arith.constant 0 : index
    %c0_1 = arith.constant 0 : index
    %0 = vector.load %arg1[%c0, %c0_0, %c0_1] : memref<1x4x256xf32, #tpu.memory_space<vmem>>, vector<1x4x256xf32>
    %1 = vector.shape_cast %0 : vector<1x4x256xf32> to vector<4x256xf32>
    %2 = arith.truncf %1 : vector<4x256xf32> to vector<4x256xbf16>
    %c0_2 = arith.constant 0 : index
    %c0_3 = arith.constant 0 : index
    %c0_4 = arith.constant 0 : index
    %3 = vector.load %arg2[%c0_2, %c0_3, %c0_4] : memref<9x8x4xbf16, #tpu.memory_space<vmem>>, vector<9x8x4xbf16>
    %cst = arith.constant 0.000000e+00 : bf16
    %4 = vector.broadcast %cst : bf16 to vector<4x326xbf16>
    %c0_5 = arith.constant 0 : index
    %c0_6 = arith.constant 0 : index
    %5 = vector.load %arg7[%c0_5, %c0_6] : memref<4x326xbf16, #tpu.memory_space<vmem>>, vector<4x326xbf16>
    tpu.vector_store %arg7[%c0_5, %c0_6], %4 {strides = array<i32>} : memref<4x326xbf16, #tpu.memory_space<vmem>>, vector<4x326xbf16>,
    %6 = vector.extract_strided_slice %2 {offsets = [0, 0], sizes = [4, 16], strides = [1, 1]} : vector<4x256xbf16> to vector<4x16xbf16>
    %c0_7 = arith.constant 0 : index
    %c19 = arith.constant 19 : index
    %7 = vector.load %arg7[%c0_7, %c19] : memref<4x326xbf16, #tpu.memory_space<vmem>>, vector<4x16xbf16>
    tpu.vector_store %arg7[%c0_7, %c19], %6 {strides = array<i32>} : memref<4x326xbf16, #tpu.memory_space<vmem>>, vector<4x16xbf16>,
    %8 = vector.extract_strided_slice %2 {offsets = [0, 16], sizes = [4, 16], strides = [1, 1]} : vector<4x256xbf16> to vector<4x16xbf16>
    %c0_8 = arith.constant 0 : index
    %c37 = arith.constant 37 : index
    %9 = vector.load %arg7[%c0_8, %c37] : memref<4x326xbf16, #tpu.memory_space<vmem>>, vector<4x16xbf16>
    tpu.vector_store %arg7[%c0_8, %c37], %8 {strides = array<i32>} : memref<4x326xbf16, #tpu.memory_space<vmem>>, vector<4x16xbf16>,
    %10 = vector.extract_strided_slice %2 {offsets = [0, 32], sizes = [4, 16], strides = [1, 1]} : vector<4x256xbf16> to vector<4x16xbf16>
    %c0_9 = arith.constant 0 : index
    %c55 = arith.constant 55 : index
    %11 = vector.load %arg7[%c0_9, %c55] : memref<4x326xbf16, #tpu.memory_space<vmem>>, vector<4x16xbf16>
    tpu.vector_store %arg7[%c0_9, %c55], %10 {strides = array<i32>} : memref<4x326xbf16, #tpu.memory_space<vmem>>, vector<4x16xbf16>,
    %12 = vector.extract_strided_slice %2 {offsets = [0, 48], sizes = [4, 16], strides = [1, 1]} : vector<4x256xbf16> to vector<4x16xbf16>
    %c0_10 = arith.constant 0 : index
    %c73 = arith.constant 73 : index
    %13 = vector.load %arg7[%c0_10, %c73] : memref<4x326xbf16, #tpu.memory_space<vmem>>, vector<4x16xbf16>
    tpu.vector_store %arg7[%c0_10, %c73], %12 {strides = array<i32>} : memref<4x326xbf16, #tpu.memory_space<vmem>>, vector<4x16xbf16>,
    %14 = vector.extract_strided_slice %2 {offsets = [0, 64], sizes = [4, 16], strides = [1, 1]} : vector<4x256xbf16> to vector<4x16xbf16>
    %c0_11 = arith.constant 0 : index
    %c91 = arith.constant 91 : index
    %15 = vector.load %arg7[%c0_11, %c91] : memref<4x326xbf16, #tpu.memory_space<vmem>>, vector<4x16xbf16>
    tpu.vector_store %arg7[%c0_11, %c91], %14 {strides = array<i32>} : memref<4x326xbf16, #tpu.memory_space<vmem>>, vector<4x16xbf16>,
    %16 = vector.extract_strided_slice %2 {offsets = [0, 80], sizes = [4, 16], strides = [1, 1]} : vector<4x256xbf16> to vector<4x16xbf16>
    %c0_12 = arith.constant 0 : index
    %c109 = arith.constant 109 : index
    %17 = vector.load %arg7[%c0_12, %c109] : memref<4x326xbf16, #tpu.memory_space<vmem>>, vector<4x16xbf16>
    tpu.vector_store %arg7[%c0_12, %c109], %16 {strides = array<i32>} : memref<4x326xbf16, #tpu.memory_space<vmem>>, vector<4x16xbf16>,
    %18 = vector.extract_strided_slice %2 {offsets = [0, 96], sizes = [4, 16], strides = [1, 1]} : vector<4x256xbf16> to vector<4x16xbf16>
    %c0_13 = arith.constant 0 : index
    %c127 = arith.constant 127 : index
    %19 = vector.load %arg7[%c0_13, %c127] : memref<4x326xbf16, #tpu.memory_space<vmem>>, vector<4x16xbf16>
    tpu.vector_store %arg7[%c0_13, %c127], %18 {strides = array<i32>} : memref<4x326xbf16, #tpu.memory_space<vmem>>, vector<4x16xbf16>,
    %20 = vector.extract_strided_slice %2 {offsets = [0, 112], sizes = [4, 16], strides = [1, 1]} : vector<4x256xbf16> to vector<4x16xbf16>
    %c0_14 = arith.constant 0 : index
    %c145 = arith.constant 145 : index
    %21 = vector.load %arg7[%c0_14, %c145] : memref<4x326xbf16, #tpu.memory_space<vmem>>, vector<4x16xbf16>
    tpu.vector_store %arg7[%c0_14, %c145], %20 {strides = array<i32>} : memref<4x326xbf16, #tpu.memory_space<vmem>>, vector<4x16xbf16>,
    %22 = vector.extract_strided_slice %2 {offsets = [0, 128], sizes = [4, 16], strides = [1, 1]} : vector<4x256xbf16> to vector<4x16xbf16>
    %c0_15 = arith.constant 0 : index
    %c163 = arith.constant 163 : index
    %23 = vector.load %arg7[%c0_15, %c163] : memref<4x326xbf16, #tpu.memory_space<vmem>>, vector<4x16xbf16>
    tpu.vector_store %arg7[%c0_15, %c163], %22 {strides = array<i32>} : memref<4x326xbf16, #tpu.memory_space<vmem>>, vector<4x16xbf16>,
    %24 = vector.extract_strided_slice %2 {offsets = [0, 144], sizes = [4, 16], strides = [1, 1]} : vector<4x256xbf16> to vector<4x16xbf16>
    %c0_16 = arith.constant 0 : index
    %c181 = arith.constant 181 : index
    %25 = vector.load %arg7[%c0_16, %c181] : memref<4x326xbf16, #tpu.memory_space<vmem>>, vector<4x16xbf16>
    tpu.vector_store %arg7[%c0_16, %c181], %24 {strides = array<i32>} : memref<4x326xbf16, #tpu.memory_space<vmem>>, vector<4x16xbf16>,
    %26 = vector.extract_strided_slice %2 {offsets = [0, 160], sizes = [4, 16], strides = [1, 1]} : vector<4x256xbf16> to vector<4x16xbf16>
    %c0_17 = arith.constant 0 : index
    %c199 = arith.constant 199 : index
    %27 = vector.load %arg7[%c0_17, %c199] : memref<4x326xbf16, #tpu.memory_space<vmem>>, vector<4x16xbf16>
    tpu.vector_store %arg7[%c0_17, %c199], %26 {strides = array<i32>} : memref<4x326xbf16, #tpu.memory_space<vmem>>, vector<4x16xbf16>,
    %28 = vector.extract_strided_slice %2 {offsets = [0, 176], sizes = [4, 16], strides = [1, 1]} : vector<4x256xbf16> to vector<4x16xbf16>
    %c0_18 = arith.constant 0 : index
    %c217 = arith.constant 217 : index
    %29 = vector.load %arg7[%c0_18, %c217] : memref<4x326xbf16, #tpu.memory_space<vmem>>, vector<4x16xbf16>
    tpu.vector_store %arg7[%c0_18, %c217], %28 {strides = array<i32>} : memref<4x326xbf16, #tpu.memory_space<vmem>>, vector<4x16xbf16>,
    %30 = vector.extract_strided_slice %2 {offsets = [0, 192], sizes = [4, 16], strides = [1, 1]} : vector<4x256xbf16> to vector<4x16xbf16>
    %c0_19 = arith.constant 0 : index
    %c235 = arith.constant 235 : index
    %31 = vector.load %arg7[%c0_19, %c235] : memref<4x326xbf16, #tpu.memory_space<vmem>>, vector<4x16xbf16>
    tpu.vector_store %arg7[%c0_19, %c235], %30 {strides = array<i32>} : memref<4x326xbf16, #tpu.memory_space<vmem>>, vector<4x16xbf16>,
    %32 = vector.extract_strided_slice %2 {offsets = [0, 208], sizes = [4, 16], strides = [1, 1]} : vector<4x256xbf16> to vector<4x16xbf16>
    %c0_20 = arith.constant 0 : index
    %c253 = arith.constant 253 : index
    %33 = vector.load %arg7[%c0_20, %c253] : memref<4x326xbf16, #tpu.memory_space<vmem>>, vector<4x16xbf16>
    tpu.vector_store %arg7[%c0_20, %c253], %32 {strides = array<i32>} : memref<4x326xbf16, #tpu.memory_space<vmem>>, vector<4x16xbf16>,
    %34 = vector.extract_strided_slice %2 {offsets = [0, 224], sizes = [4, 16], strides = [1, 1]} : vector<4x256xbf16> to vector<4x16xbf16>
    %c0_21 = arith.constant 0 : index
    %c271 = arith.constant 271 : index
    %35 = vector.load %arg7[%c0_21, %c271] : memref<4x326xbf16, #tpu.memory_space<vmem>>, vector<4x16xbf16>
    tpu.vector_store %arg7[%c0_21, %c271], %34 {strides = array<i32>} : memref<4x326xbf16, #tpu.memory_space<vmem>>, vector<4x16xbf16>,
    %36 = vector.extract_strided_slice %2 {offsets = [0, 240], sizes = [4, 16], strides = [1, 1]} : vector<4x256xbf16> to vector<4x16xbf16>
    %c0_22 = arith.constant 0 : index
    %c289 = arith.constant 289 : index
    %37 = vector.load %arg7[%c0_22, %c289] : memref<4x326xbf16, #tpu.memory_space<vmem>>, vector<4x16xbf16>
    tpu.vector_store %arg7[%c0_22, %c289], %36 {strides = array<i32>} : memref<4x326xbf16, #tpu.memory_space<vmem>>, vector<4x16xbf16>,
    %c0_23 = arith.constant 0 : index
    %c0_24 = arith.constant 0 : index
    %38 = vector.load %arg7[%c0_23, %c0_24] : memref<4x326xbf16, #tpu.memory_space<vmem>>, vector<4x326xbf16>
    %cst_25 = arith.constant 0.000000e+00 : f32
    %39 = vector.broadcast %cst_25 : f32 to vector<8x288xf32>
    %40 = vector.extract_strided_slice %3 {offsets = [0, 0, 0], sizes = [1, 8, 4], strides = [1, 1, 1]} : vector<9x8x4xbf16> to vector<1x8x4xbf16>
    %41 = vector.shape_cast %40 : vector<1x8x4xbf16> to vector<8x4xbf16>
    %42 = vector.extract_strided_slice %38 {offsets = [0, 0], sizes = [4, 288], strides = [1, 1]} : vector<4x326xbf16> to vector<4x288xbf16>
    %cst_26 = arith.constant dense<0.000000e+00> : vector<8x288xf32>
    %43 = tpu.matmul %41, %42, %cst_26 {dimension_numbers = #tpu.dot_dimension_numbers<[1], [0], [0], [1], [0, 0, 1, 1], [], []>} : vector<8x4xbf16>, vector<4x288xbf16>, vector<8x288xf32> -> vector<8x288xf32>
    %44 = arith.addf %39, %43 : vector<8x288xf32>
    %45 = vector.extract_strided_slice %3 {offsets = [1, 0, 0], sizes = [1, 8, 4], strides = [1, 1, 1]} : vector<9x8x4xbf16> to vector<1x8x4xbf16>
    %46 = vector.shape_cast %45 : vector<1x8x4xbf16> to vector<8x4xbf16>
    %47 = vector.extract_strided_slice %38 {offsets = [0, 1], sizes = [4, 288], strides = [1, 1]} : vector<4x326xbf16> to vector<4x288xbf16>
    %cst_27 = arith.constant dense<0.000000e+00> : vector<8x288xf32>
    %48 = tpu.matmul %46, %47, %cst_27 {dimension_numbers = #tpu.dot_dimension_numbers<[1], [0], [0], [1], [0, 0, 1, 1], [], []>} : vector<8x4xbf16>, vector<4x288xbf16>, vector<8x288xf32> -> vector<8x288xf32>
    %49 = arith.addf %44, %48 : vector<8x288xf32>
    %50 = vector.extract_strided_slice %3 {offsets = [2, 0, 0], sizes = [1, 8, 4], strides = [1, 1, 1]} : vector<9x8x4xbf16> to vector<1x8x4xbf16>
    %51 = vector.shape_cast %50 : vector<1x8x4xbf16> to vector<8x4xbf16>
    %52 = vector.extract_strided_slice %38 {offsets = [0, 2], sizes = [4, 288], strides = [1, 1]} : vector<4x326xbf16> to vector<4x288xbf16>
    %cst_28 = arith.constant dense<0.000000e+00> : vector<8x288xf32>
    %53 = tpu.matmul %51, %52, %cst_28 {dimension_numbers = #tpu.dot_dimension_numbers<[1], [0], [0], [1], [0, 0, 1, 1], [], []>} : vector<8x4xbf16>, vector<4x288xbf16>, vector<8x288xf32> -> vector<8x288xf32>
    %54 = arith.addf %49, %53 : vector<8x288xf32>
    %55 = vector.extract_strided_slice %3 {offsets = [3, 0, 0], sizes = [1, 8, 4], strides = [1, 1, 1]} : vector<9x8x4xbf16> to vector<1x8x4xbf16>
    %56 = vector.shape_cast %55 : vector<1x8x4xbf16> to vector<8x4xbf16>
    %57 = vector.extract_strided_slice %38 {offsets = [0, 18], sizes = [4, 288], strides = [1, 1]} : vector<4x326xbf16> to vector<4x288xbf16>
    %cst_29 = arith.constant dense<0.000000e+00> : vector<8x288xf32>
    %58 = tpu.matmul %56, %57, %cst_29 {dimension_numbers = #tpu.dot_dimension_numbers<[1], [0], [0], [1], [0, 0, 1, 1], [], []>} : vector<8x4xbf16>, vector<4x288xbf16>, vector<8x288xf32> -> vector<8x288xf32>
    %59 = arith.addf %54, %58 : vector<8x288xf32>
    %60 = vector.extract_strided_slice %3 {offsets = [4, 0, 0], sizes = [1, 8, 4], strides = [1, 1, 1]} : vector<9x8x4xbf16> to vector<1x8x4xbf16>
    %61 = vector.shape_cast %60 : vector<1x8x4xbf16> to vector<8x4xbf16>
    %62 = vector.extract_strided_slice %38 {offsets = [0, 19], sizes = [4, 288], strides = [1, 1]} : vector<4x326xbf16> to vector<4x288xbf16>
    %cst_30 = arith.constant dense<0.000000e+00> : vector<8x288xf32>
    %63 = tpu.matmul %61, %62, %cst_30 {dimension_numbers = #tpu.dot_dimension_numbers<[1], [0], [0], [1], [0, 0, 1, 1], [], []>} : vector<8x4xbf16>, vector<4x288xbf16>, vector<8x288xf32> -> vector<8x288xf32>
    %64 = arith.addf %59, %63 : vector<8x288xf32>
    %65 = vector.extract_strided_slice %3 {offsets = [5, 0, 0], sizes = [1, 8, 4], strides = [1, 1, 1]} : vector<9x8x4xbf16> to vector<1x8x4xbf16>
    %66 = vector.shape_cast %65 : vector<1x8x4xbf16> to vector<8x4xbf16>
    %67 = vector.extract_strided_slice %38 {offsets = [0, 20], sizes = [4, 288], strides = [1, 1]} : vector<4x326xbf16> to vector<4x288xbf16>
    %cst_31 = arith.constant dense<0.000000e+00> : vector<8x288xf32>
    %68 = tpu.matmul %66, %67, %cst_31 {dimension_numbers = #tpu.dot_dimension_numbers<[1], [0], [0], [1], [0, 0, 1, 1], [], []>} : vector<8x4xbf16>, vector<4x288xbf16>, vector<8x288xf32> -> vector<8x288xf32>
    %69 = arith.addf %64, %68 : vector<8x288xf32>
    %70 = vector.extract_strided_slice %3 {offsets = [6, 0, 0], sizes = [1, 8, 4], strides = [1, 1, 1]} : vector<9x8x4xbf16> to vector<1x8x4xbf16>
    %71 = vector.shape_cast %70 : vector<1x8x4xbf16> to vector<8x4xbf16>
    %72 = vector.extract_strided_slice %38 {offsets = [0, 36], sizes = [4, 288], strides = [1, 1]} : vector<4x326xbf16> to vector<4x288xbf16>
    %cst_32 = arith.constant dense<0.000000e+00> : vector<8x288xf32>
    %73 = tpu.matmul %71, %72, %cst_32 {dimension_numbers = #tpu.dot_dimension_numbers<[1], [0], [0], [1], [0, 0, 1, 1], [], []>} : vector<8x4xbf16>, vector<4x288xbf16>, vector<8x288xf32> -> vector<8x288xf32>
    %74 = arith.addf %69, %73 : vector<8x288xf32>
    %75 = vector.extract_strided_slice %3 {offsets = [7, 0, 0], sizes = [1, 8, 4], strides = [1, 1, 1]} : vector<9x8x4xbf16> to vector<1x8x4xbf16>
    %76 = vector.shape_cast %75 : vector<1x8x4xbf16> to vector<8x4xbf16>
    %77 = vector.extract_strided_slice %38 {offsets = [0, 37], sizes = [4, 288], strides = [1, 1]} : vector<4x326xbf16> to vector<4x288xbf16>
    %cst_33 = arith.constant dense<0.000000e+00> : vector<8x288xf32>
    %78 = tpu.matmul %76, %77, %cst_33 {dimension_numbers = #tpu.dot_dimension_numbers<[1], [0], [0], [1], [0, 0, 1, 1], [], []>} : vector<8x4xbf16>, vector<4x288xbf16>, vector<8x288xf32> -> vector<8x288xf32>
    %79 = arith.addf %74, %78 : vector<8x288xf32>
    %80 = vector.extract_strided_slice %3 {offsets = [8, 0, 0], sizes = [1, 8, 4], strides = [1, 1, 1]} : vector<9x8x4xbf16> to vector<1x8x4xbf16>
    %81 = vector.shape_cast %80 : vector<1x8x4xbf16> to vector<8x4xbf16>
    %82 = vector.extract_strided_slice %38 {offsets = [0, 38], sizes = [4, 288], strides = [1, 1]} : vector<4x326xbf16> to vector<4x288xbf16>
    %cst_34 = arith.constant dense<0.000000e+00> : vector<8x288xf32>
    %83 = tpu.matmul %81, %82, %cst_34 {dimension_numbers = #tpu.dot_dimension_numbers<[1], [0], [0], [1], [0, 0, 1, 1], [], []>} : vector<8x4xbf16>, vector<4x288xbf16>, vector<8x288xf32> -> vector<8x288xf32>
    %84 = arith.addf %79, %83 : vector<8x288xf32>
    %85 = arith.truncf %84 : vector<8x288xf32> to vector<8x288xbf16>
    %c0_35 = arith.constant 0 : index
    %c0_36 = arith.constant 0 : index
    %c0_37 = arith.constant 0 : index
    %86 = vector.load %arg4[%c0_35, %c0_36, %c0_37] : memref<1x8x288xbf16, #tpu.memory_space<vmem>>, vector<1x8x288xbf16>
    %87 = vector.shape_cast %86 : vector<1x8x288xbf16> to vector<8x288xbf16>
    %88 = vector.shape_cast %85 : vector<8x288xbf16> to vector<1x8x288xbf16>
    tpu.vector_store %arg4[%c0_35, %c0_36, %c0_37], %88 {strides = array<i32>} : memref<1x8x288xbf16, #tpu.memory_space<vmem>>, vector<1x8x288xbf16>,
    %c0_38 = arith.constant 0 : index
    %c0_39 = arith.constant 0 : index
    %89 = vector.load %arg3[%c0_38, %c0_39] : memref<1x288xf32, #tpu.memory_space<vmem>>, vector<1x288xf32>
    %90 = vector.broadcast %89 : vector<1x288xf32> to vector<8x288xf32>
    %91 = arith.mulf %84, %90 : vector<8x288xf32>
    %cst_40 = arith.constant dense<0.000000e+00> : vector<8xf32>
    %92 = vector.multi_reduction <add>, %91, %cst_40 [1] : vector<8x288xf32> to vector<8xf32>
    %93 = vector.shape_cast %92 : vector<8xf32> to vector<8x1xf32>
    %94 = arith.mulf %84, %84 : vector<8x288xf32>
    %95 = vector.broadcast %89 : vector<1x288xf32> to vector<8x288xf32>
    %96 = arith.mulf %94, %95 : vector<8x288xf32>
    %cst_41 = arith.constant dense<0.000000e+00> : vector<8xf32>
    %97 = vector.multi_reduction <add>, %96, %cst_41 [1] : vector<8x288xf32> to vector<8xf32>
    %98 = vector.shape_cast %97 : vector<8xf32> to vector<8x1xf32>
    %c0_42 = arith.constant 0 : index
    %c0_43 = arith.constant 0 : index
    %c0_44 = arith.constant 0 : index
    %99 = vector.load %arg5[%c0_42, %c0_43, %c0_44] : memref<1x8x1xf32, #tpu.memory_space<vmem>>, vector<1x8x1xf32>
    %100 = vector.shape_cast %99 : vector<1x8x1xf32> to vector<8x1xf32>
    %101 = vector.shape_cast %93 : vector<8x1xf32> to vector<1x8x1xf32>
    tpu.vector_store %arg5[%c0_42, %c0_43, %c0_44], %101 {strides = array<i32>} : memref<1x8x1xf32, #tpu.memory_space<vmem>>, vector<1x8x1xf32>,
    %c0_45 = arith.constant 0 : index
    %c0_46 = arith.constant 0 : index
    %c0_47 = arith.constant 0 : index
    %102 = vector.load %arg6[%c0_45, %c0_46, %c0_47] : memref<1x8x1xf32, #tpu.memory_space<vmem>>, vector<1x8x1xf32>
    %103 = vector.shape_cast %102 : vector<1x8x1xf32> to vector<8x1xf32>
    %104 = vector.shape_cast %98 : vector<8x1xf32> to vector<1x8x1xf32>
    tpu.vector_store %arg6[%c0_45, %c0_46, %c0_47], %104 {strides = array<i32>} : memref<1x8x1xf32, #tpu.memory_space<vmem>>, vector<1x8x1xf32>,
    return
  }
  func.func @transform_0(%arg0: i32) -> (i32, i32, i32) {
    %c0_i32 = arith.constant 0 : i32
    %c0_i32_0 = arith.constant 0 : i32
    %c0_i32_1 = arith.constant 0 : i32
    return %arg0, %c0_i32, %c0_i32_0 : i32, i32, i32
  }
  func.func @transform_1(%arg0: i32) -> (i32, i32, i32) {
    %c0_i32 = arith.constant 0 : i32
    %c0_i32_0 = arith.constant 0 : i32
    %c0_i32_1 = arith.constant 0 : i32
    %c0_i32_2 = arith.constant 0 : i32
    return %c0_i32, %c0_i32_0, %c0_i32_1 : i32, i32, i32
  }
  func.func @transform_2(%arg0: i32) -> (i32, i32) {
    %c0_i32 = arith.constant 0 : i32
    %c0_i32_0 = arith.constant 0 : i32
    %c0_i32_1 = arith.constant 0 : i32
    return %c0_i32, %c0_i32_0 : i32, i32
  }
  func.func @transform_3(%arg0: i32) -> (i32, i32, i32) {
    %c0_i32 = arith.constant 0 : i32
    %c0_i32_0 = arith.constant 0 : i32
    %c0_i32_1 = arith.constant 0 : i32
    return %arg0, %c0_i32, %c0_i32_0 : i32, i32, i32
  }
  func.func @transform_4(%arg0: i32) -> (i32, i32, i32) {
    %c0_i32 = arith.constant 0 : i32
    %c0_i32_0 = arith.constant 0 : i32
    %c0_i32_1 = arith.constant 0 : i32
    return %arg0, %c0_i32, %c0_i32_0 : i32, i32, i32
  }
  func.func @transform_5(%arg0: i32) -> (i32, i32, i32) {
    %c0_i32 = arith.constant 0 : i32
    %c0_i32_0 = arith.constant 0 : i32
    %c0_i32_1 = arith.constant 0 : i32
    return %arg0, %c0_i32, %c0_i32_0 : i32, i32, i32
  }
}

module attributes {stable_mosaic.version = 11 : i64} {
  func.func @_bn_relu_conv_stats_kernel(%arg0: i32, %arg1: memref<1x8x288xbf16, #tpu.memory_space<vmem>>, %arg2: memref<8x1xf32, #tpu.memory_space<vmem>>, %arg3: memref<8x1xf32, #tpu.memory_space<vmem>>, %arg4: memref<9x8x8xbf16, #tpu.memory_space<vmem>>, %arg5: memref<1x288xf32, #tpu.memory_space<vmem>>, %arg6: memref<1x8x288xbf16, #tpu.memory_space<vmem>>, %arg7: memref<1x8x1xf32, #tpu.memory_space<vmem>>, %arg8: memref<1x8x1xf32, #tpu.memory_space<vmem>>, %arg9: memref<8x326xbf16, #tpu.memory_space<vmem>>) attributes {dimension_semantics = [#tpu.dimension_semantics<parallel>], iteration_bounds = array<i64: 2>, scalar_prefetch = 0 : i64, scratch_operands = 1 : i64, tpu.core_type = #tpu.core_type<tc>, window_params = [{transform_indices = @transform_0, window_bounds = array<i64: 1, 8, 288>}, {pipeline_mode = #tpu.pipeline_mode<synchronous>, transform_indices = @transform_1, window_bounds = array<i64: 8, 1>}, {pipeline_mode = #tpu.pipeline_mode<synchronous>, transform_indices = @transform_2, window_bounds = array<i64: 8, 1>}, {pipeline_mode = #tpu.pipeline_mode<synchronous>, transform_indices = @transform_3, window_bounds = array<i64: 9, 8, 8>}, {pipeline_mode = #tpu.pipeline_mode<synchronous>, transform_indices = @transform_4, window_bounds = array<i64: 1, 288>}, {transform_indices = @transform_5, window_bounds = array<i64: 1, 8, 288>}, {transform_indices = @transform_6, window_bounds = array<i64: 1, 8, 1>}, {transform_indices = @transform_7, window_bounds = array<i64: 1, 8, 1>}]} {
    %c0 = arith.constant 0 : index
    %c0_0 = arith.constant 0 : index
    %c0_1 = arith.constant 0 : index
    %0 = vector.load %arg1[%c0, %c0_0, %c0_1] : memref<1x8x288xbf16, #tpu.memory_space<vmem>>, vector<1x8x288xbf16>
    %1 = vector.shape_cast %0 : vector<1x8x288xbf16> to vector<8x288xbf16>
    %2 = arith.extf %1 : vector<8x288xbf16> to vector<8x288xf32>
    %c0_2 = arith.constant 0 : index
    %c0_3 = arith.constant 0 : index
    %3 = vector.load %arg2[%c0_2, %c0_3] : memref<8x1xf32, #tpu.memory_space<vmem>>, vector<8x1xf32>
    %4 = vector.broadcast %3 : vector<8x1xf32> to vector<8x288xf32>
    %5 = arith.mulf %2, %4 : vector<8x288xf32>
    %c0_4 = arith.constant 0 : index
    %c0_5 = arith.constant 0 : index
    %6 = vector.load %arg3[%c0_4, %c0_5] : memref<8x1xf32, #tpu.memory_space<vmem>>, vector<8x1xf32>
    %7 = vector.broadcast %6 : vector<8x1xf32> to vector<8x288xf32>
    %8 = arith.addf %5, %7 : vector<8x288xf32>
    %cst = arith.constant 0.000000e+00 : f32
    %9 = vector.broadcast %cst : f32 to vector<8x288xf32>
    %10 = arith.maximumf %8, %9 : vector<8x288xf32>
    %11 = arith.truncf %10 : vector<8x288xf32> to vector<8x288xbf16>
    %c0_6 = arith.constant 0 : index
    %c0_7 = arith.constant 0 : index
    %c0_8 = arith.constant 0 : index
    %12 = vector.load %arg4[%c0_6, %c0_7, %c0_8] : memref<9x8x8xbf16, #tpu.memory_space<vmem>>, vector<9x8x8xbf16>
    %cst_9 = arith.constant 0.000000e+00 : bf16
    %13 = vector.broadcast %cst_9 : bf16 to vector<8x326xbf16>
    %c0_10 = arith.constant 0 : index
    %c0_11 = arith.constant 0 : index
    %14 = vector.load %arg9[%c0_10, %c0_11] : memref<8x326xbf16, #tpu.memory_space<vmem>>, vector<8x326xbf16>
    tpu.vector_store %arg9[%c0_10, %c0_11], %13 {strides = array<i32>} : memref<8x326xbf16, #tpu.memory_space<vmem>>, vector<8x326xbf16>,
    %15 = vector.extract_strided_slice %11 {offsets = [0, 0], sizes = [8, 16], strides = [1, 1]} : vector<8x288xbf16> to vector<8x16xbf16>
    %c0_12 = arith.constant 0 : index
    %c19 = arith.constant 19 : index
    %16 = vector.load %arg9[%c0_12, %c19] : memref<8x326xbf16, #tpu.memory_space<vmem>>, vector<8x16xbf16>
    tpu.vector_store %arg9[%c0_12, %c19], %15 {strides = array<i32>} : memref<8x326xbf16, #tpu.memory_space<vmem>>, vector<8x16xbf16>,
    %17 = vector.extract_strided_slice %11 {offsets = [0, 18], sizes = [8, 16], strides = [1, 1]} : vector<8x288xbf16> to vector<8x16xbf16>
    %c0_13 = arith.constant 0 : index
    %c37 = arith.constant 37 : index
    %18 = vector.load %arg9[%c0_13, %c37] : memref<8x326xbf16, #tpu.memory_space<vmem>>, vector<8x16xbf16>
    tpu.vector_store %arg9[%c0_13, %c37], %17 {strides = array<i32>} : memref<8x326xbf16, #tpu.memory_space<vmem>>, vector<8x16xbf16>,
    %19 = vector.extract_strided_slice %11 {offsets = [0, 36], sizes = [8, 16], strides = [1, 1]} : vector<8x288xbf16> to vector<8x16xbf16>
    %c0_14 = arith.constant 0 : index
    %c55 = arith.constant 55 : index
    %20 = vector.load %arg9[%c0_14, %c55] : memref<8x326xbf16, #tpu.memory_space<vmem>>, vector<8x16xbf16>
    tpu.vector_store %arg9[%c0_14, %c55], %19 {strides = array<i32>} : memref<8x326xbf16, #tpu.memory_space<vmem>>, vector<8x16xbf16>,
    %21 = vector.extract_strided_slice %11 {offsets = [0, 54], sizes = [8, 16], strides = [1, 1]} : vector<8x288xbf16> to vector<8x16xbf16>
    %c0_15 = arith.constant 0 : index
    %c73 = arith.constant 73 : index
    %22 = vector.load %arg9[%c0_15, %c73] : memref<8x326xbf16, #tpu.memory_space<vmem>>, vector<8x16xbf16>
    tpu.vector_store %arg9[%c0_15, %c73], %21 {strides = array<i32>} : memref<8x326xbf16, #tpu.memory_space<vmem>>, vector<8x16xbf16>,
    %23 = vector.extract_strided_slice %11 {offsets = [0, 72], sizes = [8, 16], strides = [1, 1]} : vector<8x288xbf16> to vector<8x16xbf16>
    %c0_16 = arith.constant 0 : index
    %c91 = arith.constant 91 : index
    %24 = vector.load %arg9[%c0_16, %c91] : memref<8x326xbf16, #tpu.memory_space<vmem>>, vector<8x16xbf16>
    tpu.vector_store %arg9[%c0_16, %c91], %23 {strides = array<i32>} : memref<8x326xbf16, #tpu.memory_space<vmem>>, vector<8x16xbf16>,
    %25 = vector.extract_strided_slice %11 {offsets = [0, 90], sizes = [8, 16], strides = [1, 1]} : vector<8x288xbf16> to vector<8x16xbf16>
    %c0_17 = arith.constant 0 : index
    %c109 = arith.constant 109 : index
    %26 = vector.load %arg9[%c0_17, %c109] : memref<8x326xbf16, #tpu.memory_space<vmem>>, vector<8x16xbf16>
    tpu.vector_store %arg9[%c0_17, %c109], %25 {strides = array<i32>} : memref<8x326xbf16, #tpu.memory_space<vmem>>, vector<8x16xbf16>,
    %27 = vector.extract_strided_slice %11 {offsets = [0, 108], sizes = [8, 16], strides = [1, 1]} : vector<8x288xbf16> to vector<8x16xbf16>
    %c0_18 = arith.constant 0 : index
    %c127 = arith.constant 127 : index
    %28 = vector.load %arg9[%c0_18, %c127] : memref<8x326xbf16, #tpu.memory_space<vmem>>, vector<8x16xbf16>
    tpu.vector_store %arg9[%c0_18, %c127], %27 {strides = array<i32>} : memref<8x326xbf16, #tpu.memory_space<vmem>>, vector<8x16xbf16>,
    %29 = vector.extract_strided_slice %11 {offsets = [0, 126], sizes = [8, 16], strides = [1, 1]} : vector<8x288xbf16> to vector<8x16xbf16>
    %c0_19 = arith.constant 0 : index
    %c145 = arith.constant 145 : index
    %30 = vector.load %arg9[%c0_19, %c145] : memref<8x326xbf16, #tpu.memory_space<vmem>>, vector<8x16xbf16>
    tpu.vector_store %arg9[%c0_19, %c145], %29 {strides = array<i32>} : memref<8x326xbf16, #tpu.memory_space<vmem>>, vector<8x16xbf16>,
    %31 = vector.extract_strided_slice %11 {offsets = [0, 144], sizes = [8, 16], strides = [1, 1]} : vector<8x288xbf16> to vector<8x16xbf16>
    %c0_20 = arith.constant 0 : index
    %c163 = arith.constant 163 : index
    %32 = vector.load %arg9[%c0_20, %c163] : memref<8x326xbf16, #tpu.memory_space<vmem>>, vector<8x16xbf16>
    tpu.vector_store %arg9[%c0_20, %c163], %31 {strides = array<i32>} : memref<8x326xbf16, #tpu.memory_space<vmem>>, vector<8x16xbf16>,
    %33 = vector.extract_strided_slice %11 {offsets = [0, 162], sizes = [8, 16], strides = [1, 1]} : vector<8x288xbf16> to vector<8x16xbf16>
    %c0_21 = arith.constant 0 : index
    %c181 = arith.constant 181 : index
    %34 = vector.load %arg9[%c0_21, %c181] : memref<8x326xbf16, #tpu.memory_space<vmem>>, vector<8x16xbf16>
    tpu.vector_store %arg9[%c0_21, %c181], %33 {strides = array<i32>} : memref<8x326xbf16, #tpu.memory_space<vmem>>, vector<8x16xbf16>,
    %35 = vector.extract_strided_slice %11 {offsets = [0, 180], sizes = [8, 16], strides = [1, 1]} : vector<8x288xbf16> to vector<8x16xbf16>
    %c0_22 = arith.constant 0 : index
    %c199 = arith.constant 199 : index
    %36 = vector.load %arg9[%c0_22, %c199] : memref<8x326xbf16, #tpu.memory_space<vmem>>, vector<8x16xbf16>
    tpu.vector_store %arg9[%c0_22, %c199], %35 {strides = array<i32>} : memref<8x326xbf16, #tpu.memory_space<vmem>>, vector<8x16xbf16>,
    %37 = vector.extract_strided_slice %11 {offsets = [0, 198], sizes = [8, 16], strides = [1, 1]} : vector<8x288xbf16> to vector<8x16xbf16>
    %c0_23 = arith.constant 0 : index
    %c217 = arith.constant 217 : index
    %38 = vector.load %arg9[%c0_23, %c217] : memref<8x326xbf16, #tpu.memory_space<vmem>>, vector<8x16xbf16>
    tpu.vector_store %arg9[%c0_23, %c217], %37 {strides = array<i32>} : memref<8x326xbf16, #tpu.memory_space<vmem>>, vector<8x16xbf16>,
    %39 = vector.extract_strided_slice %11 {offsets = [0, 216], sizes = [8, 16], strides = [1, 1]} : vector<8x288xbf16> to vector<8x16xbf16>
    %c0_24 = arith.constant 0 : index
    %c235 = arith.constant 235 : index
    %40 = vector.load %arg9[%c0_24, %c235] : memref<8x326xbf16, #tpu.memory_space<vmem>>, vector<8x16xbf16>
    tpu.vector_store %arg9[%c0_24, %c235], %39 {strides = array<i32>} : memref<8x326xbf16, #tpu.memory_space<vmem>>, vector<8x16xbf16>,
    %41 = vector.extract_strided_slice %11 {offsets = [0, 234], sizes = [8, 16], strides = [1, 1]} : vector<8x288xbf16> to vector<8x16xbf16>
    %c0_25 = arith.constant 0 : index
    %c253 = arith.constant 253 : index
    %42 = vector.load %arg9[%c0_25, %c253] : memref<8x326xbf16, #tpu.memory_space<vmem>>, vector<8x16xbf16>
    tpu.vector_store %arg9[%c0_25, %c253], %41 {strides = array<i32>} : memref<8x326xbf16, #tpu.memory_space<vmem>>, vector<8x16xbf16>,
    %43 = vector.extract_strided_slice %11 {offsets = [0, 252], sizes = [8, 16], strides = [1, 1]} : vector<8x288xbf16> to vector<8x16xbf16>
    %c0_26 = arith.constant 0 : index
    %c271 = arith.constant 271 : index
    %44 = vector.load %arg9[%c0_26, %c271] : memref<8x326xbf16, #tpu.memory_space<vmem>>, vector<8x16xbf16>
    tpu.vector_store %arg9[%c0_26, %c271], %43 {strides = array<i32>} : memref<8x326xbf16, #tpu.memory_space<vmem>>, vector<8x16xbf16>,
    %45 = vector.extract_strided_slice %11 {offsets = [0, 270], sizes = [8, 16], strides = [1, 1]} : vector<8x288xbf16> to vector<8x16xbf16>
    %c0_27 = arith.constant 0 : index
    %c289 = arith.constant 289 : index
    %46 = vector.load %arg9[%c0_27, %c289] : memref<8x326xbf16, #tpu.memory_space<vmem>>, vector<8x16xbf16>
    tpu.vector_store %arg9[%c0_27, %c289], %45 {strides = array<i32>} : memref<8x326xbf16, #tpu.memory_space<vmem>>, vector<8x16xbf16>,
    %c0_28 = arith.constant 0 : index
    %c0_29 = arith.constant 0 : index
    %47 = vector.load %arg9[%c0_28, %c0_29] : memref<8x326xbf16, #tpu.memory_space<vmem>>, vector<8x326xbf16>
    %cst_30 = arith.constant 0.000000e+00 : f32
    %48 = vector.broadcast %cst_30 : f32 to vector<8x288xf32>
    %49 = vector.extract_strided_slice %12 {offsets = [0, 0, 0], sizes = [1, 8, 8], strides = [1, 1, 1]} : vector<9x8x8xbf16> to vector<1x8x8xbf16>
    %50 = vector.shape_cast %49 : vector<1x8x8xbf16> to vector<8x8xbf16>
    %51 = vector.extract_strided_slice %47 {offsets = [0, 0], sizes = [8, 288], strides = [1, 1]} : vector<8x326xbf16> to vector<8x288xbf16>
    %cst_31 = arith.constant dense<0.000000e+00> : vector<8x288xf32>
    %52 = tpu.matmul %50, %51, %cst_31 {dimension_numbers = #tpu.dot_dimension_numbers<[1], [0], [0], [1], [0, 0, 1, 1], [], []>} : vector<8x8xbf16>, vector<8x288xbf16>, vector<8x288xf32> -> vector<8x288xf32>
    %53 = arith.addf %48, %52 : vector<8x288xf32>
    %54 = vector.extract_strided_slice %12 {offsets = [1, 0, 0], sizes = [1, 8, 8], strides = [1, 1, 1]} : vector<9x8x8xbf16> to vector<1x8x8xbf16>
    %55 = vector.shape_cast %54 : vector<1x8x8xbf16> to vector<8x8xbf16>
    %56 = vector.extract_strided_slice %47 {offsets = [0, 1], sizes = [8, 288], strides = [1, 1]} : vector<8x326xbf16> to vector<8x288xbf16>
    %cst_32 = arith.constant dense<0.000000e+00> : vector<8x288xf32>
    %57 = tpu.matmul %55, %56, %cst_32 {dimension_numbers = #tpu.dot_dimension_numbers<[1], [0], [0], [1], [0, 0, 1, 1], [], []>} : vector<8x8xbf16>, vector<8x288xbf16>, vector<8x288xf32> -> vector<8x288xf32>
    %58 = arith.addf %53, %57 : vector<8x288xf32>
    %59 = vector.extract_strided_slice %12 {offsets = [2, 0, 0], sizes = [1, 8, 8], strides = [1, 1, 1]} : vector<9x8x8xbf16> to vector<1x8x8xbf16>
    %60 = vector.shape_cast %59 : vector<1x8x8xbf16> to vector<8x8xbf16>
    %61 = vector.extract_strided_slice %47 {offsets = [0, 2], sizes = [8, 288], strides = [1, 1]} : vector<8x326xbf16> to vector<8x288xbf16>
    %cst_33 = arith.constant dense<0.000000e+00> : vector<8x288xf32>
    %62 = tpu.matmul %60, %61, %cst_33 {dimension_numbers = #tpu.dot_dimension_numbers<[1], [0], [0], [1], [0, 0, 1, 1], [], []>} : vector<8x8xbf16>, vector<8x288xbf16>, vector<8x288xf32> -> vector<8x288xf32>
    %63 = arith.addf %58, %62 : vector<8x288xf32>
    %64 = vector.extract_strided_slice %12 {offsets = [3, 0, 0], sizes = [1, 8, 8], strides = [1, 1, 1]} : vector<9x8x8xbf16> to vector<1x8x8xbf16>
    %65 = vector.shape_cast %64 : vector<1x8x8xbf16> to vector<8x8xbf16>
    %66 = vector.extract_strided_slice %47 {offsets = [0, 18], sizes = [8, 288], strides = [1, 1]} : vector<8x326xbf16> to vector<8x288xbf16>
    %cst_34 = arith.constant dense<0.000000e+00> : vector<8x288xf32>
    %67 = tpu.matmul %65, %66, %cst_34 {dimension_numbers = #tpu.dot_dimension_numbers<[1], [0], [0], [1], [0, 0, 1, 1], [], []>} : vector<8x8xbf16>, vector<8x288xbf16>, vector<8x288xf32> -> vector<8x288xf32>
    %68 = arith.addf %63, %67 : vector<8x288xf32>
    %69 = vector.extract_strided_slice %12 {offsets = [4, 0, 0], sizes = [1, 8, 8], strides = [1, 1, 1]} : vector<9x8x8xbf16> to vector<1x8x8xbf16>
    %70 = vector.shape_cast %69 : vector<1x8x8xbf16> to vector<8x8xbf16>
    %71 = vector.extract_strided_slice %47 {offsets = [0, 19], sizes = [8, 288], strides = [1, 1]} : vector<8x326xbf16> to vector<8x288xbf16>
    %cst_35 = arith.constant dense<0.000000e+00> : vector<8x288xf32>
    %72 = tpu.matmul %70, %71, %cst_35 {dimension_numbers = #tpu.dot_dimension_numbers<[1], [0], [0], [1], [0, 0, 1, 1], [], []>} : vector<8x8xbf16>, vector<8x288xbf16>, vector<8x288xf32> -> vector<8x288xf32>
    %73 = arith.addf %68, %72 : vector<8x288xf32>
    %74 = vector.extract_strided_slice %12 {offsets = [5, 0, 0], sizes = [1, 8, 8], strides = [1, 1, 1]} : vector<9x8x8xbf16> to vector<1x8x8xbf16>
    %75 = vector.shape_cast %74 : vector<1x8x8xbf16> to vector<8x8xbf16>
    %76 = vector.extract_strided_slice %47 {offsets = [0, 20], sizes = [8, 288], strides = [1, 1]} : vector<8x326xbf16> to vector<8x288xbf16>
    %cst_36 = arith.constant dense<0.000000e+00> : vector<8x288xf32>
    %77 = tpu.matmul %75, %76, %cst_36 {dimension_numbers = #tpu.dot_dimension_numbers<[1], [0], [0], [1], [0, 0, 1, 1], [], []>} : vector<8x8xbf16>, vector<8x288xbf16>, vector<8x288xf32> -> vector<8x288xf32>
    %78 = arith.addf %73, %77 : vector<8x288xf32>
    %79 = vector.extract_strided_slice %12 {offsets = [6, 0, 0], sizes = [1, 8, 8], strides = [1, 1, 1]} : vector<9x8x8xbf16> to vector<1x8x8xbf16>
    %80 = vector.shape_cast %79 : vector<1x8x8xbf16> to vector<8x8xbf16>
    %81 = vector.extract_strided_slice %47 {offsets = [0, 36], sizes = [8, 288], strides = [1, 1]} : vector<8x326xbf16> to vector<8x288xbf16>
    %cst_37 = arith.constant dense<0.000000e+00> : vector<8x288xf32>
    %82 = tpu.matmul %80, %81, %cst_37 {dimension_numbers = #tpu.dot_dimension_numbers<[1], [0], [0], [1], [0, 0, 1, 1], [], []>} : vector<8x8xbf16>, vector<8x288xbf16>, vector<8x288xf32> -> vector<8x288xf32>
    %83 = arith.addf %78, %82 : vector<8x288xf32>
    %84 = vector.extract_strided_slice %12 {offsets = [7, 0, 0], sizes = [1, 8, 8], strides = [1, 1, 1]} : vector<9x8x8xbf16> to vector<1x8x8xbf16>
    %85 = vector.shape_cast %84 : vector<1x8x8xbf16> to vector<8x8xbf16>
    %86 = vector.extract_strided_slice %47 {offsets = [0, 37], sizes = [8, 288], strides = [1, 1]} : vector<8x326xbf16> to vector<8x288xbf16>
    %cst_38 = arith.constant dense<0.000000e+00> : vector<8x288xf32>
    %87 = tpu.matmul %85, %86, %cst_38 {dimension_numbers = #tpu.dot_dimension_numbers<[1], [0], [0], [1], [0, 0, 1, 1], [], []>} : vector<8x8xbf16>, vector<8x288xbf16>, vector<8x288xf32> -> vector<8x288xf32>
    %88 = arith.addf %83, %87 : vector<8x288xf32>
    %89 = vector.extract_strided_slice %12 {offsets = [8, 0, 0], sizes = [1, 8, 8], strides = [1, 1, 1]} : vector<9x8x8xbf16> to vector<1x8x8xbf16>
    %90 = vector.shape_cast %89 : vector<1x8x8xbf16> to vector<8x8xbf16>
    %91 = vector.extract_strided_slice %47 {offsets = [0, 38], sizes = [8, 288], strides = [1, 1]} : vector<8x326xbf16> to vector<8x288xbf16>
    %cst_39 = arith.constant dense<0.000000e+00> : vector<8x288xf32>
    %92 = tpu.matmul %90, %91, %cst_39 {dimension_numbers = #tpu.dot_dimension_numbers<[1], [0], [0], [1], [0, 0, 1, 1], [], []>} : vector<8x8xbf16>, vector<8x288xbf16>, vector<8x288xf32> -> vector<8x288xf32>
    %93 = arith.addf %88, %92 : vector<8x288xf32>
    %94 = arith.truncf %93 : vector<8x288xf32> to vector<8x288xbf16>
    %c0_40 = arith.constant 0 : index
    %c0_41 = arith.constant 0 : index
    %c0_42 = arith.constant 0 : index
    %95 = vector.load %arg6[%c0_40, %c0_41, %c0_42] : memref<1x8x288xbf16, #tpu.memory_space<vmem>>, vector<1x8x288xbf16>
    %96 = vector.shape_cast %95 : vector<1x8x288xbf16> to vector<8x288xbf16>
    %97 = vector.shape_cast %94 : vector<8x288xbf16> to vector<1x8x288xbf16>
    tpu.vector_store %arg6[%c0_40, %c0_41, %c0_42], %97 {strides = array<i32>} : memref<1x8x288xbf16, #tpu.memory_space<vmem>>, vector<1x8x288xbf16>,
    %c0_43 = arith.constant 0 : index
    %c0_44 = arith.constant 0 : index
    %98 = vector.load %arg5[%c0_43, %c0_44] : memref<1x288xf32, #tpu.memory_space<vmem>>, vector<1x288xf32>
    %99 = vector.broadcast %98 : vector<1x288xf32> to vector<8x288xf32>
    %100 = arith.mulf %93, %99 : vector<8x288xf32>
    %cst_45 = arith.constant dense<0.000000e+00> : vector<8xf32>
    %101 = vector.multi_reduction <add>, %100, %cst_45 [1] : vector<8x288xf32> to vector<8xf32>
    %102 = vector.shape_cast %101 : vector<8xf32> to vector<8x1xf32>
    %103 = arith.mulf %93, %93 : vector<8x288xf32>
    %104 = vector.broadcast %98 : vector<1x288xf32> to vector<8x288xf32>
    %105 = arith.mulf %103, %104 : vector<8x288xf32>
    %cst_46 = arith.constant dense<0.000000e+00> : vector<8xf32>
    %106 = vector.multi_reduction <add>, %105, %cst_46 [1] : vector<8x288xf32> to vector<8xf32>
    %107 = vector.shape_cast %106 : vector<8xf32> to vector<8x1xf32>
    %c0_47 = arith.constant 0 : index
    %c0_48 = arith.constant 0 : index
    %c0_49 = arith.constant 0 : index
    %108 = vector.load %arg7[%c0_47, %c0_48, %c0_49] : memref<1x8x1xf32, #tpu.memory_space<vmem>>, vector<1x8x1xf32>
    %109 = vector.shape_cast %108 : vector<1x8x1xf32> to vector<8x1xf32>
    %110 = vector.shape_cast %102 : vector<8x1xf32> to vector<1x8x1xf32>
    tpu.vector_store %arg7[%c0_47, %c0_48, %c0_49], %110 {strides = array<i32>} : memref<1x8x1xf32, #tpu.memory_space<vmem>>, vector<1x8x1xf32>,
    %c0_50 = arith.constant 0 : index
    %c0_51 = arith.constant 0 : index
    %c0_52 = arith.constant 0 : index
    %111 = vector.load %arg8[%c0_50, %c0_51, %c0_52] : memref<1x8x1xf32, #tpu.memory_space<vmem>>, vector<1x8x1xf32>
    %112 = vector.shape_cast %111 : vector<1x8x1xf32> to vector<8x1xf32>
    %113 = vector.shape_cast %107 : vector<8x1xf32> to vector<1x8x1xf32>
    tpu.vector_store %arg8[%c0_50, %c0_51, %c0_52], %113 {strides = array<i32>} : memref<1x8x1xf32, #tpu.memory_space<vmem>>, vector<1x8x1xf32>,
    return
  }
  func.func @transform_0(%arg0: i32) -> (i32, i32, i32) {
    %c0_i32 = arith.constant 0 : i32
    %c0_i32_0 = arith.constant 0 : i32
    %c0_i32_1 = arith.constant 0 : i32
    return %arg0, %c0_i32, %c0_i32_0 : i32, i32, i32
  }
  func.func @transform_1(%arg0: i32) -> (i32, i32) {
    %c0_i32 = arith.constant 0 : i32
    %c0_i32_0 = arith.constant 0 : i32
    %c0_i32_1 = arith.constant 0 : i32
    return %c0_i32, %c0_i32_0 : i32, i32
  }
  func.func @transform_2(%arg0: i32) -> (i32, i32) {
    %c0_i32 = arith.constant 0 : i32
    %c0_i32_0 = arith.constant 0 : i32
    %c0_i32_1 = arith.constant 0 : i32
    return %c0_i32, %c0_i32_0 : i32, i32
  }
  func.func @transform_3(%arg0: i32) -> (i32, i32, i32) {
    %c0_i32 = arith.constant 0 : i32
    %c0_i32_0 = arith.constant 0 : i32
    %c0_i32_1 = arith.constant 0 : i32
    %c0_i32_2 = arith.constant 0 : i32
    return %c0_i32, %c0_i32_0, %c0_i32_1 : i32, i32, i32
  }
  func.func @transform_4(%arg0: i32) -> (i32, i32) {
    %c0_i32 = arith.constant 0 : i32
    %c0_i32_0 = arith.constant 0 : i32
    %c0_i32_1 = arith.constant 0 : i32
    return %c0_i32, %c0_i32_0 : i32, i32
  }
  func.func @transform_5(%arg0: i32) -> (i32, i32, i32) {
    %c0_i32 = arith.constant 0 : i32
    %c0_i32_0 = arith.constant 0 : i32
    %c0_i32_1 = arith.constant 0 : i32
    return %arg0, %c0_i32, %c0_i32_0 : i32, i32, i32
  }
  func.func @transform_6(%arg0: i32) -> (i32, i32, i32) {
    %c0_i32 = arith.constant 0 : i32
    %c0_i32_0 = arith.constant 0 : i32
    %c0_i32_1 = arith.constant 0 : i32
    return %arg0, %c0_i32, %c0_i32_0 : i32, i32, i32
  }
  func.func @transform_7(%arg0: i32) -> (i32, i32, i32) {
    %c0_i32 = arith.constant 0 : i32
    %c0_i32_0 = arith.constant 0 : i32
    %c0_i32_1 = arith.constant 0 : i32
    return %arg0, %c0_i32, %c0_i32_0 : i32, i32, i32
  }
}

module attributes {stable_mosaic.version = 11 : i64} {
  func.func @_bn_relu_crop_kernel(%arg0: i32, %arg1: memref<1x8x288xbf16, #tpu.memory_space<vmem>>, %arg2: memref<8x1xf32, #tpu.memory_space<vmem>>, %arg3: memref<8x1xf32, #tpu.memory_space<vmem>>, %arg4: memref<1x8x256xf32, #tpu.memory_space<vmem>>) attributes {dimension_semantics = [#tpu.dimension_semantics<parallel>], iteration_bounds = array<i64: 2>, scalar_prefetch = 0 : i64, scratch_operands = 0 : i64, tpu.core_type = #tpu.core_type<tc>, window_params = [{transform_indices = @transform_0, window_bounds = array<i64: 1, 8, 288>}, {pipeline_mode = #tpu.pipeline_mode<synchronous>, transform_indices = @transform_1, window_bounds = array<i64: 8, 1>}, {pipeline_mode = #tpu.pipeline_mode<synchronous>, transform_indices = @transform_2, window_bounds = array<i64: 8, 1>}, {transform_indices = @transform_3, window_bounds = array<i64: 1, 8, 256>}]} {
    %c0 = arith.constant 0 : index
    %c0_0 = arith.constant 0 : index
    %c0_1 = arith.constant 0 : index
    %0 = vector.load %arg1[%c0, %c0_0, %c0_1] : memref<1x8x288xbf16, #tpu.memory_space<vmem>>, vector<1x8x288xbf16>
    %1 = vector.shape_cast %0 : vector<1x8x288xbf16> to vector<8x288xbf16>
    %2 = arith.extf %1 : vector<8x288xbf16> to vector<8x288xf32>
    %c0_2 = arith.constant 0 : index
    %c0_3 = arith.constant 0 : index
    %3 = vector.load %arg2[%c0_2, %c0_3] : memref<8x1xf32, #tpu.memory_space<vmem>>, vector<8x1xf32>
    %4 = vector.broadcast %3 : vector<8x1xf32> to vector<8x288xf32>
    %5 = arith.mulf %2, %4 : vector<8x288xf32>
    %c0_4 = arith.constant 0 : index
    %c0_5 = arith.constant 0 : index
    %6 = vector.load %arg3[%c0_4, %c0_5] : memref<8x1xf32, #tpu.memory_space<vmem>>, vector<8x1xf32>
    %7 = vector.broadcast %6 : vector<8x1xf32> to vector<8x288xf32>
    %8 = arith.addf %5, %7 : vector<8x288xf32>
    %cst = arith.constant 0.000000e+00 : f32
    %9 = vector.broadcast %cst : f32 to vector<8x288xf32>
    %10 = arith.maximumf %8, %9 : vector<8x288xf32>
    %11 = vector.extract_strided_slice %10 {offsets = [0, 0], sizes = [8, 16], strides = [1, 1]} : vector<8x288xf32> to vector<8x16xf32>
    %c0_6 = arith.constant 0 : index
    %c0_7 = arith.constant 0 : index
    %c0_8 = arith.constant 0 : index
    %12 = vector.load %arg4[%c0_6, %c0_7, %c0_8] : memref<1x8x256xf32, #tpu.memory_space<vmem>>, vector<1x8x16xf32>
    %13 = vector.shape_cast %12 : vector<1x8x16xf32> to vector<8x16xf32>
    %14 = vector.shape_cast %11 : vector<8x16xf32> to vector<1x8x16xf32>
    tpu.vector_store %arg4[%c0_6, %c0_7, %c0_8], %14 {strides = array<i32>} : memref<1x8x256xf32, #tpu.memory_space<vmem>>, vector<1x8x16xf32>,
    %15 = vector.extract_strided_slice %10 {offsets = [0, 18], sizes = [8, 16], strides = [1, 1]} : vector<8x288xf32> to vector<8x16xf32>
    %c0_9 = arith.constant 0 : index
    %c0_10 = arith.constant 0 : index
    %c16 = arith.constant 16 : index
    %16 = vector.load %arg4[%c0_9, %c0_10, %c16] : memref<1x8x256xf32, #tpu.memory_space<vmem>>, vector<1x8x16xf32>
    %17 = vector.shape_cast %16 : vector<1x8x16xf32> to vector<8x16xf32>
    %18 = vector.shape_cast %15 : vector<8x16xf32> to vector<1x8x16xf32>
    tpu.vector_store %arg4[%c0_9, %c0_10, %c16], %18 {strides = array<i32>} : memref<1x8x256xf32, #tpu.memory_space<vmem>>, vector<1x8x16xf32>,
    %19 = vector.extract_strided_slice %10 {offsets = [0, 36], sizes = [8, 16], strides = [1, 1]} : vector<8x288xf32> to vector<8x16xf32>
    %c0_11 = arith.constant 0 : index
    %c0_12 = arith.constant 0 : index
    %c32 = arith.constant 32 : index
    %20 = vector.load %arg4[%c0_11, %c0_12, %c32] : memref<1x8x256xf32, #tpu.memory_space<vmem>>, vector<1x8x16xf32>
    %21 = vector.shape_cast %20 : vector<1x8x16xf32> to vector<8x16xf32>
    %22 = vector.shape_cast %19 : vector<8x16xf32> to vector<1x8x16xf32>
    tpu.vector_store %arg4[%c0_11, %c0_12, %c32], %22 {strides = array<i32>} : memref<1x8x256xf32, #tpu.memory_space<vmem>>, vector<1x8x16xf32>,
    %23 = vector.extract_strided_slice %10 {offsets = [0, 54], sizes = [8, 16], strides = [1, 1]} : vector<8x288xf32> to vector<8x16xf32>
    %c0_13 = arith.constant 0 : index
    %c0_14 = arith.constant 0 : index
    %c48 = arith.constant 48 : index
    %24 = vector.load %arg4[%c0_13, %c0_14, %c48] : memref<1x8x256xf32, #tpu.memory_space<vmem>>, vector<1x8x16xf32>
    %25 = vector.shape_cast %24 : vector<1x8x16xf32> to vector<8x16xf32>
    %26 = vector.shape_cast %23 : vector<8x16xf32> to vector<1x8x16xf32>
    tpu.vector_store %arg4[%c0_13, %c0_14, %c48], %26 {strides = array<i32>} : memref<1x8x256xf32, #tpu.memory_space<vmem>>, vector<1x8x16xf32>,
    %27 = vector.extract_strided_slice %10 {offsets = [0, 72], sizes = [8, 16], strides = [1, 1]} : vector<8x288xf32> to vector<8x16xf32>
    %c0_15 = arith.constant 0 : index
    %c0_16 = arith.constant 0 : index
    %c64 = arith.constant 64 : index
    %28 = vector.load %arg4[%c0_15, %c0_16, %c64] : memref<1x8x256xf32, #tpu.memory_space<vmem>>, vector<1x8x16xf32>
    %29 = vector.shape_cast %28 : vector<1x8x16xf32> to vector<8x16xf32>
    %30 = vector.shape_cast %27 : vector<8x16xf32> to vector<1x8x16xf32>
    tpu.vector_store %arg4[%c0_15, %c0_16, %c64], %30 {strides = array<i32>} : memref<1x8x256xf32, #tpu.memory_space<vmem>>, vector<1x8x16xf32>,
    %31 = vector.extract_strided_slice %10 {offsets = [0, 90], sizes = [8, 16], strides = [1, 1]} : vector<8x288xf32> to vector<8x16xf32>
    %c0_17 = arith.constant 0 : index
    %c0_18 = arith.constant 0 : index
    %c80 = arith.constant 80 : index
    %32 = vector.load %arg4[%c0_17, %c0_18, %c80] : memref<1x8x256xf32, #tpu.memory_space<vmem>>, vector<1x8x16xf32>
    %33 = vector.shape_cast %32 : vector<1x8x16xf32> to vector<8x16xf32>
    %34 = vector.shape_cast %31 : vector<8x16xf32> to vector<1x8x16xf32>
    tpu.vector_store %arg4[%c0_17, %c0_18, %c80], %34 {strides = array<i32>} : memref<1x8x256xf32, #tpu.memory_space<vmem>>, vector<1x8x16xf32>,
    %35 = vector.extract_strided_slice %10 {offsets = [0, 108], sizes = [8, 16], strides = [1, 1]} : vector<8x288xf32> to vector<8x16xf32>
    %c0_19 = arith.constant 0 : index
    %c0_20 = arith.constant 0 : index
    %c96 = arith.constant 96 : index
    %36 = vector.load %arg4[%c0_19, %c0_20, %c96] : memref<1x8x256xf32, #tpu.memory_space<vmem>>, vector<1x8x16xf32>
    %37 = vector.shape_cast %36 : vector<1x8x16xf32> to vector<8x16xf32>
    %38 = vector.shape_cast %35 : vector<8x16xf32> to vector<1x8x16xf32>
    tpu.vector_store %arg4[%c0_19, %c0_20, %c96], %38 {strides = array<i32>} : memref<1x8x256xf32, #tpu.memory_space<vmem>>, vector<1x8x16xf32>,
    %39 = vector.extract_strided_slice %10 {offsets = [0, 126], sizes = [8, 16], strides = [1, 1]} : vector<8x288xf32> to vector<8x16xf32>
    %c0_21 = arith.constant 0 : index
    %c0_22 = arith.constant 0 : index
    %c112 = arith.constant 112 : index
    %40 = vector.load %arg4[%c0_21, %c0_22, %c112] : memref<1x8x256xf32, #tpu.memory_space<vmem>>, vector<1x8x16xf32>
    %41 = vector.shape_cast %40 : vector<1x8x16xf32> to vector<8x16xf32>
    %42 = vector.shape_cast %39 : vector<8x16xf32> to vector<1x8x16xf32>
    tpu.vector_store %arg4[%c0_21, %c0_22, %c112], %42 {strides = array<i32>} : memref<1x8x256xf32, #tpu.memory_space<vmem>>, vector<1x8x16xf32>,
    %43 = vector.extract_strided_slice %10 {offsets = [0, 144], sizes = [8, 16], strides = [1, 1]} : vector<8x288xf32> to vector<8x16xf32>
    %c0_23 = arith.constant 0 : index
    %c0_24 = arith.constant 0 : index
    %c128 = arith.constant 128 : index
    %44 = vector.load %arg4[%c0_23, %c0_24, %c128] : memref<1x8x256xf32, #tpu.memory_space<vmem>>, vector<1x8x16xf32>
    %45 = vector.shape_cast %44 : vector<1x8x16xf32> to vector<8x16xf32>
    %46 = vector.shape_cast %43 : vector<8x16xf32> to vector<1x8x16xf32>
    tpu.vector_store %arg4[%c0_23, %c0_24, %c128], %46 {strides = array<i32>} : memref<1x8x256xf32, #tpu.memory_space<vmem>>, vector<1x8x16xf32>,
    %47 = vector.extract_strided_slice %10 {offsets = [0, 162], sizes = [8, 16], strides = [1, 1]} : vector<8x288xf32> to vector<8x16xf32>
    %c0_25 = arith.constant 0 : index
    %c0_26 = arith.constant 0 : index
    %c144 = arith.constant 144 : index
    %48 = vector.load %arg4[%c0_25, %c0_26, %c144] : memref<1x8x256xf32, #tpu.memory_space<vmem>>, vector<1x8x16xf32>
    %49 = vector.shape_cast %48 : vector<1x8x16xf32> to vector<8x16xf32>
    %50 = vector.shape_cast %47 : vector<8x16xf32> to vector<1x8x16xf32>
    tpu.vector_store %arg4[%c0_25, %c0_26, %c144], %50 {strides = array<i32>} : memref<1x8x256xf32, #tpu.memory_space<vmem>>, vector<1x8x16xf32>,
    %51 = vector.extract_strided_slice %10 {offsets = [0, 180], sizes = [8, 16], strides = [1, 1]} : vector<8x288xf32> to vector<8x16xf32>
    %c0_27 = arith.constant 0 : index
    %c0_28 = arith.constant 0 : index
    %c160 = arith.constant 160 : index
    %52 = vector.load %arg4[%c0_27, %c0_28, %c160] : memref<1x8x256xf32, #tpu.memory_space<vmem>>, vector<1x8x16xf32>
    %53 = vector.shape_cast %52 : vector<1x8x16xf32> to vector<8x16xf32>
    %54 = vector.shape_cast %51 : vector<8x16xf32> to vector<1x8x16xf32>
    tpu.vector_store %arg4[%c0_27, %c0_28, %c160], %54 {strides = array<i32>} : memref<1x8x256xf32, #tpu.memory_space<vmem>>, vector<1x8x16xf32>,
    %55 = vector.extract_strided_slice %10 {offsets = [0, 198], sizes = [8, 16], strides = [1, 1]} : vector<8x288xf32> to vector<8x16xf32>
    %c0_29 = arith.constant 0 : index
    %c0_30 = arith.constant 0 : index
    %c176 = arith.constant 176 : index
    %56 = vector.load %arg4[%c0_29, %c0_30, %c176] : memref<1x8x256xf32, #tpu.memory_space<vmem>>, vector<1x8x16xf32>
    %57 = vector.shape_cast %56 : vector<1x8x16xf32> to vector<8x16xf32>
    %58 = vector.shape_cast %55 : vector<8x16xf32> to vector<1x8x16xf32>
    tpu.vector_store %arg4[%c0_29, %c0_30, %c176], %58 {strides = array<i32>} : memref<1x8x256xf32, #tpu.memory_space<vmem>>, vector<1x8x16xf32>,
    %59 = vector.extract_strided_slice %10 {offsets = [0, 216], sizes = [8, 16], strides = [1, 1]} : vector<8x288xf32> to vector<8x16xf32>
    %c0_31 = arith.constant 0 : index
    %c0_32 = arith.constant 0 : index
    %c192 = arith.constant 192 : index
    %60 = vector.load %arg4[%c0_31, %c0_32, %c192] : memref<1x8x256xf32, #tpu.memory_space<vmem>>, vector<1x8x16xf32>
    %61 = vector.shape_cast %60 : vector<1x8x16xf32> to vector<8x16xf32>
    %62 = vector.shape_cast %59 : vector<8x16xf32> to vector<1x8x16xf32>
    tpu.vector_store %arg4[%c0_31, %c0_32, %c192], %62 {strides = array<i32>} : memref<1x8x256xf32, #tpu.memory_space<vmem>>, vector<1x8x16xf32>,
    %63 = vector.extract_strided_slice %10 {offsets = [0, 234], sizes = [8, 16], strides = [1, 1]} : vector<8x288xf32> to vector<8x16xf32>
    %c0_33 = arith.constant 0 : index
    %c0_34 = arith.constant 0 : index
    %c208 = arith.constant 208 : index
    %64 = vector.load %arg4[%c0_33, %c0_34, %c208] : memref<1x8x256xf32, #tpu.memory_space<vmem>>, vector<1x8x16xf32>
    %65 = vector.shape_cast %64 : vector<1x8x16xf32> to vector<8x16xf32>
    %66 = vector.shape_cast %63 : vector<8x16xf32> to vector<1x8x16xf32>
    tpu.vector_store %arg4[%c0_33, %c0_34, %c208], %66 {strides = array<i32>} : memref<1x8x256xf32, #tpu.memory_space<vmem>>, vector<1x8x16xf32>,
    %67 = vector.extract_strided_slice %10 {offsets = [0, 252], sizes = [8, 16], strides = [1, 1]} : vector<8x288xf32> to vector<8x16xf32>
    %c0_35 = arith.constant 0 : index
    %c0_36 = arith.constant 0 : index
    %c224 = arith.constant 224 : index
    %68 = vector.load %arg4[%c0_35, %c0_36, %c224] : memref<1x8x256xf32, #tpu.memory_space<vmem>>, vector<1x8x16xf32>
    %69 = vector.shape_cast %68 : vector<1x8x16xf32> to vector<8x16xf32>
    %70 = vector.shape_cast %67 : vector<8x16xf32> to vector<1x8x16xf32>
    tpu.vector_store %arg4[%c0_35, %c0_36, %c224], %70 {strides = array<i32>} : memref<1x8x256xf32, #tpu.memory_space<vmem>>, vector<1x8x16xf32>,
    %71 = vector.extract_strided_slice %10 {offsets = [0, 270], sizes = [8, 16], strides = [1, 1]} : vector<8x288xf32> to vector<8x16xf32>
    %c0_37 = arith.constant 0 : index
    %c0_38 = arith.constant 0 : index
    %c240 = arith.constant 240 : index
    %72 = vector.load %arg4[%c0_37, %c0_38, %c240] : memref<1x8x256xf32, #tpu.memory_space<vmem>>, vector<1x8x16xf32>
    %73 = vector.shape_cast %72 : vector<1x8x16xf32> to vector<8x16xf32>
    %74 = vector.shape_cast %71 : vector<8x16xf32> to vector<1x8x16xf32>
    tpu.vector_store %arg4[%c0_37, %c0_38, %c240], %74 {strides = array<i32>} : memref<1x8x256xf32, #tpu.memory_space<vmem>>, vector<1x8x16xf32>,
    return
  }
  func.func @transform_0(%arg0: i32) -> (i32, i32, i32) {
    %c0_i32 = arith.constant 0 : i32
    %c0_i32_0 = arith.constant 0 : i32
    %c0_i32_1 = arith.constant 0 : i32
    return %arg0, %c0_i32, %c0_i32_0 : i32, i32, i32
  }
  func.func @transform_1(%arg0: i32) -> (i32, i32) {
    %c0_i32 = arith.constant 0 : i32
    %c0_i32_0 = arith.constant 0 : i32
    %c0_i32_1 = arith.constant 0 : i32
    return %c0_i32, %c0_i32_0 : i32, i32
  }
  func.func @transform_2(%arg0: i32) -> (i32, i32) {
    %c0_i32 = arith.constant 0 : i32
    %c0_i32_0 = arith.constant 0 : i32
    %c0_i32_1 = arith.constant 0 : i32
    return %c0_i32, %c0_i32_0 : i32, i32
  }
  func.func @transform_3(%arg0: i32) -> (i32, i32, i32) {
    %c0_i32 = arith.constant 0 : i32
    %c0_i32_0 = arith.constant 0 : i32
    %c0_i32_1 = arith.constant 0 : i32
    return %arg0, %c0_i32, %c0_i32_0 : i32, i32, i32
  }
}

</mosaic_0001>

<llo_original>
// kernel: conv_block_forward.5
$region0: #{conv_block_forward.5}
  #allocation0 [shape = 'u32[]', space=smem, size = 0x4, offset = 0x4, fixed_abs, tag = 'smem constant byte address 0x4 - core index']
  #allocation1 [shape = 'u32[144,128]{1,0:T(1,128)}', space=vmem, size = 0x12000, scoped, tag = 'internal scratch']
  %s0 = inlined_call_operand.vmem [shape: bf16[2,8,288], index: 0, kind: input, shape index: {}]
  %s1 = inlined_call_operand.vmem [shape: f32[8,1], index: 1, kind: input, shape index: {}]
  %s2 = inlined_call_operand.vmem [shape: f32[8,1], index: 2, kind: input, shape index: {}]
  %s3 = inlined_call_operand.vmem [shape: f32[2,8,256], index: 3, kind: output, shape index: {}]
  %s4 = sld [smem:[#allocation0]]
  $region45: #{conv_block_forward.5} parent=0
    _
  %s6 = ssub.s32 1, %s4
  %s7 = scalar_select 0, %s6, %s4
  loop: start=0, step=1, limit=4
  $region2: #{conv_block_forward.5} parent=0 // loop_pre_header
    _
  $region3: #{conv_block_forward.5} parent=0 // loop_header
    %s9 = sphi 0, %s13
    %p10 = scmp.ge.s32.totalorder %s9, 4
    %s19 = sphi 0, %s21
    %s22 = sphi 0, %s19
    %s23 = sphi 0, %s22
    %s39 = sphi 0, %s23
    %s43 = sphi 0, %s43
    %s45 = sphi 0, %s43
    %s46 = sphi 0, %s45
    %s60 = sphi 0, %s46
    %s64 = sphi 0, %s64
    %s66 = sphi 0, %s64
    %s67 = sphi 0, %s66
    %s81 = sphi 0, %s67
    %s87 = sphi 0, %s89
    %s90 = sphi 0, %s87
    %s91 = sphi 0, %s90
    %s107 = sphi 0, %s91
  $region4: #{conv_block_forward.5} parent=0 // loop_header_branch
    %12 = sbr.rel (%p10) target = $region8
  $region5: #{conv_block_forward.5} parent=0 // loop_body
    %s14 = ssub.s32 %s9, 1
    %s15 = ssub.s32 %s9, 2
    %s16 = sadd.s32 %s9, 1
    %s17 = ssub.s32 %s9, %s16
    %p18 = scmp.eq.s32.totalorder %s17, 0
    %s20 = sadd.s32 %s19, 1
    %s21 = scalar_select %p18, %s19, %s20
    %p24 = pneg %p18
    %p25 = scmp.eq.s32.totalorder %s9, 1
    %p26 = por %p24, %p25
    %p27 = scmp.ne.s32.totalorder %s19, %s22
    %p28 = scmp.eq.s32.totalorder %s9, 0
    %p29 = por %p27, %p28
    %p30 = scmp.ne.s32.totalorder %s19, %s22
    %p31 = scmp.eq.s32.totalorder %s14, 1
    %p32 = por %p30, %p31
    %p33 = scmp.ne.s32.totalorder %s22, %s23
    %p34 = scmp.eq.s32.totalorder %s14, 0
    %p35 = por %p33, %p34
    %p36 = scmp.ne.s32.totalorder %s22, %s23
    %p37 = scmp.eq.s32.totalorder %s15, 1
    %p38 = por %p36, %p37
    %p40 = scmp.ne.s32.totalorder %s23, %s39
    %p41 = scmp.eq.s32.totalorder %s15, 0
    %p42 = por %p40, %p41
    %s44 = sadd.s32 %s43, 1
    %p47 = scmp.eq.s32.totalorder %s9, 1
    %p48 = scmp.ne.s32.totalorder %s43, %s45
    %p49 = scmp.eq.s32.totalorder %s9, 0
    %p50 = por %p48, %p49
    %p51 = scmp.ne.s32.totalorder %s43, %s45
    %p52 = scmp.eq.s32.totalorder %s14, 1
    %p53 = por %p51, %p52
    %p54 = scmp.ne.s32.totalorder %s45, %s46
    %p55 = scmp.eq.s32.totalorder %s14, 0
    %p56 = por %p54, %p55
    %p57 = scmp.ne.s32.totalorder %s45, %s46
    %p58 = scmp.eq.s32.totalorder %s15, 1
    %p59 = por %p57, %p58
    %p61 = scmp.ne.s32.totalorder %s46, %s60
    %p62 = scmp.eq.s32.totalorder %s15, 0
    %p63 = por %p61, %p62
    %s65 = sadd.s32 %s64, 1
    %p68 = scmp.eq.s32.totalorder %s9, 1
    %p69 = scmp.ne.s32.totalorder %s64, %s66
    %p70 = scmp.eq.s32.totalorder %s9, 0
    %p71 = por %p69, %p70
    %p72 = scmp.ne.s32.totalorder %s64, %s66
    %p73 = scmp.eq.s32.totalorder %s14, 1
    %p74 = por %p72, %p73
    %p75 = scmp.ne.s32.totalorder %s66, %s67
    %p76 = scmp.eq.s32.totalorder %s14, 0
    %p77 = por %p75, %p76
    %p78 = scmp.ne.s32.totalorder %s66, %s67
    %p79 = scmp.eq.s32.totalorder %s15, 1
    %p80 = por %p78, %p79
    %p82 = scmp.ne.s32.totalorder %s67, %s81
    %p83 = scmp.eq.s32.totalorder %s15, 0
    %p84 = por %p82, %p83
    %s85 = ssub.s32 %s9, %s16
    %p86 = scmp.eq.s32.totalorder %s85, 0
    %s88 = sadd.s32 %s87, 1
    %s89 = scalar_select %p86, %s87, %s88
    %p92 = pneg %p86
    %p93 = scmp.eq.s32.totalorder %s9, 1
    %p94 = por %p92, %p93
    %p95 = scmp.ne.s32.totalorder %s87, %s90
    %p96 = scmp.eq.s32.totalorder %s9, 0
    %p97 = por %p95, %p96
    %p98 = scmp.ne.s32.totalorder %s87, %s90
    %p99 = scmp.eq.s32.totalorder %s14, 1
    %p100 = por %p98, %p99
    %p101 = scmp.ne.s32.totalorder %s90, %s91
    %p102 = scmp.eq.s32.totalorder %s14, 0
    %p103 = por %p101, %p102
    %p104 = scmp.ne.s32.totalorder %s90, %s91
    %p105 = scmp.eq.s32.totalorder %s15, 1
    %p106 = por %p104, %p105
    %p108 = scmp.ne.s32.totalorder %s91, %s107
    %p109 = scmp.eq.s32.totalorder %s15, 0
    %p110 = por %p108, %p109
    %p111 = scmp.le.s32.totalorder 1, %s9
    %p112 = scmp.lt.s32.totalorder %s9, 3
    %p113 = pnand %p111, %p112
    %p114 = pneg %p113
    // Predicated region
    $region9: #{conv_block_forward.5} parent=5 // pred_check
      _
    $region10: #{conv_block_forward.5} parent=5 // pred_check_branch
      %116 = sbr.rel (%p113) target = $region12
    $region11: #{conv_block_forward.5} parent=5 // pred_region
      %s117 = ssub.s32 %s9, 1
      // Predicated region
      $region13: #{conv_block_forward.5} parent=11 // pred_check
        %p118 = pneg %p56
      $region14: #{conv_block_forward.5} parent=11 // pred_check_branch
        %120 = sbr.rel (%p118) target = $region16
      $region15: #{conv_block_forward.5} parent=11 // pred_region
        _
      $region16: #{conv_block_forward.5} parent=11 // pred_fallthru
        _
      // Predicated region
      $region17: #{conv_block_forward.5} parent=11 // pred_check
        %p121 = pneg %p77
      $region18: #{conv_block_forward.5} parent=11 // pred_check_branch
        %123 = sbr.rel (%p121) target = $region20
      $region19: #{conv_block_forward.5} parent=11 // pred_region
        _
      $region20: #{conv_block_forward.5} parent=11 // pred_fallthru
        _
    $region12: #{conv_block_forward.5} parent=5 // pred_fallthru
      _
    %p124 = scmp.lt.s32.totalorder %s9, 2
    // Predicated region
    $region21: #{conv_block_forward.5} parent=5 // pred_check
      %p125 = pneg %p124
    $region22: #{conv_block_forward.5} parent=5 // pred_check_branch
      %127 = sbr.rel (%p125) target = $region24
    $region23: #{conv_block_forward.5} parent=5 // pred_region
      // Predicated region
      $region25: #{conv_block_forward.5} parent=23 // pred_check
        %p128 = pneg %p29
      $region26: #{conv_block_forward.5} parent=23 // pred_check_branch
        %130 = sbr.rel (%p128) target = $region28
      $region27: #{conv_block_forward.5} parent=23 // pred_region
        %p131 = scmp.lt.s32.totalorder %s9, 1
        %s132 = scalar_select %p131, %s9, 1
        %s133 = smul.addr %s132, 3
        %s134 = smul.addr %s133, 4
        %s135 = scalar_lea.vmem %s0, %s134
      $region28: #{conv_block_forward.5} parent=23 // pred_fallthru
        _
    $region24: #{conv_block_forward.5} parent=5 // pred_fallthru
      _
    %p136 = scmp.le.s32.totalorder 1, %s9
    %p137 = scmp.lt.s32.totalorder %s9, 3
    %p138 = pnand %p136, %p137
    %p139 = pneg %p138
    // Predicated region
    $region29: #{conv_block_forward.5} parent=5 // pred_check
      _
    $region30: #{conv_block_forward.5} parent=5 // pred_check_branch
      %141 = sbr.rel (%p138) target = $region32
    $region31: #{conv_block_forward.5} parent=5 // pred_region
      %s142 = ssub.s32 %s9, 1
      %p143 = scmp.lt.s32.totalorder %s14, 1
      %s144 = scalar_select %p143, %s14, 1
      %s145 = smul.addr %s144, 3
      %s146 = smul.addr %s145, 4
      %s147 = scalar_lea.vmem %s0, %s146
      %p148 = pneg %p35
      %p149 = pneg %p32
      %p150 = pneg %p56
      %p151 = pneg %p53
      %p152 = pneg %p77
      %p153 = pneg %p74
      %p154 = pneg %p103
      %p155 = pneg %p100
      %p156 = scmp.lt.s32.totalorder %s14, 1
      %s157 = scalar_select %p156, %s14, 1
      %s158 = smul.addr %s157, 2
      %s159 = smul.addr %s158, 8
      %s160 = scalar_lea.vmem %s3, %s159
      %p161 = scmp.lt.s32.totalorder %s14, 1
      %s162 = scalar_select %p161, %s14, 1
      %s163 = smul.addr %s162, 3
      %s164 = smul.addr %s163, 4
      %s165 = scalar_lea.vmem %s0, %s164
      %p166 = scmp.lt.s32.totalorder %s14, 1
      %s167 = scalar_select %p166, %s14, 1
      %s168 = smul.addr %s167, 2
      %s169 = smul.addr %s168, 8
      %s170 = scalar_lea.vmem %s3, %s169
      %v171 = vld [vmem:[%s165] sm:$0xff]
      %v172 = vld [vmem:[%s165 + $0x8] sm:$0xf]
      %v173 = vunpack.c.l.bf16 %v171
      %v174 = vunpack.c.h.bf16 %v171
      %v175 = vunpack.c.l.bf16 %v172
      %v176 = vld [vmem:[%s1] sm:$0xff]
      %178 = vset.pattern.permute.xlu0 0
      %179 = vperm.xlu0 %178, %v176
      %v180 = vpop.permute.xlu0 %179
      %v182 = vmul.f32 %v173, %v180
      %v183 = vmul.f32 %v174, %v180
      %v184 = vmul.f32 %v175, %v180
      %v185 = vld [vmem:[%s2] sm:$0xff]
      %187 = vset.pattern.permute.xlu0 0
      %188 = vperm.xlu0 %187, %v185
      %v189 = vpop.permute.xlu0 %188
      %v191 = vadd.f32 %v182, %v189
      %v192 = vadd.f32 %v183, %v189
      %v193 = vadd.f32 %v184, %v189
      %v194 = vmax.f32 %v191, 0.0
      %v195 = vmax.f32 %v192, 0.0
      %v196 = vmax.f32 %v193, 0.0
      %vm197 = vcmask 130048
      %198 = vst.msk [vmem:[%s170] sm:$0xff] %vm197, %v194
      %200 = vrot.lane.b32.xlu0 %v194, 126
      %v201 = vpop.permute.xlu0 %200
      %vm203 = vcmask 261248
      %204 = vst.msk [vmem:[%s170] sm:$0xff] %vm203, %v201
      %205 = vrot.lane.b32.xlu0 %v194, 124
      %v206 = vpop.permute.xlu0 %205
      %vm208 = vcmask 392448
      %209 = vst.msk [vmem:[%s170] sm:$0xff] %vm208, %v206
      %210 = vrot.lane.b32.xlu0 %v194, 122
      %v211 = vpop.permute.xlu0 %210
      %vm213 = vcmask 523648
      %214 = vst.msk [vmem:[%s170] sm:$0xff] %vm213, %v211
      %215 = vrot.lane.b32.xlu0 %v194, 120
      %v216 = vpop.permute.xlu0 %215
      %vm218 = vcmask 654848
      %219 = vst.msk [vmem:[%s170] sm:$0xff] %vm218, %v216
      %220 = vrot.lane.b32.xlu0 %v194, 118
      %v221 = vpop.permute.xlu0 %220
      %vm223 = vcmask 786048
      %224 = vst.msk [vmem:[%s170] sm:$0xff] %vm223, %v221
      %225 = vrot.lane.b32.xlu0 %v194, 116
      %v226 = vpop.permute.xlu0 %225
      %vm228 = vcmask 917248
      %229 = vst.msk [vmem:[%s170] sm:$0xff] %vm228, %v226
      %231 = vrot.lane.b32.xlu0 %v194, 114
      %v232 = vpop.permute.xlu0 %231
      %233 = vrot.lane.b32.xlu0 %v195, 114
      %v234 = vpop.permute.xlu0 %233
      %vm235 = vcmask 932864
      %v236 = vsel %vm235, %v232, %v234
      %vm238 = vcmask 1048448
      %239 = vst.msk [vmem:[%s170] sm:$0xff] %vm238, %v236
      %240 = vrot.lane.b32.xlu0 %v195, 112
      %v241 = vpop.permute.xlu0 %240
      %243 = vst.msk [vmem:[%s170 + $0x8] sm:$0xff] %vm197, %v241
      %244 = vrot.lane.b32.xlu0 %v195, 110
      %v245 = vpop.permute.xlu0 %244
      %247 = vst.msk [vmem:[%s170 + $0x8] sm:$0xff] %vm203, %v245
      %248 = vrot.lane.b32.xlu0 %v195, 108
      %v249 = vpop.permute.xlu0 %248
      %251 = vst.msk [vmem:[%s170 + $0x8] sm:$0xff] %vm208, %v249
      %252 = vrot.lane.b32.xlu0 %v195, 106
      %v253 = vpop.permute.xlu0 %252
      %255 = vst.msk [vmem:[%s170 + $0x8] sm:$0xff] %vm213, %v253
      %256 = vrot.lane.b32.xlu0 %v195, 104
      %v257 = vpop.permute.xlu0 %256
      %259 = vst.msk [vmem:[%s170 + $0x8] sm:$0xff] %vm218, %v257
      %260 = vrot.lane.b32.xlu0 %v195, 102
      %v261 = vpop.permute.xlu0 %260
      %263 = vst.msk [vmem:[%s170 + $0x8] sm:$0xff] %vm223, %v261
      %265 = vrot.lane.b32.xlu0 %v195, 100
      %v266 = vpop.permute.xlu0 %265
      %267 = vrot.lane.b32.xlu0 %v196, 100
      %v268 = vpop.permute.xlu0 %267
      %vm269 = vcmask 818176
      %v270 = vsel %vm269, %v266, %v268
      %272 = vst.msk [vmem:[%s170 + $0x8] sm:$0xff] %vm228, %v270
      %273 = vrot.lane.b32.xlu0 %v196, 98
      %v274 = vpop.permute.xlu0 %273
      %276 = vst.msk [vmem:[%s170 + $0x8] sm:$0xff] %vm238, %v274
      %p277 = scmp.lt.s32.totalorder %s14, 1
      %s278 = scalar_select %p277, %s14, 1
      %s279 = smul.addr %s278, 2
      %s280 = smul.addr %s279, 8
      %s281 = scalar_lea.vmem %s3, %s280
      // Predicated region
      $region33: #{conv_block_forward.5} parent=31 // pred_check
        %p282 = pneg %p100
      $region34: #{conv_block_forward.5} parent=31 // pred_check_branch
        %284 = sbr.rel (%p282) target = $region36
      $region35: #{conv_block_forward.5} parent=31 // pred_region
        _
      $region36: #{conv_block_forward.5} parent=31 // pred_fallthru
        _
    $region32: #{conv_block_forward.5} parent=5 // pred_fallthru
      _
    %p285 = scmp.le.s32.totalorder 2, %s9
    // Predicated region
    $region37: #{conv_block_forward.5} parent=5 // pred_check
      %p286 = pneg %p285
    $region38: #{conv_block_forward.5} parent=5 // pred_check_branch
      %288 = sbr.rel (%p286) target = $region40
    $region39: #{conv_block_forward.5} parent=5 // pred_region
      %s289 = ssub.s32 %s9, 2
      // Predicated region
      $region41: #{conv_block_forward.5} parent=39 // pred_check
        %p290 = pneg %p106
      $region42: #{conv_block_forward.5} parent=39 // pred_check_branch
        %292 = sbr.rel (%p290) target = $region44
      $region43: #{conv_block_forward.5} parent=39 // pred_region
        %p293 = scmp.lt.s32.totalorder %s15, 1
        %s294 = scalar_select %p293, %s15, 1
        %s295 = smul.addr %s294, 2
        %s296 = smul.addr %s295, 8
        %s297 = scalar_lea.vmem %s3, %s296
      $region44: #{conv_block_forward.5} parent=39 // pred_fallthru
        _
    $region40: #{conv_block_forward.5} parent=5 // pred_fallthru
      _
  $region6: #{conv_block_forward.5} parent=0 // loop_footer
    %s13 = sadd.s32 1, %s9
  $region7: #{conv_block_forward.5} parent=0 // loop_footer_branch
    %8 = sbr.rel target = $region3
  $region8: #{conv_block_forward.5} parent=0 // loop_exit
    _

// kernel: conv_block_forward.4
$region0: #{conv_block_forward.4}
  #allocation0 [shape = 'u32[]', space=smem, size = 0x4, offset = 0x4, fixed_abs, tag = 'smem constant byte address 0x4 - core index']
  #allocation1 [shape = 'u32[144,128]{1,0:T(1,128)}', space=vmem, size = 0x12000, scoped, tag = 'internal scratch']
  #allocation2 [shape = 'bf16[8,326]{1,0:T(8,128)(2,1)}', space=vmem, size = 0x1800, scoped, tag = 'scratch operand']
  %s0 = inlined_call_operand.vmem [shape: bf16[2,8,288], index: 0, kind: input, shape index: {}]
  %s1 = inlined_call_operand.vmem [shape: f32[8,1], index: 1, kind: input, shape index: {}]
  %s2 = inlined_call_operand.vmem [shape: f32[8,1], index: 2, kind: input, shape index: {}]
  %s3 = inlined_call_operand.vmem [shape: bf16[9,8,8], index: 3, kind: input, shape index: {}]
  %s4 = inlined_call_operand.vmem [shape: f32[1,288], index: 4, kind: input, shape index: {}]
  %s5 = inlined_call_operand.vmem [shape: bf16[2,8,288], index: 5, kind: output, shape index: {0}]
  %s6 = inlined_call_operand.vmem [shape: f32[2,8,1], index: 6, kind: output, shape index: {1}]
  %s7 = inlined_call_operand.vmem [shape: f32[2,8,1], index: 7, kind: output, shape index: {2}]
  %8 = xla_tuple %s5, %s6, %s7
  %s9 = sld [smem:[#allocation0]]
  $region69: #{conv_block_forward.4} parent=0
    _
  %s11 = ssub.s32 1, %s9
  %s12 = scalar_select 0, %s11, %s9
  loop: start=0, step=1, limit=4
  $region2: #{conv_block_forward.4} parent=0 // loop_pre_header
    _
  $region3: #{conv_block_forward.4} parent=0 // loop_header
    %s14 = sphi 0, %s18
    %p15 = scmp.ge.s32.totalorder %s14, 4
    %s24 = sphi 0, %s26
    %s27 = sphi 0, %s24
    %s28 = sphi 0, %s27
    %s44 = sphi 0, %s28
    %s48 = sphi 0, %s48
    %s50 = sphi 0, %s48
    %s51 = sphi 0, %s50
    %s65 = sphi 0, %s51
    %s69 = sphi 0, %s69
    %s71 = sphi 0, %s69
    %s72 = sphi 0, %s71
    %s86 = sphi 0, %s72
    %s90 = sphi 0, %s90
    %s92 = sphi 0, %s90
    %s93 = sphi 0, %s92
    %s107 = sphi 0, %s93
    %s111 = sphi 0, %s111
    %s113 = sphi 0, %s111
    %s114 = sphi 0, %s113
    %s128 = sphi 0, %s114
    %s134 = sphi 0, %s136
    %s137 = sphi 0, %s134
    %s138 = sphi 0, %s137
    %s154 = sphi 0, %s138
    %s160 = sphi 0, %s162
    %s163 = sphi 0, %s160
    %s164 = sphi 0, %s163
    %s180 = sphi 0, %s164
    %s186 = sphi 0, %s188
    %s189 = sphi 0, %s186
    %s190 = sphi 0, %s189
    %s206 = sphi 0, %s190
  $region4: #{conv_block_forward.4} parent=0 // loop_header_branch
    %17 = sbr.rel (%p15) target = $region8
  $region5: #{conv_block_forward.4} parent=0 // loop_body
    %s19 = ssub.s32 %s14, 1
    %s20 = ssub.s32 %s14, 2
    %s21 = sadd.s32 %s14, 1
    %s22 = ssub.s32 %s14, %s21
    %p23 = scmp.eq.s32.totalorder %s22, 0
    %s25 = sadd.s32 %s24, 1
    %s26 = scalar_select %p23, %s24, %s25
    %p29 = pneg %p23
    %p30 = scmp.eq.s32.totalorder %s14, 1
    %p31 = por %p29, %p30
    %p32 = scmp.ne.s32.totalorder %s24, %s27
    %p33 = scmp.eq.s32.totalorder %s14, 0
    %p34 = por %p32, %p33
    %p35 = scmp.ne.s32.totalorder %s24, %s27
    %p36 = scmp.eq.s32.totalorder %s19, 1
    %p37 = por %p35, %p36
    %p38 = scmp.ne.s32.totalorder %s27, %s28
    %p39 = scmp.eq.s32.totalorder %s19, 0
    %p40 = por %p38, %p39
    %p41 = scmp.ne.s32.totalorder %s27, %s28
    %p42 = scmp.eq.s32.totalorder %s20, 1
    %p43 = por %p41, %p42
    %p45 = scmp.ne.s32.totalorder %s28, %s44
    %p46 = scmp.eq.s32.totalorder %s20, 0
    %p47 = por %p45, %p46
    %s49 = sadd.s32 %s48, 1
    %p52 = scmp.eq.s32.totalorder %s14, 1
    %p53 = scmp.ne.s32.totalorder %s48, %s50
    %p54 = scmp.eq.s32.totalorder %s14, 0
    %p55 = por %p53, %p54
    %p56 = scmp.ne.s32.totalorder %s48, %s50
    %p57 = scmp.eq.s32.totalorder %s19, 1
    %p58 = por %p56, %p57
    %p59 = scmp.ne.s32.totalorder %s50, %s51
    %p60 = scmp.eq.s32.totalorder %s19, 0
    %p61 = por %p59, %p60
    %p62 = scmp.ne.s32.totalorder %s50, %s51
    %p63 = scmp.eq.s32.totalorder %s20, 1
    %p64 = por %p62, %p63
    %p66 = scmp.ne.s32.totalorder %s51, %s65
    %p67 = scmp.eq.s32.totalorder %s20, 0
    %p68 = por %p66, %p67
    %s70 = sadd.s32 %s69, 1
    %p73 = scmp.eq.s32.totalorder %s14, 1
    %p74 = scmp.ne.s32.totalorder %s69, %s71
    %p75 = scmp.eq.s32.totalorder %s14, 0
    %p76 = por %p74, %p75
    %p77 = scmp.ne.s32.totalorder %s69, %s71
    %p78 = scmp.eq.s32.totalorder %s19, 1
    %p79 = por %p77, %p78
    %p80 = scmp.ne.s32.totalorder %s71, %s72
    %p81 = scmp.eq.s32.totalorder %s19, 0
    %p82 = por %p80, %p81
    %p83 = scmp.ne.s32.totalorder %s71, %s72
    %p84 = scmp.eq.s32.totalorder %s20, 1
    %p85 = por %p83, %p84
    %p87 = scmp.ne.s32.totalorder %s72, %s86
    %p88 = scmp.eq.s32.totalorder %s20, 0
    %p89 = por %p87, %p88
    %s91 = sadd.s32 %s90, 1
    %p94 = scmp.eq.s32.totalorder %s14, 1
    %p95 = scmp.ne.s32.totalorder %s90, %s92
    %p96 = scmp.eq.s32.totalorder %s14, 0
    %p97 = por %p95, %p96
    %p98 = scmp.ne.s32.totalorder %s90, %s92
    %p99 = scmp.eq.s32.totalorder %s19, 1
    %p100 = por %p98, %p99
    %p101 = scmp.ne.s32.totalorder %s92, %s93
    %p102 = scmp.eq.s32.totalorder %s19, 0
    %p103 = por %p101, %p102
    %p104 = scmp.ne.s32.totalorder %s92, %s93
    %p105 = scmp.eq.s32.totalorder %s20, 1
    %p106 = por %p104, %p105
    %p108 = scmp.ne.s32.totalorder %s93, %s107
    %p109 = scmp.eq.s32.totalorder %s20, 0
    %p110 = por %p108, %p109
    %s112 = sadd.s32 %s111, 1
    %p115 = scmp.eq.s32.totalorder %s14, 1
    %p116 = scmp.ne.s32.totalorder %s111, %s113
    %p117 = scmp.eq.s32.totalorder %s14, 0
    %p118 = por %p116, %p117
    %p119 = scmp.ne.s32.totalorder %s111, %s113
    %p120 = scmp.eq.s32.totalorder %s19, 1
    %p121 = por %p119, %p120
    %p122 = scmp.ne.s32.totalorder %s113, %s114
    %p123 = scmp.eq.s32.totalorder %s19, 0
    %p124 = por %p122, %p123
    %p125 = scmp.ne.s32.totalorder %s113, %s114
    %p126 = scmp.eq.s32.totalorder %s20, 1
    %p127 = por %p125, %p126
    %p129 = scmp.ne.s32.totalorder %s114, %s128
    %p130 = scmp.eq.s32.totalorder %s20, 0
    %p131 = por %p129, %p130
    %s132 = ssub.s32 %s14, %s21
    %p133 = scmp.eq.s32.totalorder %s132, 0
    %s135 = sadd.s32 %s134, 1
    %s136 = scalar_select %p133, %s134, %s135
    %p139 = pneg %p133
    %p140 = scmp.eq.s32.totalorder %s14, 1
    %p141 = por %p139, %p140
    %p142 = scmp.ne.s32.totalorder %s134, %s137
    %p143 = scmp.eq.s32.totalorder %s14, 0
    %p144 = por %p142, %p143
    %p145 = scmp.ne.s32.totalorder %s134, %s137
    %p146 = scmp.eq.s32.totalorder %s19, 1
    %p147 = por %p145, %p146
    %p148 = scmp.ne.s32.totalorder %s137, %s138
    %p149 = scmp.eq.s32.totalorder %s19, 0
    %p150 = por %p148, %p149
    %p151 = scmp.ne.s32.totalorder %s137, %s138
    %p152 = scmp.eq.s32.totalorder %s20, 1
    %p153 = por %p151, %p152
    %p155 = scmp.ne.s32.totalorder %s138, %s154
    %p156 = scmp.eq.s32.totalorder %s20, 0
    %p157 = por %p155, %p156
    %s158 = ssub.s32 %s14, %s21
    %p159 = scmp.eq.s32.totalorder %s158, 0
    %s161 = sadd.s32 %s160, 1
    %s162 = scalar_select %p159, %s160, %s161
    %p165 = pneg %p159
    %p166 = scmp.eq.s32.totalorder %s14, 1
    %p167 = por %p165, %p166
    %p168 = scmp.ne.s32.totalorder %s160, %s163
    %p169 = scmp.eq.s32.totalorder %s14, 0
    %p170 = por %p168, %p169
    %p171 = scmp.ne.s32.totalorder %s160, %s163
    %p172 = scmp.eq.s32.totalorder %s19, 1
    %p173 = por %p171, %p172
    %p174 = scmp.ne.s32.totalorder %s163, %s164
    %p175 = scmp.eq.s32.totalorder %s19, 0
    %p176 = por %p174, %p175
    %p177 = scmp.ne.s32.totalorder %s163, %s164
    %p178 = scmp.eq.s32.totalorder %s20, 1
    %p179 = por %p177, %p178
    %p181 = scmp.ne.s32.totalorder %s164, %s180
    %p182 = scmp.eq.s32.totalorder %s20, 0
    %p183 = por %p181, %p182
    %s184 = ssub.s32 %s14, %s21
    %p185 = scmp.eq.s32.totalorder %s184, 0
    %s187 = sadd.s32 %s186, 1
    %s188 = scalar_select %p185, %s186, %s187
    %p191 = pneg %p185
    %p192 = scmp.eq.s32.totalorder %s14, 1
    %p193 = por %p191, %p192
    %p194 = scmp.ne.s32.totalorder %s186, %s189
    %p195 = scmp.eq.s32.totalorder %s14, 0
    %p196 = por %p194, %p195
    %p197 = scmp.ne.s32.totalorder %s186, %s189
    %p198 = scmp.eq.s32.totalorder %s19, 1
    %p199 = por %p197, %p198
    %p200 = scmp.ne.s32.totalorder %s189, %s190
    %p201 = scmp.eq.s32.totalorder %s19, 0
    %p202 = por %p200, %p201
    %p203 = scmp.ne.s32.totalorder %s189, %s190
    %p204 = scmp.eq.s32.totalorder %s20, 1
    %p205 = por %p203, %p204
    %p207 = scmp.ne.s32.totalorder %s190, %s206
    %p208 = scmp.eq.s32.totalorder %s20, 0
    %p209 = por %p207, %p208
    %p210 = scmp.le.s32.totalorder 1, %s14
    %p211 = scmp.lt.s32.totalorder %s14, 3
    %p212 = pnand %p210, %p211
    %p213 = pneg %p212
    // Predicated region
    $region9: #{conv_block_forward.4} parent=5 // pred_check
      _
    $region10: #{conv_block_forward.4} parent=5 // pred_check_branch
      %215 = sbr.rel (%p212) target = $region12
    $region11: #{conv_block_forward.4} parent=5 // pred_region
      %s216 = ssub.s32 %s14, 1
      // Predicated region
      $region13: #{conv_block_forward.4} parent=11 // pred_check
        %p217 = pneg %p61
      $region14: #{conv_block_forward.4} parent=11 // pred_check_branch
        %219 = sbr.rel (%p217) target = $region16
      $region15: #{conv_block_forward.4} parent=11 // pred_region
        _
      $region16: #{conv_block_forward.4} parent=11 // pred_fallthru
        _
      // Predicated region
      $region17: #{conv_block_forward.4} parent=11 // pred_check
        %p220 = pneg %p82
      $region18: #{conv_block_forward.4} parent=11 // pred_check_branch
        %222 = sbr.rel (%p220) target = $region20
      $region19: #{conv_block_forward.4} parent=11 // pred_region
        _
      $region20: #{conv_block_forward.4} parent=11 // pred_fallthru
        _
      // Predicated region
      $region21: #{conv_block_forward.4} parent=11 // pred_check
        %p223 = pneg %p103
      $region22: #{conv_block_forward.4} parent=11 // pred_check_branch
        %225 = sbr.rel (%p223) target = $region24
      $region23: #{conv_block_forward.4} parent=11 // pred_region
        _
      $region24: #{conv_block_forward.4} parent=11 // pred_fallthru
        _
      // Predicated region
      $region25: #{conv_block_forward.4} parent=11 // pred_check
        %p226 = pneg %p124
      $region26: #{conv_block_forward.4} parent=11 // pred_check_branch
        %228 = sbr.rel (%p226) target = $region28
      $region27: #{conv_block_forward.4} parent=11 // pred_region
        _
      $region28: #{conv_block_forward.4} parent=11 // pred_fallthru
        _
    $region12: #{conv_block_forward.4} parent=5 // pred_fallthru
      _
    %p229 = scmp.lt.s32.totalorder %s14, 2
    // Predicated region
    $region29: #{conv_block_forward.4} parent=5 // pred_check
      %p230 = pneg %p229
    $region30: #{conv_block_forward.4} parent=5 // pred_check_branch
      %232 = sbr.rel (%p230) target = $region32
    $region31: #{conv_block_forward.4} parent=5 // pred_region
      // Predicated region
      $region33: #{conv_block_forward.4} parent=31 // pred_check
        %p233 = pneg %p34
      $region34: #{conv_block_forward.4} parent=31 // pred_check_branch
        %235 = sbr.rel (%p233) target = $region36
      $region35: #{conv_block_forward.4} parent=31 // pred_region
        %p236 = scmp.lt.s32.totalorder %s14, 1
        %s237 = scalar_select %p236, %s14, 1
        %s238 = smul.addr %s237, 3
        %s239 = smul.addr %s238, 4
        %s240 = scalar_lea.vmem %s0, %s239
      $region36: #{conv_block_forward.4} parent=31 // pred_fallthru
        _
    $region32: #{conv_block_forward.4} parent=5 // pred_fallthru
      _
    %p241 = scmp.le.s32.totalorder 1, %s14
    %p242 = scmp.lt.s32.totalorder %s14, 3
    %p243 = pnand %p241, %p242
    %p244 = pneg %p243
    // Predicated region
    $region37: #{conv_block_forward.4} parent=5 // pred_check
      _
    $region38: #{conv_block_forward.4} parent=5 // pred_check_branch
      %246 = sbr.rel (%p243) target = $region40
    $region39: #{conv_block_forward.4} parent=5 // pred_region
      %s247 = ssub.s32 %s14, 1
      %p248 = scmp.lt.s32.totalorder %s19, 1
      %s249 = scalar_select %p248, %s19, 1
      %s250 = smul.addr %s249, 3
      %s251 = smul.addr %s250, 4
      %s252 = scalar_lea.vmem %s0, %s251
      %p253 = pneg %p40
      %p254 = pneg %p37
      %p255 = pneg %p61
      %p256 = pneg %p58
      %p257 = pneg %p82
      %p258 = pneg %p79
      %p259 = pneg %p103
      %p260 = pneg %p100
      %p261 = pneg %p124
      %p262 = pneg %p121
      %p263 = pneg %p150
      %p264 = pneg %p147
      %p265 = scmp.lt.s32.totalorder %s19, 1
      %s266 = scalar_select %p265, %s19, 1
      %s267 = smul.addr %s266, 3
      %s268 = smul.addr %s267, 4
      %s269 = scalar_lea.vmem %s5, %s268
      %p270 = pneg %p176
      %p271 = pneg %p173
      %p272 = scmp.lt.s32.totalorder %s19, 1
      %s273 = scalar_select %p272, %s19, 1
      %s274 = smul.addr %s273, 8
      %s275 = scalar_lea.vmem %s6, %s274
      %p276 = pneg %p202
      %p277 = pneg %p199
      %p278 = scmp.lt.s32.totalorder %s19, 1
      %s279 = scalar_select %p278, %s19, 1
      %s280 = smul.addr %s279, 8
      %s281 = scalar_lea.vmem %s7, %s280
      %p282 = scmp.lt.s32.totalorder %s19, 1
      %s283 = scalar_select %p282, %s19, 1
      %s284 = smul.addr %s283, 3
      %s285 = smul.addr %s284, 4
      %s286 = scalar_lea.vmem %s0, %s285
      %p287 = scmp.lt.s32.totalorder %s19, 1
      %s288 = scalar_select %p287, %s19, 1
      %s289 = smul.addr %s288, 3
      %s290 = smul.addr %s289, 4
      %s291 = scalar_lea.vmem %s5, %s290
      %p292 = scmp.lt.s32.totalorder %s19, 1
      %s293 = scalar_select %p292, %s19, 1
      %s294 = smul.addr %s293, 8
      %s295 = scalar_lea.vmem %s6, %s294
      %p296 = scmp.lt.s32.totalorder %s19, 1
      %s297 = scalar_select %p296, %s19, 1
      %s298 = smul.addr %s297, 8
      %s299 = scalar_lea.vmem %s7, %s298
      %v301 = vld [vmem:[%s286] sm:$0xff]
      %v302 = vld [vmem:[%s286 + $0x8] sm:$0xf]
      %v303 = vunpack.c.l.bf16 %v301
      %v304 = vunpack.c.h.bf16 %v301
      %v305 = vunpack.c.l.bf16 %v302
      %v306 = vld [vmem:[%s1] sm:$0xff]
      %308 = vset.pattern.permute.xlu0 0
      %309 = vperm.xlu0 %308, %v306
      %v310 = vpop.permute.xlu0 %309
      %v312 = vmul.f32 %v303, %v310
      %v313 = vmul.f32 %v304, %v310
      %v314 = vmul.f32 %v305, %v310
      %v315 = vld [vmem:[%s2] sm:$0xff]
      %317 = vset.pattern.permute.xlu0 0
      %318 = vperm.xlu0 %317, %v315
      %v319 = vpop.permute.xlu0 %318
      %v321 = vadd.f32 %v312, %v319
      %v322 = vadd.f32 %v313, %v319
      %v323 = vadd.f32 %v314, %v319
      %v324 = vmax.f32 %v321, 0.0
      %v325 = vmax.f32 %v322, 0.0
      %v326 = vmax.f32 %v323, 0.0
      %v327 = vpack.c.bf16 %v324, %v324
      %v328 = vpack.c.bf16 %v325, %v325
      %v329 = vpack.c.bf16 %v326, %v326
      %v330 = vld [vmem:[%s3] sm:$0xf]
      %v331 = vld [vmem:[%s3 + $0x4] sm:$0xf]
      %v332 = vld [vmem:[%s3 + $0x8] sm:$0xf]
      %v333 = vld [vmem:[%s3 + $0xc] sm:$0xf]
      %v334 = vld [vmem:[%s3 + $0x10] sm:$0xf]
      %v335 = vld [vmem:[%s3 + $0x14] sm:$0xf]
      %v336 = vld [vmem:[%s3 + $0x18] sm:$0xf]
      %v337 = vld [vmem:[%s3 + $0x1c] sm:$0xf]
      %v338 = vld [vmem:[%s3 + $0x20] sm:$0xf]
      %339 = vst [vmem:[#allocation2] sm:$0xff] 0
      %vm340 = vcmask 568320
      %341 = vst.msk [vmem:[#allocation2 + $0x8] sm:$0xf] %vm340, 0
      %v343 = vunpack.c.l.b16 %v327
      %v344 = vpack.c.b16 %v343, %v343
      %345 = vrot.lane.b32.xlu0 %v344, 19
      %v346 = vpop.permute.xlu0 %345
      %vm348 = vcmask 281752
      %349 = vst.msk [vmem:[#allocation2] sm:$0xf] %vm348, %v346
      %vm350 = vcmask 429352
      %351 = vst.msk [vmem:[#allocation2] sm:$0xf] %vm350, %v346
      %vm352 = vcmask 576952
      %353 = vst.msk [vmem:[#allocation2] sm:$0xf] %vm352, %v346
      %vm354 = vcmask 724552
      %355 = vst.msk [vmem:[#allocation2] sm:$0xf] %vm354, %v346
      %vm356 = vcmask 872152
      %357 = vst.msk [vmem:[#allocation2] sm:$0xf] %vm356, %v346
      %vm358 = vcmask 1019752
      %359 = vst.msk [vmem:[#allocation2] sm:$0xf] %vm358, %v346
      %v360 = vrot.slane %v346, 4
      %vm361 = vcmask 154624
      %v362 = vsel %vm361, %v360, %v346
      %vm364 = vcmask 1044472
      %vm365 = vcmask 121860
      %vm366 = vmor %vm365, %vm364
      %367 = vst.msk [vmem:[#allocation2] sm:$0xff] %vm366, %v362
      %v369 = vunpack.c.l.b16 %v328
      %v370 = vpack.c.b16 %v369, %v343
      %371 = vrot.lane.b32.xlu0 %v370, 19
      %v372 = vpop.permute.xlu0 %371
      %v373 = vrot.slane %v372, 4
      %v374 = vsel %vm361, %v372, %v373
      %vm376 = vcmask 265352
      %377 = vst.msk [vmem:[#allocation2 + $0x4] sm:$0xf] %vm376, %v374
      %v378 = vpack.c.b16 %v369, %v369
      %379 = vrot.lane.b32.xlu0 %v378, 19
      %v380 = vpop.permute.xlu0 %379
      %vm382 = vcmask 412952
      %383 = vst.msk [vmem:[#allocation2 + $0x4] sm:$0xf] %vm382, %v380
      %vm384 = vcmask 560552
      %385 = vst.msk [vmem:[#allocation2 + $0x4] sm:$0xf] %vm384, %v380
      %vm386 = vcmask 708152
      %387 = vst.msk [vmem:[#allocation2 + $0x4] sm:$0xf] %vm386, %v380
      %vm388 = vcmask 855752
      %389 = vst.msk [vmem:[#allocation2 + $0x4] sm:$0xf] %vm388, %v380
      %vm390 = vcmask 1003352
      %391 = vst.msk [vmem:[#allocation2 + $0x4] sm:$0xf] %vm390, %v380
      %v392 = vrot.slane %v380, 4
      %v393 = vsel %vm361, %v392, %v380
      %vm395 = vcmask 1044456
      %vm396 = vcmask 105476
      %vm397 = vmor %vm396, %vm395
      %398 = vst.msk [vmem:[#allocation2 + $0x4] sm:$0xff] %vm397, %v393
      %v400 = vunpack.c.l.b16 %v329
      %v401 = vpack.c.b16 %v400, %v369
      %402 = vrot.lane.b32.xlu0 %v401, 19
      %v403 = vpop.permute.xlu0 %402
      %v404 = vrot.slane %v403, 4
      %v405 = vsel %vm361, %v403, %v404
      %vm407 = vcmask 248952
      %408 = vst.msk [vmem:[#allocation2 + $0x8] sm:$0xf] %vm407, %v405
      %v409 = vpack.c.b16 %v400, %v400
      %410 = vrot.lane.b32.xlu0 %v409, 19
      %v411 = vpop.permute.xlu0 %410
      %vm413 = vcmask 396552
      %414 = vst.msk [vmem:[#allocation2 + $0x8] sm:$0xf] %vm413, %v411
      %v415 = vld [vmem:[#allocation2] sm:$0xff]
      %v416 = vld [vmem:[#allocation2 + $0x8] sm:$0xf]
      %v419 = vunpack.c.l.b16 %v415
      %v420 = vunpack.c.h.b16 %v415
      %v421 = vunpack.c.l.b16 %v416
      %v422 = vpack.c.b16 %v419, %v419
      %v423 = vpack.c.b16 %v420, %v420
      %v424 = vpack.c.b16 %v421, %v421
      %425 = vrot.lane.b32.xlu0 %v422, 127
      %v426 = vpop.permute.xlu0 %425
      %427 = vrot.lane.b32.xlu0 %v423, 127
      %v428 = vpop.permute.xlu0 %427
      %429 = vrot.lane.b32.xlu0 %v424, 127
      %v430 = vpop.permute.xlu0 %429
      %vm431 = vcmask 1039360
      %v432 = vsel %vm431, %v426, %v428
      %v433 = vsel %vm431, %v428, %v430
      %vm434 = vcmask 64512
      %v436 = vsel %vm434, %v331, 0
      %vm438 = vcmask 1043456
      %v440 = vsel %vm438, %v432, 0
      %v443 = vsel %vm438, %v433, 0
      %v446 = vsel %vm438, %v430, 0
      %448 = vmatprep.subr.bf16.mxu0 0
      %449 = vmatpush1.bf16.msra.mxu0 0
      %450 = vmatprep.subr.bf16.mxu0 0
      %451 = vmatpush1.bf16.msra.mxu0 0
      %452 = vmatprep.subr.bf16.mxu0 0
      %453 = vmatpush1.bf16.msra.mxu0 0
      %454 = vmatprep.subr.bf16.mxu0 0
      %455 = vmatpush1.bf16.msra.mxu0 0
      %456 = vmatprep.subr.bf16.mxu0 0
      %457 = vmatpush1.bf16.msra.mxu0 0
      %458 = vmatprep.subr.bf16.mxu0 0
      %459 = vmatpush1.bf16.msra.mxu0 0
      %460 = vmatprep.subr.bf16.mxu0 0
      %461 = vmatpush1.bf16.msra.mxu0 0
      %462 = vmatprep.subr.bf16.mxu0 %v443
      %463 = vmatpush1.bf16.msra.mxu0 %v440
      %464 = vmatprep.subr.bf16.mxu0 0
      %465 = vmatpush2.bf16.msra.mxu0 0
      %466 = vmatprep.subr.bf16.mxu0 0
      %467 = vmatpush2.bf16.msra.mxu0 0
      %468 = vmatprep.subr.bf16.mxu0 0
      %469 = vmatpush2.bf16.msra.mxu0 0
      %470 = vmatprep.subr.bf16.mxu0 0
      %471 = vmatpush2.bf16.msra.mxu0 0
      %472 = vmatprep.subr.bf16.mxu0 0
      %473 = vmatpush2.bf16.msra.mxu0 0
      %474 = vmatprep.subr.bf16.mxu0 0
      %475 = vmatpush2.bf16.msra.mxu0 0
      %476 = vmatprep.subr.bf16.mxu0 0
      %477 = vmatpush2.bf16.msra.mxu0 0
      %478 = vmatprep.subr.bf16.mxu0 0
      %479 = vmatpush2.bf16.msra.mxu0 0
      %480 = vmatprep.mubr.bf16.mxu0 0
      %481 = vmatmul.mubr.bf16.gmra.mxu0 %v436
      %v482 = vpop.f32.mrf.mxu0
      %v483 = vadd.f32 0.0, %v482
      %v484 = vpop.f32.mrf.mxu0
      %v485 = vadd.f32 0.0, %v484
      %v486 = vpop.f32.mrf.mxu0
      %v487 = vpop.f32.mrf.mxu0
      %488 = vdwg.mxu0
      %489 = vmatprep.subr.bf16.mxu0 0
      %490 = vmatpush1.bf16.msra.mxu0 0
      %491 = vmatprep.subr.bf16.mxu0 0
      %492 = vmatpush1.bf16.msra.mxu0 0
      %493 = vmatprep.subr.bf16.mxu0 0
      %494 = vmatpush1.bf16.msra.mxu0 0
      %495 = vmatprep.subr.bf16.mxu0 0
      %496 = vmatpush1.bf16.msra.mxu0 0
      %497 = vmatprep.subr.bf16.mxu0 0
      %498 = vmatpush1.bf16.msra.mxu0 0
      %499 = vmatprep.subr.bf16.mxu0 0
      %500 = vmatpush1.bf16.msra.mxu0 0
      %501 = vmatprep.subr.bf16.mxu0 0
      %502 = vmatpush1.bf16.msra.mxu0 0
      %503 = vmatprep.subr.bf16.mxu0 0
      %504 = vmatpush1.bf16.msra.mxu0 %v446
      %505 = vmatprep.subr.bf16.mxu0 0
      %506 = vmatpush2.bf16.msra.mxu0 0
      %507 = vmatprep.subr.bf16.mxu0 0
      %508 = vmatpush2.bf16.msra.mxu0 0
      %509 = vmatprep.subr.bf16.mxu0 0
      %510 = vmatpush2.bf16.msra.mxu0 0
      %511 = vmatprep.subr.bf16.mxu0 0
      %512 = vmatpush2.bf16.msra.mxu0 0
      %513 = vmatprep.subr.bf16.mxu0 0
      %514 = vmatpush2.bf16.msra.mxu0 0
      %515 = vmatprep.subr.bf16.mxu0 0
      %516 = vmatpush2.bf16.msra.mxu0 0
      %517 = vmatprep.subr.bf16.mxu0 0
      %518 = vmatpush2.bf16.msra.mxu0 0
      %519 = vmatprep.subr.bf16.mxu0 0
      %520 = vmatpush2.bf16.msra.mxu0 0
      %521 = vmatprep.mubr.bf16.mxu0 0
      %522 = vmatmul.mubr.bf16.gmra.mxu0 %v436
      %v523 = vpop.f32.mrf.mxu0
      %v524 = vadd.f32 0.0, %v523
      %v525 = vpop.f32.mrf.mxu0
      %v526 = vpop.f32.mrf.mxu0
      %v527 = vpop.f32.mrf.mxu0
      %528 = vdwg.mxu0
      %v530 = vsel %vm434, %v330, 0
      %v533 = vsel %vm438, %v422, 0
      %v536 = vsel %vm438, %v423, 0
      %v539 = vsel %vm438, %v424, 0
      %541 = vmatprep.subr.bf16.mxu0 0
      %542 = vmatpush1.bf16.msra.mxu0 0
      %543 = vmatprep.subr.bf16.mxu0 0
      %544 = vmatpush1.bf16.msra.mxu0 0
      %545 = vmatprep.subr.bf16.mxu0 0
      %546 = vmatpush1.bf16.msra.mxu0 0
      %547 = vmatprep.subr.bf16.mxu0 0
      %548 = vmatpush1.bf16.msra.mxu0 0
      %549 = vmatprep.subr.bf16.mxu0 0
      %550 = vmatpush1.bf16.msra.mxu0 0
      %551 = vmatprep.subr.bf16.mxu0 0
      %552 = vmatpush1.bf16.msra.mxu0 0
      %553 = vmatprep.subr.bf16.mxu0 0
      %554 = vmatpush1.bf16.msra.mxu0 0
      %555 = vmatprep.subr.bf16.mxu0 %v536
      %556 = vmatpush1.bf16.msra.mxu0 %v533
      %557 = vmatprep.subr.bf16.mxu0 0
      %558 = vmatpush2.bf16.msra.mxu0 0
      %559 = vmatprep.subr.bf16.mxu0 0
      %560 = vmatpush2.bf16.msra.mxu0 0
      %561 = vmatprep.subr.bf16.mxu0 0
      %562 = vmatpush2.bf16.msra.mxu0 0
      %563 = vmatprep.subr.bf16.mxu0 0
      %564 = vmatpush2.bf16.msra.mxu0 0
      %565 = vmatprep.subr.bf16.mxu0 0
      %566 = vmatpush2.bf16.msra.mxu0 0
      %567 = vmatprep.subr.bf16.mxu0 0
      %568 = vmatpush2.bf16.msra.mxu0 0
      %569 = vmatprep.subr.bf16.mxu0 0
      %570 = vmatpush2.bf16.msra.mxu0 0
      %571 = vmatprep.subr.bf16.mxu0 0
      %572 = vmatpush2.bf16.msra.mxu0 0
      %573 = vmatprep.mubr.bf16.mxu0 0
      %574 = vmatmul.mubr.bf16.gmra.mxu0 %v530
      %v575 = vpop.f32.mrf.mxu0
      %v576 = vadd.f32 %v483, %v575
      %v577 = vpop.f32.mrf.mxu0
      %v578 = vadd.f32 %v485, %v577
      %v579 = vpop.f32.mrf.mxu0
      %v580 = vpop.f32.mrf.mxu0
      %581 = vdwg.mxu0
      %582 = vmatprep.subr.bf16.mxu0 0
      %583 = vmatpush1.bf16.msra.mxu0 0
      %584 = vmatprep.subr.bf16.mxu0 0
      %585 = vmatpush1.bf16.msra.mxu0 0
      %586 = vmatprep.subr.bf16.mxu0 0
      %587 = vmatpush1.bf16.msra.mxu0 0
      %588 = vmatprep.subr.bf16.mxu0 0
      %589 = vmatpush1.bf16.msra.mxu0 0
      %590 = vmatprep.subr.bf16.mxu0 0
      %591 = vmatpush1.bf16.msra.mxu0 0
      %592 = vmatprep.subr.bf16.mxu0 0
      %593 = vmatpush1.bf16.msra.mxu0 0
      %594 = vmatprep.subr.bf16.mxu0 0
      %595 = vmatpush1.bf16.msra.mxu0 0
      %596 = vmatprep.subr.bf16.mxu0 0
      %597 = vmatpush1.bf16.msra.mxu0 %v539
      %598 = vmatprep.subr.bf16.mxu0 0
      %599 = vmatpush2.bf16.msra.mxu0 0
      %600 = vmatprep.subr.bf16.mxu0 0
      %601 = vmatpush2.bf16.msra.mxu0 0
      %602 = vmatprep.subr.bf16.mxu0 0
      %603 = vmatpush2.bf16.msra.mxu0 0
      %604 = vmatprep.subr.bf16.mxu0 0
      %605 = vmatpush2.bf16.msra.mxu0 0
      %606 = vmatprep.subr.bf16.mxu0 0
      %607 = vmatpush2.bf16.msra.mxu0 0
      %608 = vmatprep.subr.bf16.mxu0 0
      %609 = vmatpush2.bf16.msra.mxu0 0
      %610 = vmatprep.subr.bf16.mxu0 0
      %611 = vmatpush2.bf16.msra.mxu0 0
      %612 = vmatprep.subr.bf16.mxu0 0
      %613 = vmatpush2.bf16.msra.mxu0 0
      %614 = vmatprep.mubr.bf16.mxu0 0
      %615 = vmatmul.mubr.bf16.gmra.mxu0 %v530
      %v616 = vpop.f32.mrf.mxu0
      %v617 = vadd.f32 %v524, %v616
      %v618 = vpop.f32.mrf.mxu0
      %v619 = vpop.f32.mrf.mxu0
      %v620 = vpop.f32.mrf.mxu0
      %621 = vdwg.mxu0
      %622 = vrot.lane.b32.xlu0 %v422, 126
      %v623 = vpop.permute.xlu0 %622
      %624 = vrot.lane.b32.xlu0 %v423, 126
      %v625 = vpop.permute.xlu0 %624
      %626 = vrot.lane.b32.xlu0 %v424, 126
      %v627 = vpop.permute.xlu0 %626
      %vm628 = vcmask 1031168
      %v629 = vsel %vm628, %v623, %v625
      %v630 = vsel %vm628, %v625, %v627
      %v632 = vsel %vm434, %v332, 0
      %v635 = vsel %vm438, %v629, 0
      %v638 = vsel %vm438, %v630, 0
      %v641 = vsel %vm438, %v627, 0
      %643 = vmatprep.subr.bf16.mxu0 0
      %644 = vmatpush1.bf16.msra.mxu0 0
      %645 = vmatprep.subr.bf16.mxu0 0
      %646 = vmatpush1.bf16.msra.mxu0 0
      %647 = vmatprep.subr.bf16.mxu0 0
      %648 = vmatpush1.bf16.msra.mxu0 0
      %649 = vmatprep.subr.bf16.mxu0 0
      %650 = vmatpush1.bf16.msra.mxu0 0
      %651 = vmatprep.subr.bf16.mxu0 0
      %652 = vmatpush1.bf16.msra.mxu0 0
      %653 = vmatprep.subr.bf16.mxu0 0
      %654 = vmatpush1.bf16.msra.mxu0 0
      %655 = vmatprep.subr.bf16.mxu0 0
      %656 = vmatpush1.bf16.msra.mxu0 0
      %657 = vmatprep.subr.bf16.mxu0 %v638
      %658 = vmatpush1.bf16.msra.mxu0 %v635
      %659 = vmatprep.subr.bf16.mxu0 0
      %660 = vmatpush2.bf16.msra.mxu0 0
      %661 = vmatprep.subr.bf16.mxu0 0
      %662 = vmatpush2.bf16.msra.mxu0 0
      %663 = vmatprep.subr.bf16.mxu0 0
      %664 = vmatpush2.bf16.msra.mxu0 0
      %665 = vmatprep.subr.bf16.mxu0 0
      %666 = vmatpush2.bf16.msra.mxu0 0
      %667 = vmatprep.subr.bf16.mxu0 0
      %668 = vmatpush2.bf16.msra.mxu0 0
      %669 = vmatprep.subr.bf16.mxu0 0
      %670 = vmatpush2.bf16.msra.mxu0 0
      %671 = vmatprep.subr.bf16.mxu0 0
      %672 = vmatpush2.bf16.msra.mxu0 0
      %673 = vmatprep.subr.bf16.mxu0 0
      %674 = vmatpush2.bf16.msra.mxu0 0
      %675 = vmatprep.mubr.bf16.mxu0 0
      %676 = vmatmul.mubr.bf16.gmra.mxu0 %v632
      %v677 = vpop.f32.mrf.mxu0
      %v678 = vadd.f32 0.0, %v677
      %v679 = vpop.f32.mrf.mxu0
      %v680 = vadd.f32 0.0, %v679
      %v681 = vpop.f32.mrf.mxu0
      %v682 = vpop.f32.mrf.mxu0
      %683 = vdwg.mxu0
      %684 = vmatprep.subr.bf16.mxu0 0
      %685 = vmatpush1.bf16.msra.mxu0 0
      %686 = vmatprep.subr.bf16.mxu0 0
      %687 = vmatpush1.bf16.msra.mxu0 0
      %688 = vmatprep.subr.bf16.mxu0 0
      %689 = vmatpush1.bf16.msra.mxu0 0
      %690 = vmatprep.subr.bf16.mxu0 0
      %691 = vmatpush1.bf16.msra.mxu0 0
      %692 = vmatprep.subr.bf16.mxu0 0
      %693 = vmatpush1.bf16.msra.mxu0 0
      %694 = vmatprep.subr.bf16.mxu0 0
      %695 = vmatpush1.bf16.msra.mxu0 0
      %696 = vmatprep.subr.bf16.mxu0 0
      %697 = vmatpush1.bf16.msra.mxu0 0
      %698 = vmatprep.subr.bf16.mxu0 0
      %699 = vmatpush1.bf16.msra.mxu0 %v641
      %700 = vmatprep.subr.bf16.mxu0 0
      %701 = vmatpush2.bf16.msra.mxu0 0
      %702 = vmatprep.subr.bf16.mxu0 0
      %703 = vmatpush2.bf16.msra.mxu0 0
      %704 = vmatprep.subr.bf16.mxu0 0
      %705 = vmatpush2.bf16.msra.mxu0 0
      %706 = vmatprep.subr.bf16.mxu0 0
      %707 = vmatpush2.bf16.msra.mxu0 0
      %708 = vmatprep.subr.bf16.mxu0 0
      %709 = vmatpush2.bf16.msra.mxu0 0
      %710 = vmatprep.subr.bf16.mxu0 0
      %711 = vmatpush2.bf16.msra.mxu0 0
      %712 = vmatprep.subr.bf16.mxu0 0
      %713 = vmatpush2.bf16.msra.mxu0 0
      %714 = vmatprep.subr.bf16.mxu0 0
      %715 = vmatpush2.bf16.msra.mxu0 0
      %716 = vmatprep.mubr.bf16.mxu0 0
      %717 = vmatmul.mubr.bf16.gmra.mxu0 %v632
      %v718 = vpop.f32.mrf.mxu0
      %v719 = vadd.f32 0.0, %v718
      %v720 = vpop.f32.mrf.mxu0
      %v721 = vpop.f32.mrf.mxu0
      %v722 = vpop.f32.mrf.mxu0
      %723 = vdwg.mxu0
      %v724 = vadd.f32 %v576, %v678
      %v725 = vadd.f32 %v578, %v680
      %v726 = vadd.f32 %v617, %v719
      %727 = vrot.lane.b32.xlu0 %v422, 110
      %v728 = vpop.permute.xlu0 %727
      %729 = vrot.lane.b32.xlu0 %v423, 110
      %v730 = vpop.permute.xlu0 %729
      %731 = vrot.lane.b32.xlu0 %v424, 110
      %v732 = vpop.permute.xlu0 %731
      %vm733 = vcmask 900096
      %v734 = vsel %vm733, %v728, %v730
      %v735 = vsel %vm733, %v730, %v732
      %v737 = vsel %vm434, %v333, 0
      %v740 = vsel %vm438, %v734, 0
      %v743 = vsel %vm438, %v735, 0
      %v746 = vsel %vm438, %v732, 0
      %748 = vmatprep.subr.bf16.mxu0 0
      %749 = vmatpush1.bf16.msra.mxu0 0
      %750 = vmatprep.subr.bf16.mxu0 0
      %751 = vmatpush1.bf16.msra.mxu0 0
      %752 = vmatprep.subr.bf16.mxu0 0
      %753 = vmatpush1.bf16.msra.mxu0 0
      %754 = vmatprep.subr.bf16.mxu0 0
      %755 = vmatpush1.bf16.msra.mxu0 0
      %756 = vmatprep.subr.bf16.mxu0 0
      %757 = vmatpush1.bf16.msra.mxu0 0
      %758 = vmatprep.subr.bf16.mxu0 0
      %759 = vmatpush1.bf16.msra.mxu0 0
      %760 = vmatprep.subr.bf16.mxu0 0
      %761 = vmatpush1.bf16.msra.mxu0 0
      %762 = vmatprep.subr.bf16.mxu0 %v743
      %763 = vmatpush1.bf16.msra.mxu0 %v740
      %764 = vmatprep.subr.bf16.mxu0 0
      %765 = vmatpush2.bf16.msra.mxu0 0
      %766 = vmatprep.subr.bf16.mxu0 0
      %767 = vmatpush2.bf16.msra.mxu0 0
      %768 = vmatprep.subr.bf16.mxu0 0
      %769 = vmatpush2.bf16.msra.mxu0 0
      %770 = vmatprep.subr.bf16.mxu0 0
      %771 = vmatpush2.bf16.msra.mxu0 0
      %772 = vmatprep.subr.bf16.mxu0 0
      %773 = vmatpush2.bf16.msra.mxu0 0
      %774 = vmatprep.subr.bf16.mxu0 0
      %775 = vmatpush2.bf16.msra.mxu0 0
      %776 = vmatprep.subr.bf16.mxu0 0
      %777 = vmatpush2.bf16.msra.mxu0 0
      %778 = vmatprep.subr.bf16.mxu0 0
      %779 = vmatpush2.bf16.msra.mxu0 0
      %780 = vmatprep.mubr.bf16.mxu0 0
      %781 = vmatmul.mubr.bf16.gmra.mxu0 %v737
      %v782 = vpop.f32.mrf.mxu0
      %v783 = vadd.f32 0.0, %v782
      %v784 = vpop.f32.mrf.mxu0
      %v785 = vadd.f32 0.0, %v784
      %v786 = vpop.f32.mrf.mxu0
      %v787 = vpop.f32.mrf.mxu0
      %788 = vdwg.mxu0
      %789 = vmatprep.subr.bf16.mxu0 0
      %790 = vmatpush1.bf16.msra.mxu0 0
      %791 = vmatprep.subr.bf16.mxu0 0
      %792 = vmatpush1.bf16.msra.mxu0 0
      %793 = vmatprep.subr.bf16.mxu0 0
      %794 = vmatpush1.bf16.msra.mxu0 0
      %795 = vmatprep.subr.bf16.mxu0 0
      %796 = vmatpush1.bf16.msra.mxu0 0
      %797 = vmatprep.subr.bf16.mxu0 0
      %798 = vmatpush1.bf16.msra.mxu0 0
      %799 = vmatprep.subr.bf16.mxu0 0
      %800 = vmatpush1.bf16.msra.mxu0 0
      %801 = vmatprep.subr.bf16.mxu0 0
      %802 = vmatpush1.bf16.msra.mxu0 0
      %803 = vmatprep.subr.bf16.mxu0 0
      %804 = vmatpush1.bf16.msra.mxu0 %v746
      %805 = vmatprep.subr.bf16.mxu0 0
      %806 = vmatpush2.bf16.msra.mxu0 0
      %807 = vmatprep.subr.bf16.mxu0 0
      %808 = vmatpush2.bf16.msra.mxu0 0
      %809 = vmatprep.subr.bf16.mxu0 0
      %810 = vmatpush2.bf16.msra.mxu0 0
      %811 = vmatprep.subr.bf16.mxu0 0
      %812 = vmatpush2.bf16.msra.mxu0 0
      %813 = vmatprep.subr.bf16.mxu0 0
      %814 = vmatpush2.bf16.msra.mxu0 0
      %815 = vmatprep.subr.bf16.mxu0 0
      %816 = vmatpush2.bf16.msra.mxu0 0
      %817 = vmatprep.subr.bf16.mxu0 0
      %818 = vmatpush2.bf16.msra.mxu0 0
      %819 = vmatprep.subr.bf16.mxu0 0
      %820 = vmatpush2.bf16.msra.mxu0 0
      %821 = vmatprep.mubr.bf16.mxu0 0
      %822 = vmatmul.mubr.bf16.gmra.mxu0 %v737
      %v823 = vpop.f32.mrf.mxu0
      %v824 = vadd.f32 0.0, %v823
      %v825 = vpop.f32.mrf.mxu0
      %v826 = vpop.f32.mrf.mxu0
      %v827 = vpop.f32.mrf.mxu0
      %828 = vdwg.mxu0
      %v829 = vadd.f32 %v724, %v783
      %v830 = vadd.f32 %v725, %v785
      %v831 = vadd.f32 %v726, %v824
      %832 = vrot.lane.b32.xlu0 %v422, 109
      %v833 = vpop.permute.xlu0 %832
      %834 = vrot.lane.b32.xlu0 %v423, 109
      %v835 = vpop.permute.xlu0 %834
      %836 = vrot.lane.b32.xlu0 %v424, 109
      %v837 = vpop.permute.xlu0 %836
      %vm838 = vcmask 891904
      %v839 = vsel %vm838, %v833, %v835
      %v840 = vsel %vm838, %v835, %v837
      %v842 = vsel %vm434, %v334, 0
      %v845 = vsel %vm438, %v839, 0
      %v848 = vsel %vm438, %v840, 0
      %v851 = vsel %vm438, %v837, 0
      %853 = vmatprep.subr.bf16.mxu0 0
      %854 = vmatpush1.bf16.msra.mxu0 0
      %855 = vmatprep.subr.bf16.mxu0 0
      %856 = vmatpush1.bf16.msra.mxu0 0
      %857 = vmatprep.subr.bf16.mxu0 0
      %858 = vmatpush1.bf16.msra.mxu0 0
      %859 = vmatprep.subr.bf16.mxu0 0
      %860 = vmatpush1.bf16.msra.mxu0 0
      %861 = vmatprep.subr.bf16.mxu0 0
      %862 = vmatpush1.bf16.msra.mxu0 0
      %863 = vmatprep.subr.bf16.mxu0 0
      %864 = vmatpush1.bf16.msra.mxu0 0
      %865 = vmatprep.subr.bf16.mxu0 0
      %866 = vmatpush1.bf16.msra.mxu0 0
      %867 = vmatprep.subr.bf16.mxu0 %v848
      %868 = vmatpush1.bf16.msra.mxu0 %v845
      %869 = vmatprep.subr.bf16.mxu0 0
      %870 = vmatpush2.bf16.msra.mxu0 0
      %871 = vmatprep.subr.bf16.mxu0 0
      %872 = vmatpush2.bf16.msra.mxu0 0
      %873 = vmatprep.subr.bf16.mxu0 0
      %874 = vmatpush2.bf16.msra.mxu0 0
      %875 = vmatprep.subr.bf16.mxu0 0
      %876 = vmatpush2.bf16.msra.mxu0 0
      %877 = vmatprep.subr.bf16.mxu0 0
      %878 = vmatpush2.bf16.msra.mxu0 0
      %879 = vmatprep.subr.bf16.mxu0 0
      %880 = vmatpush2.bf16.msra.mxu0 0
      %881 = vmatprep.subr.bf16.mxu0 0
      %882 = vmatpush2.bf16.msra.mxu0 0
      %883 = vmatprep.subr.bf16.mxu0 0
      %884 = vmatpush2.bf16.msra.mxu0 0
      %885 = vmatprep.mubr.bf16.mxu0 0
      %886 = vmatmul.mubr.bf16.gmra.mxu0 %v842
      %v887 = vpop.f32.mrf.mxu0
      %v888 = vadd.f32 0.0, %v887
      %v889 = vpop.f32.mrf.mxu0
      %v890 = vadd.f32 0.0, %v889
      %v891 = vpop.f32.mrf.mxu0
      %v892 = vpop.f32.mrf.mxu0
      %893 = vdwg.mxu0
      %894 = vmatprep.subr.bf16.mxu0 0
      %895 = vmatpush1.bf16.msra.mxu0 0
      %896 = vmatprep.subr.bf16.mxu0 0
      %897 = vmatpush1.bf16.msra.mxu0 0
      %898 = vmatprep.subr.bf16.mxu0 0
      %899 = vmatpush1.bf16.msra.mxu0 0
      %900 = vmatprep.subr.bf16.mxu0 0
      %901 = vmatpush1.bf16.msra.mxu0 0
      %902 = vmatprep.subr.bf16.mxu0 0
      %903 = vmatpush1.bf16.msra.mxu0 0
      %904 = vmatprep.subr.bf16.mxu0 0
      %905 = vmatpush1.bf16.msra.mxu0 0
      %906 = vmatprep.subr.bf16.mxu0 0
      %907 = vmatpush1.bf16.msra.mxu0 0
      %908 = vmatprep.subr.bf16.mxu0 0
      %909 = vmatpush1.bf16.msra.mxu0 %v851
      %910 = vmatprep.subr.bf16.mxu0 0
      %911 = vmatpush2.bf16.msra.mxu0 0
      %912 = vmatprep.subr.bf16.mxu0 0
      %913 = vmatpush2.bf16.msra.mxu0 0
      %914 = vmatprep.subr.bf16.mxu0 0
      %915 = vmatpush2.bf16.msra.mxu0 0
      %916 = vmatprep.subr.bf16.mxu0 0
      %917 = vmatpush2.bf16.msra.mxu0 0
      %918 = vmatprep.subr.bf16.mxu0 0
      %919 = vmatpush2.bf16.msra.mxu0 0
      %920 = vmatprep.subr.bf16.mxu0 0
      %921 = vmatpush2.bf16.msra.mxu0 0
      %922 = vmatprep.subr.bf16.mxu0 0
      %923 = vmatpush2.bf16.msra.mxu0 0
      %924 = vmatprep.subr.bf16.mxu0 0
      %925 = vmatpush2.bf16.msra.mxu0 0
      %926 = vmatprep.mubr.bf16.mxu0 0
      %927 = vmatmul.mubr.bf16.gmra.mxu0 %v842
      %v928 = vpop.f32.mrf.mxu0
      %v929 = vadd.f32 0.0, %v928
      %v930 = vpop.f32.mrf.mxu0
      %v931 = vpop.f32.mrf.mxu0
      %v932 = vpop.f32.mrf.mxu0
      %933 = vdwg.mxu0
      %v934 = vadd.f32 %v829, %v888
      %v935 = vadd.f32 %v830, %v890
      %v936 = vadd.f32 %v831, %v929
      %937 = vrot.lane.b32.xlu0 %v422, 108
      %v938 = vpop.permute.xlu0 %937
      %939 = vrot.lane.b32.xlu0 %v423, 108
      %v940 = vpop.permute.xlu0 %939
      %941 = vrot.lane.b32.xlu0 %v424, 108
      %v942 = vpop.permute.xlu0 %941
      %vm943 = vcmask 883712
      %v944 = vsel %vm943, %v938, %v940
      %v945 = vsel %vm943, %v940, %v942
      %v947 = vsel %vm434, %v335, 0
      %v950 = vsel %vm438, %v944, 0
      %v953 = vsel %vm438, %v945, 0
      %v956 = vsel %vm438, %v942, 0
      %958 = vmatprep.subr.bf16.mxu0 0
      %959 = vmatpush1.bf16.msra.mxu0 0
      %960 = vmatprep.subr.bf16.mxu0 0
      %961 = vmatpush1.bf16.msra.mxu0 0
      %962 = vmatprep.subr.bf16.mxu0 0
      %963 = vmatpush1.bf16.msra.mxu0 0
      %964 = vmatprep.subr.bf16.mxu0 0
      %965 = vmatpush1.bf16.msra.mxu0 0
      %966 = vmatprep.subr.bf16.mxu0 0
      %967 = vmatpush1.bf16.msra.mxu0 0
      %968 = vmatprep.subr.bf16.mxu0 0
      %969 = vmatpush1.bf16.msra.mxu0 0
      %970 = vmatprep.subr.bf16.mxu0 0
      %971 = vmatpush1.bf16.msra.mxu0 0
      %972 = vmatprep.subr.bf16.mxu0 %v953
      %973 = vmatpush1.bf16.msra.mxu0 %v950
      %974 = vmatprep.subr.bf16.mxu0 0
      %975 = vmatpush2.bf16.msra.mxu0 0
      %976 = vmatprep.subr.bf16.mxu0 0
      %977 = vmatpush2.bf16.msra.mxu0 0
      %978 = vmatprep.subr.bf16.mxu0 0
      %979 = vmatpush2.bf16.msra.mxu0 0
      %980 = vmatprep.subr.bf16.mxu0 0
      %981 = vmatpush2.bf16.msra.mxu0 0
      %982 = vmatprep.subr.bf16.mxu0 0
      %983 = vmatpush2.bf16.msra.mxu0 0
      %984 = vmatprep.subr.bf16.mxu0 0
      %985 = vmatpush2.bf16.msra.mxu0 0
      %986 = vmatprep.subr.bf16.mxu0 0
      %987 = vmatpush2.bf16.msra.mxu0 0
      %988 = vmatprep.subr.bf16.mxu0 0
      %989 = vmatpush2.bf16.msra.mxu0 0
      %990 = vmatprep.mubr.bf16.mxu0 0
      %991 = vmatmul.mubr.bf16.gmra.mxu0 %v947
      %v992 = vpop.f32.mrf.mxu0
      %v993 = vadd.f32 0.0, %v992
      %v994 = vpop.f32.mrf.mxu0
      %v995 = vadd.f32 0.0, %v994
      %v996 = vpop.f32.mrf.mxu0
      %v997 = vpop.f32.mrf.mxu0
      %998 = vdwg.mxu0
      %999 = vmatprep.subr.bf16.mxu0 0
      %1000 = vmatpush1.bf16.msra.mxu0 0
      %1001 = vmatprep.subr.bf16.mxu0 0
      %1002 = vmatpush1.bf16.msra.mxu0 0
      %1003 = vmatprep.subr.bf16.mxu0 0
      %1004 = vmatpush1.bf16.msra.mxu0 0
      %1005 = vmatprep.subr.bf16.mxu0 0
      %1006 = vmatpush1.bf16.msra.mxu0 0
      %1007 = vmatprep.subr.bf16.mxu0 0
      %1008 = vmatpush1.bf16.msra.mxu0 0
      %1009 = vmatprep.subr.bf16.mxu0 0
      %1010 = vmatpush1.bf16.msra.mxu0 0
      %1011 = vmatprep.subr.bf16.mxu0 0
      %1012 = vmatpush1.bf16.msra.mxu0 0
      %1013 = vmatprep.subr.bf16.mxu0 0
      %1014 = vmatpush1.bf16.msra.mxu0 %v956
      %1015 = vmatprep.subr.bf16.mxu0 0
      %1016 = vmatpush2.bf16.msra.mxu0 0
      %1017 = vmatprep.subr.bf16.mxu0 0
      %1018 = vmatpush2.bf16.msra.mxu0 0
      %1019 = vmatprep.subr.bf16.mxu0 0
      %1020 = vmatpush2.bf16.msra.mxu0 0
      %1021 = vmatprep.subr.bf16.mxu0 0
      %1022 = vmatpush2.bf16.msra.mxu0 0
      %1023 = vmatprep.subr.bf16.mxu0 0
      %1024 = vmatpush2.bf16.msra.mxu0 0
      %1025 = vmatprep.subr.bf16.mxu0 0
      %1026 = vmatpush2.bf16.msra.mxu0 0
      %1027 = vmatprep.subr.bf16.mxu0 0
      %1028 = vmatpush2.bf16.msra.mxu0 0
      %1029 = vmatprep.subr.bf16.mxu0 0
      %1030 = vmatpush2.bf16.msra.mxu0 0
      %1031 = vmatprep.mubr.bf16.mxu0 0
      %1032 = vmatmul.mubr.bf16.gmra.mxu0 %v947
      %v1033 = vpop.f32.mrf.mxu0
      %v1034 = vadd.f32 0.0, %v1033
      %v1035 = vpop.f32.mrf.mxu0
      %v1036 = vpop.f32.mrf.mxu0
      %v1037 = vpop.f32.mrf.mxu0
      %1038 = vdwg.mxu0
      %v1039 = vadd.f32 %v934, %v993
      %v1040 = vadd.f32 %v935, %v995
      %v1041 = vadd.f32 %v936, %v1034
      %1042 = vrot.lane.b32.xlu0 %v422, 92
      %v1043 = vpop.permute.xlu0 %1042
      %1044 = vrot.lane.b32.xlu0 %v423, 92
      %v1045 = vpop.permute.xlu0 %1044
      %1046 = vrot.lane.b32.xlu0 %v424, 92
      %v1047 = vpop.permute.xlu0 %1046
      %vm1048 = vcmask 752640
      %v1049 = vsel %vm1048, %v1043, %v1045
      %v1050 = vsel %vm1048, %v1045, %v1047
      %v1052 = vsel %vm434, %v336, 0
      %v1055 = vsel %vm438, %v1049, 0
      %v1058 = vsel %vm438, %v1050, 0
      %v1061 = vsel %vm438, %v1047, 0
      %1063 = vmatprep.subr.bf16.mxu0 0
      %1064 = vmatpush1.bf16.msra.mxu0 0
      %1065 = vmatprep.subr.bf16.mxu0 0
      %1066 = vmatpush1.bf16.msra.mxu0 0
      %1067 = vmatprep.subr.bf16.mxu0 0
      %1068 = vmatpush1.bf16.msra.mxu0 0
      %1069 = vmatprep.subr.bf16.mxu0 0
      %1070 = vmatpush1.bf16.msra.mxu0 0
      %1071 = vmatprep.subr.bf16.mxu0 0
      %1072 = vmatpush1.bf16.msra.mxu0 0
      %1073 = vmatprep.subr.bf16.mxu0 0
      %1074 = vmatpush1.bf16.msra.mxu0 0
      %1075 = vmatprep.subr.bf16.mxu0 0
      %1076 = vmatpush1.bf16.msra.mxu0 0
      %1077 = vmatprep.subr.bf16.mxu0 %v1058
      %1078 = vmatpush1.bf16.msra.mxu0 %v1055
      %1079 = vmatprep.subr.bf16.mxu0 0
      %1080 = vmatpush2.bf16.msra.mxu0 0
      %1081 = vmatprep.subr.bf16.mxu0 0
      %1082 = vmatpush2.bf16.msra.mxu0 0
      %1083 = vmatprep.subr.bf16.mxu0 0
      %1084 = vmatpush2.bf16.msra.mxu0 0
      %1085 = vmatprep.subr.bf16.mxu0 0
      %1086 = vmatpush2.bf16.msra.mxu0 0
      %1087 = vmatprep.subr.bf16.mxu0 0
      %1088 = vmatpush2.bf16.msra.mxu0 0
      %1089 = vmatprep.subr.bf16.mxu0 0
      %1090 = vmatpush2.bf16.msra.mxu0 0
      %1091 = vmatprep.subr.bf16.mxu0 0
      %1092 = vmatpush2.bf16.msra.mxu0 0
      %1093 = vmatprep.subr.bf16.mxu0 0
      %1094 = vmatpush2.bf16.msra.mxu0 0
      %1095 = vmatprep.mubr.bf16.mxu0 0
      %1096 = vmatmul.mubr.bf16.gmra.mxu0 %v1052
      %v1097 = vpop.f32.mrf.mxu0
      %v1098 = vadd.f32 0.0, %v1097
      %v1099 = vpop.f32.mrf.mxu0
      %v1100 = vadd.f32 0.0, %v1099
      %v1101 = vpop.f32.mrf.mxu0
      %v1102 = vpop.f32.mrf.mxu0
      %1103 = vdwg.mxu0
      %1104 = vmatprep.subr.bf16.mxu0 0
      %1105 = vmatpush1.bf16.msra.mxu0 0
      %1106 = vmatprep.subr.bf16.mxu0 0
      %1107 = vmatpush1.bf16.msra.mxu0 0
      %1108 = vmatprep.subr.bf16.mxu0 0
      %1109 = vmatpush1.bf16.msra.mxu0 0
      %1110 = vmatprep.subr.bf16.mxu0 0
      %1111 = vmatpush1.bf16.msra.mxu0 0
      %1112 = vmatprep.subr.bf16.mxu0 0
      %1113 = vmatpush1.bf16.msra.mxu0 0
      %1114 = vmatprep.subr.bf16.mxu0 0
      %1115 = vmatpush1.bf16.msra.mxu0 0
      %1116 = vmatprep.subr.bf16.mxu0 0
      %1117 = vmatpush1.bf16.msra.mxu0 0
      %1118 = vmatprep.subr.bf16.mxu0 0
      %1119 = vmatpush1.bf16.msra.mxu0 %v1061
      %1120 = vmatprep.subr.bf16.mxu0 0
      %1121 = vmatpush2.bf16.msra.mxu0 0
      %1122 = vmatprep.subr.bf16.mxu0 0
      %1123 = vmatpush2.bf16.msra.mxu0 0
      %1124 = vmatprep.subr.bf16.mxu0 0
      %1125 = vmatpush2.bf16.msra.mxu0 0
      %1126 = vmatprep.subr.bf16.mxu0 0
      %1127 = vmatpush2.bf16.msra.mxu0 0
      %1128 = vmatprep.subr.bf16.mxu0 0
      %1129 = vmatpush2.bf16.msra.mxu0 0
      %1130 = vmatprep.subr.bf16.mxu0 0
      %1131 = vmatpush2.bf16.msra.mxu0 0
      %1132 = vmatprep.subr.bf16.mxu0 0
      %1133 = vmatpush2.bf16.msra.mxu0 0
      %1134 = vmatprep.subr.bf16.mxu0 0
      %1135 = vmatpush2.bf16.msra.mxu0 0
      %1136 = vmatprep.mubr.bf16.mxu0 0
      %1137 = vmatmul.mubr.bf16.gmra.mxu0 %v1052
      %v1138 = vpop.f32.mrf.mxu0
      %v1139 = vadd.f32 0.0, %v1138
      %v1140 = vpop.f32.mrf.mxu0
      %v1141 = vpop.f32.mrf.mxu0
      %v1142 = vpop.f32.mrf.mxu0
      %1143 = vdwg.mxu0
      %v1144 = vadd.f32 %v1039, %v1098
      %v1145 = vadd.f32 %v1040, %v1100
      %v1146 = vadd.f32 %v1041, %v1139
      %1147 = vrot.lane.b32.xlu0 %v422, 91
      %v1148 = vpop.permute.xlu0 %1147
      %1149 = vrot.lane.b32.xlu0 %v423, 91
      %v1150 = vpop.permute.xlu0 %1149
      %1151 = vrot.lane.b32.xlu0 %v424, 91
      %v1152 = vpop.permute.xlu0 %1151
      %vm1153 = vcmask 744448
      %v1154 = vsel %vm1153, %v1148, %v1150
      %v1155 = vsel %vm1153, %v1150, %v1152
      %v1157 = vsel %vm434, %v337, 0
      %v1160 = vsel %vm438, %v1154, 0
      %v1163 = vsel %vm438, %v1155, 0
      %v1166 = vsel %vm438, %v1152, 0
      %1168 = vmatprep.subr.bf16.mxu0 0
      %1169 = vmatpush1.bf16.msra.mxu0 0
      %1170 = vmatprep.subr.bf16.mxu0 0
      %1171 = vmatpush1.bf16.msra.mxu0 0
      %1172 = vmatprep.subr.bf16.mxu0 0
      %1173 = vmatpush1.bf16.msra.mxu0 0
      %1174 = vmatprep.subr.bf16.mxu0 0
      %1175 = vmatpush1.bf16.msra.mxu0 0
      %1176 = vmatprep.subr.bf16.mxu0 0
      %1177 = vmatpush1.bf16.msra.mxu0 0
      %1178 = vmatprep.subr.bf16.mxu0 0
      %1179 = vmatpush1.bf16.msra.mxu0 0
      %1180 = vmatprep.subr.bf16.mxu0 0
      %1181 = vmatpush1.bf16.msra.mxu0 0
      %1182 = vmatprep.subr.bf16.mxu0 %v1163
      %1183 = vmatpush1.bf16.msra.mxu0 %v1160
      %1184 = vmatprep.subr.bf16.mxu0 0
      %1185 = vmatpush2.bf16.msra.mxu0 0
      %1186 = vmatprep.subr.bf16.mxu0 0
      %1187 = vmatpush2.bf16.msra.mxu0 0
      %1188 = vmatprep.subr.bf16.mxu0 0
      %1189 = vmatpush2.bf16.msra.mxu0 0
      %1190 = vmatprep.subr.bf16.mxu0 0
      %1191 = vmatpush2.bf16.msra.mxu0 0
      %1192 = vmatprep.subr.bf16.mxu0 0
      %1193 = vmatpush2.bf16.msra.mxu0 0
      %1194 = vmatprep.subr.bf16.mxu0 0
      %1195 = vmatpush2.bf16.msra.mxu0 0
      %1196 = vmatprep.subr.bf16.mxu0 0
      %1197 = vmatpush2.bf16.msra.mxu0 0
      %1198 = vmatprep.subr.bf16.mxu0 0
      %1199 = vmatpush2.bf16.msra.mxu0 0
      %1200 = vmatprep.mubr.bf16.mxu0 0
      %1201 = vmatmul.mubr.bf16.gmra.mxu0 %v1157
      %v1202 = vpop.f32.mrf.mxu0
      %v1203 = vadd.f32 0.0, %v1202
      %v1204 = vpop.f32.mrf.mxu0
      %v1205 = vadd.f32 0.0, %v1204
      %v1206 = vpop.f32.mrf.mxu0
      %v1207 = vpop.f32.mrf.mxu0
      %1208 = vdwg.mxu0
      %1209 = vmatprep.subr.bf16.mxu0 0
      %1210 = vmatpush1.bf16.msra.mxu0 0
      %1211 = vmatprep.subr.bf16.mxu0 0
      %1212 = vmatpush1.bf16.msra.mxu0 0
      %1213 = vmatprep.subr.bf16.mxu0 0
      %1214 = vmatpush1.bf16.msra.mxu0 0
      %1215 = vmatprep.subr.bf16.mxu0 0
      %1216 = vmatpush1.bf16.msra.mxu0 0
      %1217 = vmatprep.subr.bf16.mxu0 0
      %1218 = vmatpush1.bf16.msra.mxu0 0
      %1219 = vmatprep.subr.bf16.mxu0 0
      %1220 = vmatpush1.bf16.msra.mxu0 0
      %1221 = vmatprep.subr.bf16.mxu0 0
      %1222 = vmatpush1.bf16.msra.mxu0 0
      %1223 = vmatprep.subr.bf16.mxu0 0
      %1224 = vmatpush1.bf16.msra.mxu0 %v1166
      %1225 = vmatprep.subr.bf16.mxu0 0
      %1226 = vmatpush2.bf16.msra.mxu0 0
      %1227 = vmatprep.subr.bf16.mxu0 0
      %1228 = vmatpush2.bf16.msra.mxu0 0
      %1229 = vmatprep.subr.bf16.mxu0 0
      %1230 = vmatpush2.bf16.msra.mxu0 0
      %1231 = vmatprep.subr.bf16.mxu0 0
      %1232 = vmatpush2.bf16.msra.mxu0 0
      %1233 = vmatprep.subr.bf16.mxu0 0
      %1234 = vmatpush2.bf16.msra.mxu0 0
      %1235 = vmatprep.subr.bf16.mxu0 0
      %1236 = vmatpush2.bf16.msra.mxu0 0
      %1237 = vmatprep.subr.bf16.mxu0 0
      %1238 = vmatpush2.bf16.msra.mxu0 0
      %1239 = vmatprep.subr.bf16.mxu0 0
      %1240 = vmatpush2.bf16.msra.mxu0 0
      %1241 = vmatprep.mubr.bf16.mxu0 0
      %1242 = vmatmul.mubr.bf16.gmra.mxu0 %v1157
      %v1243 = vpop.f32.mrf.mxu0
      %v1244 = vadd.f32 0.0, %v1243
      %v1245 = vpop.f32.mrf.mxu0
      %v1246 = vpop.f32.mrf.mxu0
      %v1247 = vpop.f32.mrf.mxu0
      %1248 = vdwg.mxu0
      %v1249 = vadd.f32 %v1144, %v1203
      %v1250 = vadd.f32 %v1145, %v1205
      %v1251 = vadd.f32 %v1146, %v1244
      %1252 = vrot.lane.b32.xlu0 %v422, 90
      %v1253 = vpop.permute.xlu0 %1252
      %1254 = vrot.lane.b32.xlu0 %v423, 90
      %v1255 = vpop.permute.xlu0 %1254
      %1256 = vrot.lane.b32.xlu0 %v424, 90
      %v1257 = vpop.permute.xlu0 %1256
      %vm1258 = vcmask 736256
      %v1259 = vsel %vm1258, %v1253, %v1255
      %v1260 = vsel %vm1258, %v1255, %v1257
      %v1262 = vsel %vm434, %v338, 0
      %v1265 = vsel %vm438, %v1259, 0
      %v1268 = vsel %vm438, %v1260, 0
      %v1271 = vsel %vm438, %v1257, 0
      %1273 = vmatprep.subr.bf16.mxu0 0
      %1274 = vmatpush1.bf16.msra.mxu0 0
      %1275 = vmatprep.subr.bf16.mxu0 0
      %1276 = vmatpush1.bf16.msra.mxu0 0
      %1277 = vmatprep.subr.bf16.mxu0 0
      %1278 = vmatpush1.bf16.msra.mxu0 0
      %1279 = vmatprep.subr.bf16.mxu0 0
      %1280 = vmatpush1.bf16.msra.mxu0 0
      %1281 = vmatprep.subr.bf16.mxu0 0
      %1282 = vmatpush1.bf16.msra.mxu0 0
      %1283 = vmatprep.subr.bf16.mxu0 0
      %1284 = vmatpush1.bf16.msra.mxu0 0
      %1285 = vmatprep.subr.bf16.mxu0 0
      %1286 = vmatpush1.bf16.msra.mxu0 0
      %1287 = vmatprep.subr.bf16.mxu0 %v1268
      %1288 = vmatpush1.bf16.msra.mxu0 %v1265
      %1289 = vmatprep.subr.bf16.mxu0 0
      %1290 = vmatpush2.bf16.msra.mxu0 0
      %1291 = vmatprep.subr.bf16.mxu0 0
      %1292 = vmatpush2.bf16.msra.mxu0 0
      %1293 = vmatprep.subr.bf16.mxu0 0
      %1294 = vmatpush2.bf16.msra.mxu0 0
      %1295 = vmatprep.subr.bf16.mxu0 0
      %1296 = vmatpush2.bf16.msra.mxu0 0
      %1297 = vmatprep.subr.bf16.mxu0 0
      %1298 = vmatpush2.bf16.msra.mxu0 0
      %1299 = vmatprep.subr.bf16.mxu0 0
      %1300 = vmatpush2.bf16.msra.mxu0 0
      %1301 = vmatprep.subr.bf16.mxu0 0
      %1302 = vmatpush2.bf16.msra.mxu0 0
      %1303 = vmatprep.subr.bf16.mxu0 0
      %1304 = vmatpush2.bf16.msra.mxu0 0
      %1305 = vmatprep.mubr.bf16.mxu0 0
      %1306 = vmatmul.mubr.bf16.gmra.mxu0 %v1262
      %v1307 = vpop.f32.mrf.mxu0
      %v1308 = vadd.f32 0.0, %v1307
      %v1309 = vpop.f32.mrf.mxu0
      %v1310 = vadd.f32 0.0, %v1309
      %v1311 = vpop.f32.mrf.mxu0
      %v1312 = vpop.f32.mrf.mxu0
      %1313 = vdwg.mxu0
      %1314 = vmatprep.subr.bf16.mxu0 0
      %1315 = vmatpush1.bf16.msra.mxu0 0
      %1316 = vmatprep.subr.bf16.mxu0 0
      %1317 = vmatpush1.bf16.msra.mxu0 0
      %1318 = vmatprep.subr.bf16.mxu0 0
      %1319 = vmatpush1.bf16.msra.mxu0 0
      %1320 = vmatprep.subr.bf16.mxu0 0
      %1321 = vmatpush1.bf16.msra.mxu0 0
      %1322 = vmatprep.subr.bf16.mxu0 0
      %1323 = vmatpush1.bf16.msra.mxu0 0
      %1324 = vmatprep.subr.bf16.mxu0 0
      %1325 = vmatpush1.bf16.msra.mxu0 0
      %1326 = vmatprep.subr.bf16.mxu0 0
      %1327 = vmatpush1.bf16.msra.mxu0 0
      %1328 = vmatprep.subr.bf16.mxu0 0
      %1329 = vmatpush1.bf16.msra.mxu0 %v1271
      %1330 = vmatprep.subr.bf16.mxu0 0
      %1331 = vmatpush2.bf16.msra.mxu0 0
      %1332 = vmatprep.subr.bf16.mxu0 0
      %1333 = vmatpush2.bf16.msra.mxu0 0
      %1334 = vmatprep.subr.bf16.mxu0 0
      %1335 = vmatpush2.bf16.msra.mxu0 0
      %1336 = vmatprep.subr.bf16.mxu0 0
      %1337 = vmatpush2.bf16.msra.mxu0 0
      %1338 = vmatprep.subr.bf16.mxu0 0
      %1339 = vmatpush2.bf16.msra.mxu0 0
      %1340 = vmatprep.subr.bf16.mxu0 0
      %1341 = vmatpush2.bf16.msra.mxu0 0
      %1342 = vmatprep.subr.bf16.mxu0 0
      %1343 = vmatpush2.bf16.msra.mxu0 0
      %1344 = vmatprep.subr.bf16.mxu0 0
      %1345 = vmatpush2.bf16.msra.mxu0 0
      %1346 = vmatprep.mubr.bf16.mxu0 0
      %1347 = vmatmul.mubr.bf16.gmra.mxu0 %v1262
      %v1348 = vpop.f32.mrf.mxu0
      %v1349 = vadd.f32 0.0, %v1348
      %v1350 = vpop.f32.mrf.mxu0
      %v1351 = vpop.f32.mrf.mxu0
      %v1352 = vpop.f32.mrf.mxu0
      %1353 = vdwg.mxu0
      %v1354 = vadd.f32 %v1249, %v1308
      %v1355 = vadd.f32 %v1250, %v1310
      %v1356 = vadd.f32 %v1251, %v1349
      %v1357 = vpack.c.bf16 %v1354, %v1354
      %v1358 = vpack.c.bf16 %v1355, %v1355
      %v1359 = vpack.c.bf16 %v1356, %v1356
      %v1363 = vunpack.c.l.b16 %v1357
      %v1364 = vunpack.c.l.b16 %v1358
      %v1365 = vunpack.c.l.b16 %v1359
      %v1366 = vpack.c.b16 %v1364, %v1363
      %v1367 = vpack.c.b16 %v1365, %v1365
      %1370 = vst [vmem:[%s291] sm:$0xff] %v1366
      %vm1371 = vcmask 257024
      %1372 = vst.msk [vmem:[%s291 + $0x8] sm:$0xf] %vm1371, %v1367
      %v1373 = vld [vmem:[%s4] sm:$0x7]
      %v1375 = vlaneseq
      %v1376 = vshrl.u32 %v1375, 7
      %v1377 = vsub.s32 0, %v1376
      %v1378 = vrot.slane %v1373, %v1377
      %v1379 = vlaneseq
      %v1380 = vshrl.u32 %v1379, 7
      %v1381 = vsub.s32 1, %v1380
      %v1382 = vrot.slane %v1373, %v1381
      %v1383 = vlaneseq
      %v1384 = vshrl.u32 %v1383, 7
      %v1385 = vsub.s32 2, %v1384
      %v1386 = vrot.slane %v1373, %v1385
      %v1390 = vmul.f32 %v1354, %v1378
      %v1391 = vmul.f32 %v1355, %v1382
      %v1392 = vmul.f32 %v1356, %v1386
      %v1393 = vadd.f32 %v1390, %v1391
      %vm1394 = vcmask 261120
      %v1395 = vsel %vm1394, %v1392, 0.0
      %v1396 = vadd.f32 %v1393, %v1395
      %1397 = vadd.xlane.f32.xlu0 %v1396
      %v1398 = vpop.xlane.xlu0 %1397
      %v1399 = vmul.f32 %v1354, %v1354
      %v1400 = vmul.f32 %v1355, %v1355
      %v1401 = vmul.f32 %v1356, %v1356
      %v1402 = vmul.f32 %v1399, %v1378
      %v1403 = vmul.f32 %v1400, %v1382
      %v1404 = vmul.f32 %v1401, %v1386
      %v1405 = vadd.f32 %v1402, %v1403
      %v1406 = vsel %vm1394, %v1404, 0.0
      %v1407 = vadd.f32 %v1405, %v1406
      %1408 = vadd.xlane.f32.xlu0 %v1407
      %v1409 = vpop.xlane.xlu0 %1408
      %vm1410 = vcmask 7168
      %1411 = vst.msk [vmem:[%s295] sm:$0xff] %vm1410, %v1398
      %1412 = vst.msk [vmem:[%s299] sm:$0xff] %vm1410, %v1409
      %p1413 = scmp.lt.s32.totalorder %s19, 1
      %s1414 = scalar_select %p1413, %s19, 1
      %s1415 = smul.addr %s1414, 3
      %s1416 = smul.addr %s1415, 4
      %s1417 = scalar_lea.vmem %s5, %s1416
      %p1418 = scmp.lt.s32.totalorder %s19, 1
      %s1419 = scalar_select %p1418, %s19, 1
      %s1420 = smul.addr %s1419, 8
      %s1421 = scalar_lea.vmem %s6, %s1420
      %p1422 = scmp.lt.s32.totalorder %s19, 1
      %s1423 = scalar_select %p1422, %s19, 1
      %s1424 = smul.addr %s1423, 8
      %s1425 = scalar_lea.vmem %s7, %s1424
      // Predicated region
      $region41: #{conv_block_forward.4} parent=39 // pred_check
        %p1426 = pneg %p147
      $region42: #{conv_block_forward.4} parent=39 // pred_check_branch
        %1428 = sbr.rel (%p1426) target = $region44
      $region43: #{conv_block_forward.4} parent=39 // pred_region
        _
      $region44: #{conv_block_forward.4} parent=39 // pred_fallthru
        _
      // Predicated region
      $region45: #{conv_block_forward.4} parent=39 // pred_check
        %p1429 = pneg %p173
      $region46: #{conv_block_forward.4} parent=39 // pred_check_branch
        %1431 = sbr.rel (%p1429) target = $region48
      $region47: #{conv_block_forward.4} parent=39 // pred_region
        _
      $region48: #{conv_block_forward.4} parent=39 // pred_fallthru
        _
      // Predicated region
      $region49: #{conv_block_forward.4} parent=39 // pred_check
        %p1432 = pneg %p199
      $region50: #{conv_block_forward.4} parent=39 // pred_check_branch
        %1434 = sbr.rel (%p1432) target = $region52
      $region51: #{conv_block_forward.4} parent=39 // pred_region
        _
      $region52: #{conv_block_forward.4} parent=39 // pred_fallthru
        _
    $region40: #{conv_block_forward.4} parent=5 // pred_fallthru
      _
    %p1435 = scmp.le.s32.totalorder 2, %s14
    // Predicated region
    $region53: #{conv_block_forward.4} parent=5 // pred_check
      %p1436 = pneg %p1435
    $region54: #{conv_block_forward.4} parent=5 // pred_check_branch
      %1438 = sbr.rel (%p1436) target = $region56
    $region55: #{conv_block_forward.4} parent=5 // pred_region
      %s1439 = ssub.s32 %s14, 2
      // Predicated region
      $region57: #{conv_block_forward.4} parent=55 // pred_check
        %p1440 = pneg %p153
      $region58: #{conv_block_forward.4} parent=55 // pred_check_branch
        %1442 = sbr.rel (%p1440) target = $region60
      $region59: #{conv_block_forward.4} parent=55 // pred_region
        %p1443 = scmp.lt.s32.totalorder %s20, 1
        %s1444 = scalar_select %p1443, %s20, 1
        %s1445 = smul.addr %s1444, 3
        %s1446 = smul.addr %s1445, 4
        %s1447 = scalar_lea.vmem %s5, %s1446
      $region60: #{conv_block_forward.4} parent=55 // pred_fallthru
        _
      // Predicated region
      $region61: #{conv_block_forward.4} parent=55 // pred_check
        %p1448 = pneg %p179
      $region62: #{conv_block_forward.4} parent=55 // pred_check_branch
        %1450 = sbr.rel (%p1448) target = $region64
      $region63: #{conv_block_forward.4} parent=55 // pred_region
        %p1451 = scmp.lt.s32.totalorder %s20, 1
        %s1452 = scalar_select %p1451, %s20, 1
        %s1453 = smul.addr %s1452, 8
        %s1454 = scalar_lea.vmem %s6, %s1453
      $region64: #{conv_block_forward.4} parent=55 // pred_fallthru
        _
      // Predicated region
      $region65: #{conv_block_forward.4} parent=55 // pred_check
        %p1455 = pneg %p205
      $region66: #{conv_block_forward.4} parent=55 // pred_check_branch
        %1457 = sbr.rel (%p1455) target = $region68
      $region67: #{conv_block_forward.4} parent=55 // pred_region
        %p1458 = scmp.lt.s32.totalorder %s20, 1
        %s1459 = scalar_select %p1458, %s20, 1
        %s1460 = smul.addr %s1459, 8
        %s1461 = scalar_lea.vmem %s7, %s1460
      $region68: #{conv_block_forward.4} parent=55 // pred_fallthru
        _
    $region56: #{conv_block_forward.4} parent=5 // pred_fallthru
      _
  $region6: #{conv_block_forward.4} parent=0 // loop_footer
    %s18 = sadd.s32 1, %s14
  $region7: #{conv_block_forward.4} parent=0 // loop_footer_branch
    %13 = sbr.rel target = $region3
  $region8: #{conv_block_forward.4} parent=0 // loop_exit
    _

// kernel: conv_block_forward.3
$region0: #{conv_block_forward.3}
  #allocation0 [shape = 'u32[]', space=smem, size = 0x4, offset = 0x4, fixed_abs, tag = 'smem constant byte address 0x4 - core index']
  #allocation1 [shape = 'u32[144,128]{1,0:T(1,128)}', space=vmem, size = 0x12000, scoped, tag = 'internal scratch']
  #allocation2 [shape = 'bf16[4,326]{1,0:T(4,128)(2,1)}', space=vmem, size = 0xc00, scoped, tag = 'scratch operand']
  %s0 = inlined_call_operand.vmem [shape: f32[2,4,256], index: 0, kind: input, shape index: {}]
  %s1 = inlined_call_operand.vmem [shape: bf16[9,8,4], index: 1, kind: input, shape index: {}]
  %s2 = inlined_call_operand.vmem [shape: f32[1,288], index: 2, kind: input, shape index: {}]
  %s3 = inlined_call_operand.vmem [shape: bf16[2,8,288], index: 3, kind: output, shape index: {0}]
  %s4 = inlined_call_operand.vmem [shape: f32[2,8,1], index: 4, kind: output, shape index: {1}]
  %s5 = inlined_call_operand.vmem [shape: f32[2,8,1], index: 5, kind: output, shape index: {2}]
  %6 = xla_tuple %s3, %s4, %s5
  %s7 = sld [smem:[#allocation0]]
  $region61: #{conv_block_forward.3} parent=0
    _
  %s9 = ssub.s32 1, %s7
  %s10 = scalar_select 0, %s9, %s7
  loop: start=0, step=1, limit=4
  $region2: #{conv_block_forward.3} parent=0 // loop_pre_header
    _
  $region3: #{conv_block_forward.3} parent=0 // loop_header
    %s12 = sphi 0, %s16
    %p13 = scmp.ge.s32.totalorder %s12, 4
    %s22 = sphi 0, %s24
    %s25 = sphi 0, %s22
    %s26 = sphi 0, %s25
    %s42 = sphi 0, %s26
    %s46 = sphi 0, %s46
    %s48 = sphi 0, %s46
    %s49 = sphi 0, %s48
    %s63 = sphi 0, %s49
    %s67 = sphi 0, %s67
    %s69 = sphi 0, %s67
    %s70 = sphi 0, %s69
    %s84 = sphi 0, %s70
    %s90 = sphi 0, %s92
    %s93 = sphi 0, %s90
    %s94 = sphi 0, %s93
    %s110 = sphi 0, %s94
    %s116 = sphi 0, %s118
    %s119 = sphi 0, %s116
    %s120 = sphi 0, %s119
    %s136 = sphi 0, %s120
    %s142 = sphi 0, %s144
    %s145 = sphi 0, %s142
    %s146 = sphi 0, %s145
    %s162 = sphi 0, %s146
  $region4: #{conv_block_forward.3} parent=0 // loop_header_branch
    %15 = sbr.rel (%p13) target = $region8
  $region5: #{conv_block_forward.3} parent=0 // loop_body
    %s17 = ssub.s32 %s12, 1
    %s18 = ssub.s32 %s12, 2
    %s19 = sadd.s32 %s12, 1
    %s20 = ssub.s32 %s12, %s19
    %p21 = scmp.eq.s32.totalorder %s20, 0
    %s23 = sadd.s32 %s22, 1
    %s24 = scalar_select %p21, %s22, %s23
    %p27 = pneg %p21
    %p28 = scmp.eq.s32.totalorder %s12, 1
    %p29 = por %p27, %p28
    %p30 = scmp.ne.s32.totalorder %s22, %s25
    %p31 = scmp.eq.s32.totalorder %s12, 0
    %p32 = por %p30, %p31
    %p33 = scmp.ne.s32.totalorder %s22, %s25
    %p34 = scmp.eq.s32.totalorder %s17, 1
    %p35 = por %p33, %p34
    %p36 = scmp.ne.s32.totalorder %s25, %s26
    %p37 = scmp.eq.s32.totalorder %s17, 0
    %p38 = por %p36, %p37
    %p39 = scmp.ne.s32.totalorder %s25, %s26
    %p40 = scmp.eq.s32.totalorder %s18, 1
    %p41 = por %p39, %p40
    %p43 = scmp.ne.s32.totalorder %s26, %s42
    %p44 = scmp.eq.s32.totalorder %s18, 0
    %p45 = por %p43, %p44
    %s47 = sadd.s32 %s46, 1
    %p50 = scmp.eq.s32.totalorder %s12, 1
    %p51 = scmp.ne.s32.totalorder %s46, %s48
    %p52 = scmp.eq.s32.totalorder %s12, 0
    %p53 = por %p51, %p52
    %p54 = scmp.ne.s32.totalorder %s46, %s48
    %p55 = scmp.eq.s32.totalorder %s17, 1
    %p56 = por %p54, %p55
    %p57 = scmp.ne.s32.totalorder %s48, %s49
    %p58 = scmp.eq.s32.totalorder %s17, 0
    %p59 = por %p57, %p58
    %p60 = scmp.ne.s32.totalorder %s48, %s49
    %p61 = scmp.eq.s32.totalorder %s18, 1
    %p62 = por %p60, %p61
    %p64 = scmp.ne.s32.totalorder %s49, %s63
    %p65 = scmp.eq.s32.totalorder %s18, 0
    %p66 = por %p64, %p65
    %s68 = sadd.s32 %s67, 1
    %p71 = scmp.eq.s32.totalorder %s12, 1
    %p72 = scmp.ne.s32.totalorder %s67, %s69
    %p73 = scmp.eq.s32.totalorder %s12, 0
    %p74 = por %p72, %p73
    %p75 = scmp.ne.s32.totalorder %s67, %s69
    %p76 = scmp.eq.s32.totalorder %s17, 1
    %p77 = por %p75, %p76
    %p78 = scmp.ne.s32.totalorder %s69, %s70
    %p79 = scmp.eq.s32.totalorder %s17, 0
    %p80 = por %p78, %p79
    %p81 = scmp.ne.s32.totalorder %s69, %s70
    %p82 = scmp.eq.s32.totalorder %s18, 1
    %p83 = por %p81, %p82
    %p85 = scmp.ne.s32.totalorder %s70, %s84
    %p86 = scmp.eq.s32.totalorder %s18, 0
    %p87 = por %p85, %p86
    %s88 = ssub.s32 %s12, %s19
    %p89 = scmp.eq.s32.totalorder %s88, 0
    %s91 = sadd.s32 %s90, 1
    %s92 = scalar_select %p89, %s90, %s91
    %p95 = pneg %p89
    %p96 = scmp.eq.s32.totalorder %s12, 1
    %p97 = por %p95, %p96
    %p98 = scmp.ne.s32.totalorder %s90, %s93
    %p99 = scmp.eq.s32.totalorder %s12, 0
    %p100 = por %p98, %p99
    %p101 = scmp.ne.s32.totalorder %s90, %s93
    %p102 = scmp.eq.s32.totalorder %s17, 1
    %p103 = por %p101, %p102
    %p104 = scmp.ne.s32.totalorder %s93, %s94
    %p105 = scmp.eq.s32.totalorder %s17, 0
    %p106 = por %p104, %p105
    %p107 = scmp.ne.s32.totalorder %s93, %s94
    %p108 = scmp.eq.s32.totalorder %s18, 1
    %p109 = por %p107, %p108
    %p111 = scmp.ne.s32.totalorder %s94, %s110
    %p112 = scmp.eq.s32.totalorder %s18, 0
    %p113 = por %p111, %p112
    %s114 = ssub.s32 %s12, %s19
    %p115 = scmp.eq.s32.totalorder %s114, 0
    %s117 = sadd.s32 %s116, 1
    %s118 = scalar_select %p115, %s116, %s117
    %p121 = pneg %p115
    %p122 = scmp.eq.s32.totalorder %s12, 1
    %p123 = por %p121, %p122
    %p124 = scmp.ne.s32.totalorder %s116, %s119
    %p125 = scmp.eq.s32.totalorder %s12, 0
    %p126 = por %p124, %p125
    %p127 = scmp.ne.s32.totalorder %s116, %s119
    %p128 = scmp.eq.s32.totalorder %s17, 1
    %p129 = por %p127, %p128
    %p130 = scmp.ne.s32.totalorder %s119, %s120
    %p131 = scmp.eq.s32.totalorder %s17, 0
    %p132 = por %p130, %p131
    %p133 = scmp.ne.s32.totalorder %s119, %s120
    %p134 = scmp.eq.s32.totalorder %s18, 1
    %p135 = por %p133, %p134
    %p137 = scmp.ne.s32.totalorder %s120, %s136
    %p138 = scmp.eq.s32.totalorder %s18, 0
    %p139 = por %p137, %p138
    %s140 = ssub.s32 %s12, %s19
    %p141 = scmp.eq.s32.totalorder %s140, 0
    %s143 = sadd.s32 %s142, 1
    %s144 = scalar_select %p141, %s142, %s143
    %p147 = pneg %p141
    %p148 = scmp.eq.s32.totalorder %s12, 1
    %p149 = por %p147, %p148
    %p150 = scmp.ne.s32.totalorder %s142, %s145
    %p151 = scmp.eq.s32.totalorder %s12, 0
    %p152 = por %p150, %p151
    %p153 = scmp.ne.s32.totalorder %s142, %s145
    %p154 = scmp.eq.s32.totalorder %s17, 1
    %p155 = por %p153, %p154
    %p156 = scmp.ne.s32.totalorder %s145, %s146
    %p157 = scmp.eq.s32.totalorder %s17, 0
    %p158 = por %p156, %p157
    %p159 = scmp.ne.s32.totalorder %s145, %s146
    %p160 = scmp.eq.s32.totalorder %s18, 1
    %p161 = por %p159, %p160
    %p163 = scmp.ne.s32.totalorder %s146, %s162
    %p164 = scmp.eq.s32.totalorder %s18, 0
    %p165 = por %p163, %p164
    %p166 = scmp.le.s32.totalorder 1, %s12
    %p167 = scmp.lt.s32.totalorder %s12, 3
    %p168 = pnand %p166, %p167
    %p169 = pneg %p168
    // Predicated region
    $region9: #{conv_block_forward.3} parent=5 // pred_check
      _
    $region10: #{conv_block_forward.3} parent=5 // pred_check_branch
      %171 = sbr.rel (%p168) target = $region12
    $region11: #{conv_block_forward.3} parent=5 // pred_region
      %s172 = ssub.s32 %s12, 1
      // Predicated region
      $region13: #{conv_block_forward.3} parent=11 // pred_check
        %p173 = pneg %p59
      $region14: #{conv_block_forward.3} parent=11 // pred_check_branch
        %175 = sbr.rel (%p173) target = $region16
      $region15: #{conv_block_forward.3} parent=11 // pred_region
        _
      $region16: #{conv_block_forward.3} parent=11 // pred_fallthru
        _
      // Predicated region
      $region17: #{conv_block_forward.3} parent=11 // pred_check
        %p176 = pneg %p80
      $region18: #{conv_block_forward.3} parent=11 // pred_check_branch
        %178 = sbr.rel (%p176) target = $region20
      $region19: #{conv_block_forward.3} parent=11 // pred_region
        _
      $region20: #{conv_block_forward.3} parent=11 // pred_fallthru
        _
    $region12: #{conv_block_forward.3} parent=5 // pred_fallthru
      _
    %p179 = scmp.lt.s32.totalorder %s12, 2
    // Predicated region
    $region21: #{conv_block_forward.3} parent=5 // pred_check
      %p180 = pneg %p179
    $region22: #{conv_block_forward.3} parent=5 // pred_check_branch
      %182 = sbr.rel (%p180) target = $region24
    $region23: #{conv_block_forward.3} parent=5 // pred_region
      // Predicated region
      $region25: #{conv_block_forward.3} parent=23 // pred_check
        %p183 = pneg %p32
      $region26: #{conv_block_forward.3} parent=23 // pred_check_branch
        %185 = sbr.rel (%p183) target = $region28
      $region27: #{conv_block_forward.3} parent=23 // pred_region
        %p186 = scmp.lt.s32.totalorder %s12, 1
        %s187 = scalar_select %p186, %s12, 1
        %s188 = smul.addr %s187, 2
        %s189 = smul.addr %s188, 4
        %s190 = scalar_lea.vmem %s0, %s189
      $region28: #{conv_block_forward.3} parent=23 // pred_fallthru
        _
    $region24: #{conv_block_forward.3} parent=5 // pred_fallthru
      _
    %p191 = scmp.le.s32.totalorder 1, %s12
    %p192 = scmp.lt.s32.totalorder %s12, 3
    %p193 = pnand %p191, %p192
    %p194 = pneg %p193
    // Predicated region
    $region29: #{conv_block_forward.3} parent=5 // pred_check
      _
    $region30: #{conv_block_forward.3} parent=5 // pred_check_branch
      %196 = sbr.rel (%p193) target = $region32
    $region31: #{conv_block_forward.3} parent=5 // pred_region
      %s197 = ssub.s32 %s12, 1
      %p198 = scmp.lt.s32.totalorder %s17, 1
      %s199 = scalar_select %p198, %s17, 1
      %s200 = smul.addr %s199, 2
      %s201 = smul.addr %s200, 4
      %s202 = scalar_lea.vmem %s0, %s201
      %p203 = pneg %p38
      %p204 = pneg %p35
      %p205 = pneg %p59
      %p206 = pneg %p56
      %p207 = pneg %p80
      %p208 = pneg %p77
      %p209 = pneg %p106
      %p210 = pneg %p103
      %p211 = scmp.lt.s32.totalorder %s17, 1
      %s212 = scalar_select %p211, %s17, 1
      %s213 = smul.addr %s212, 3
      %s214 = smul.addr %s213, 4
      %s215 = scalar_lea.vmem %s3, %s214
      %p216 = pneg %p132
      %p217 = pneg %p129
      %p218 = scmp.lt.s32.totalorder %s17, 1
      %s219 = scalar_select %p218, %s17, 1
      %s220 = smul.addr %s219, 8
      %s221 = scalar_lea.vmem %s4, %s220
      %p222 = pneg %p158
      %p223 = pneg %p155
      %p224 = scmp.lt.s32.totalorder %s17, 1
      %s225 = scalar_select %p224, %s17, 1
      %s226 = smul.addr %s225, 8
      %s227 = scalar_lea.vmem %s5, %s226
      %p228 = scmp.lt.s32.totalorder %s17, 1
      %s229 = scalar_select %p228, %s17, 1
      %s230 = smul.addr %s229, 2
      %s231 = smul.addr %s230, 4
      %s232 = scalar_lea.vmem %s0, %s231
      %p233 = scmp.lt.s32.totalorder %s17, 1
      %s234 = scalar_select %p233, %s17, 1
      %s235 = smul.addr %s234, 3
      %s236 = smul.addr %s235, 4
      %s237 = scalar_lea.vmem %s3, %s236
      %p238 = scmp.lt.s32.totalorder %s17, 1
      %s239 = scalar_select %p238, %s17, 1
      %s240 = smul.addr %s239, 8
      %s241 = scalar_lea.vmem %s4, %s240
      %p242 = scmp.lt.s32.totalorder %s17, 1
      %s243 = scalar_select %p242, %s17, 1
      %s244 = smul.addr %s243, 8
      %s245 = scalar_lea.vmem %s5, %s244
      %v247 = vld [vmem:[%s232] sm:$0xff]
      %v249 = vcombine.high %v247, %v247
      %v251 = vpack.c.bf16 %v247, %v247
      %v252 = vpack.c.bf16 %v249, %v249
      %v253 = vld [vmem:[%s1] sm:$0xf]
      %v254 = vld [vmem:[%s1 + $0x4] sm:$0xf]
      %v255 = vld [vmem:[%s1 + $0x8] sm:$0xf]
      %v256 = vld [vmem:[%s1 + $0xc] sm:$0xf]
      %v257 = vld [vmem:[%s1 + $0x10] sm:$0xf]
      %v258 = vld [vmem:[%s1 + $0x14] sm:$0xf]
      %v259 = vld [vmem:[%s1 + $0x18] sm:$0xf]
      %v260 = vld [vmem:[%s1 + $0x1c] sm:$0xf]
      %v261 = vld [vmem:[%s1 + $0x20] sm:$0xf]
      %vm262 = vcmask 1041408
      %vm263 = vcmask 1043458
      %vm264 = vmor %vm263, %vm262
      %vm265 = vcmask 570372
      %vm266 = vmor %vm265, %vm264
      %267 = vst.msk [vmem:[#allocation2] sm:$0x3f] %vm266, 0
      %v270 = vunpack.c.l.s4 1983009808
      %v271 = vunpack.c.0.s8 %v270
      %v272 = vlaneseq
      %v273 = vshrl.u32 %v272, 7
      %v274 = vsub.s32 %v271, %v273
      %v275 = vrot.slane %v251, %v274
      %276 = vrot.lane.b32.xlu0 %v275, 19
      %v277 = vpop.permute.xlu0 %276
      %vm279 = vcmask 279704
      %280 = vst.msk [vmem:[#allocation2] sm:$0x3] %vm279, %v277
      %281 = vrot.lane.b32.xlu0 %v275, 21
      %v282 = vpop.permute.xlu0 %281
      %vm284 = vcmask 427304
      %285 = vst.msk [vmem:[#allocation2] sm:$0x3] %vm284, %v282
      %286 = vrot.lane.b32.xlu0 %v275, 23
      %v287 = vpop.permute.xlu0 %286
      %vm289 = vcmask 574904
      %290 = vst.msk [vmem:[#allocation2] sm:$0x3] %vm289, %v287
      %291 = vrot.lane.b32.xlu0 %v275, 25
      %v292 = vpop.permute.xlu0 %291
      %vm294 = vcmask 722504
      %295 = vst.msk [vmem:[#allocation2] sm:$0x3] %vm294, %v292
      %296 = vrot.lane.b32.xlu0 %v275, 27
      %v297 = vpop.permute.xlu0 %296
      %vm299 = vcmask 870104
      %300 = vst.msk [vmem:[#allocation2] sm:$0x3] %vm299, %v297
      %301 = vrot.lane.b32.xlu0 %v275, 29
      %v302 = vpop.permute.xlu0 %301
      %vm304 = vcmask 1017704
      %305 = vst.msk [vmem:[#allocation2] sm:$0x3] %vm304, %v302
      %306 = vrot.lane.b32.xlu0 %v275, 31
      %v307 = vpop.permute.xlu0 %306
      %v308 = vrot.slane %v307, 6
      %vm309 = vcmask 252928
      %v310 = vsel %vm309, %v308, %v307
      %vm312 = vcmask 1042424
      %vm313 = vcmask 117762
      %vm314 = vmor %vm313, %vm312
      %315 = vst.msk [vmem:[#allocation2] sm:$0xf] %vm314, %v310
      %316 = vrot.lane.b32.xlu0 %v275, 33
      %v317 = vpop.permute.xlu0 %316
      %vm319 = vcmask 263304
      %320 = vst.msk [vmem:[#allocation2 + $0x2] sm:$0x3] %vm319, %v317
      %v323 = vunpack.c.l.s4 1983009808
      %v324 = vunpack.c.0.s8 %v323
      %v325 = vlaneseq
      %v326 = vshrl.u32 %v325, 7
      %v327 = vsub.s32 %v324, %v326
      %v328 = vrot.slane %v252, %v327
      %329 = vrot.lane.b32.xlu0 %v328, 35
      %v330 = vpop.permute.xlu0 %329
      %vm332 = vcmask 410904
      %333 = vst.msk [vmem:[#allocation2 + $0x2] sm:$0x3] %vm332, %v330
      %334 = vrot.lane.b32.xlu0 %v328, 37
      %v335 = vpop.permute.xlu0 %334
      %vm337 = vcmask 558504
      %338 = vst.msk [vmem:[#allocation2 + $0x2] sm:$0x3] %vm337, %v335
      %339 = vrot.lane.b32.xlu0 %v328, 39
      %v340 = vpop.permute.xlu0 %339
      %vm342 = vcmask 706104
      %343 = vst.msk [vmem:[#allocation2 + $0x2] sm:$0x3] %vm342, %v340
      %344 = vrot.lane.b32.xlu0 %v328, 41
      %v345 = vpop.permute.xlu0 %344
      %vm347 = vcmask 853704
      %348 = vst.msk [vmem:[#allocation2 + $0x2] sm:$0x3] %vm347, %v345
      %349 = vrot.lane.b32.xlu0 %v328, 43
      %v350 = vpop.permute.xlu0 %349
      %vm352 = vcmask 1001304
      %353 = vst.msk [vmem:[#allocation2 + $0x2] sm:$0x3] %vm352, %v350
      %354 = vrot.lane.b32.xlu0 %v328, 45
      %v355 = vpop.permute.xlu0 %354
      %v356 = vrot.slane %v355, 6
      %vm357 = vcmask 367616
      %v358 = vsel %vm357, %v356, %v355
      %vm360 = vcmask 1042408
      %vm361 = vcmask 101378
      %vm362 = vmor %vm361, %vm360
      %363 = vst.msk [vmem:[#allocation2 + $0x2] sm:$0xf] %vm362, %v358
      %364 = vrot.lane.b32.xlu0 %v328, 47
      %v365 = vpop.permute.xlu0 %364
      %vm367 = vcmask 246904
      %368 = vst.msk [vmem:[#allocation2 + $0x4] sm:$0x3] %vm367, %v365
      %369 = vrot.lane.b32.xlu0 %v328, 49
      %v370 = vpop.permute.xlu0 %369
      %vm372 = vcmask 394504
      %373 = vst.msk [vmem:[#allocation2 + $0x4] sm:$0x3] %vm372, %v370
      %v374 = vld [vmem:[#allocation2] sm:$0x3f]
      %v376 = vcombine.high %v374, %v374
      %v378 = vunpack.c.l.s4 1983009808
      %v379 = vunpack.c.0.s8 %v378
      %v380 = vlaneseq
      %v381 = vshrl.u32 %v380, 7
      %v382 = vsub.s32 %v379, %v381
      %v383 = vrot.slane %v374, %v382
      %v385 = vunpack.c.l.s4 1983009808
      %v386 = vunpack.c.0.s8 %v385
      %v387 = vlaneseq
      %v388 = vshrl.u32 %v387, 7
      %v389 = vsub.s32 %v386, %v388
      %v390 = vrot.slane %v376, %v389
      %v391 = vcombine.high %v383, %v383
      %392 = vrot.lane.b32.xlu0 %v383, 127
      %v393 = vpop.permute.xlu0 %392
      %394 = vrot.lane.b32.xlu0 %v391, 127
      %v395 = vpop.permute.xlu0 %394
      %396 = vrot.lane.b32.xlu0 %v390, 127
      %v397 = vpop.permute.xlu0 %396
      %vm398 = vcmask 1039360
      %v399 = vsel %vm398, %v393, %v395
      %v400 = vsel %vm398, %v395, %v397
      %vm401 = vcmask 31744
      %v403 = vsel %vm401, %v254, 0
      %v406 = vsel %vm262, %v399, 0
      %v409 = vsel %vm262, %v400, 0
      %v412 = vsel %vm262, %v397, 0
      %414 = vmatprep.subr.bf16.mxu0 0
      %415 = vmatpush1.bf16.msra.mxu0 0
      %416 = vmatprep.subr.bf16.mxu0 0
      %417 = vmatpush1.bf16.msra.mxu0 0
      %418 = vmatprep.subr.bf16.mxu0 0
      %419 = vmatpush1.bf16.msra.mxu0 0
      %420 = vmatprep.subr.bf16.mxu0 0
      %421 = vmatpush1.bf16.msra.mxu0 0
      %422 = vmatprep.subr.bf16.mxu0 0
      %423 = vmatpush1.bf16.msra.mxu0 0
      %424 = vmatprep.subr.bf16.mxu0 0
      %425 = vmatpush1.bf16.msra.mxu0 0
      %426 = vmatprep.subr.bf16.mxu0 0
      %427 = vmatpush1.bf16.msra.mxu0 0
      %428 = vmatprep.subr.bf16.mxu0 %v409
      %429 = vmatpush1.bf16.msra.mxu0 %v406
      %430 = vmatprep.subr.bf16.mxu0 0
      %431 = vmatpush2.bf16.msra.mxu0 0
      %432 = vmatprep.subr.bf16.mxu0 0
      %433 = vmatpush2.bf16.msra.mxu0 0
      %434 = vmatprep.subr.bf16.mxu0 0
      %435 = vmatpush2.bf16.msra.mxu0 0
      %436 = vmatprep.subr.bf16.mxu0 0
      %437 = vmatpush2.bf16.msra.mxu0 0
      %438 = vmatprep.subr.bf16.mxu0 0
      %439 = vmatpush2.bf16.msra.mxu0 0
      %440 = vmatprep.subr.bf16.mxu0 0
      %441 = vmatpush2.bf16.msra.mxu0 0
      %442 = vmatprep.subr.bf16.mxu0 0
      %443 = vmatpush2.bf16.msra.mxu0 0
      %444 = vmatprep.subr.bf16.mxu0 0
      %445 = vmatpush2.bf16.msra.mxu0 0
      %446 = vmatprep.mubr.bf16.mxu0 0
      %447 = vmatmul.mubr.bf16.gmra.mxu0 %v403
      %v448 = vpop.f32.mrf.mxu0
      %v449 = vadd.f32 0.0, %v448
      %v450 = vpop.f32.mrf.mxu0
      %v451 = vadd.f32 0.0, %v450
      %v452 = vpop.f32.mrf.mxu0
      %v453 = vpop.f32.mrf.mxu0
      %454 = vdwg.mxu0
      %455 = vmatprep.subr.bf16.mxu0 0
      %456 = vmatpush1.bf16.msra.mxu0 0
      %457 = vmatprep.subr.bf16.mxu0 0
      %458 = vmatpush1.bf16.msra.mxu0 0
      %459 = vmatprep.subr.bf16.mxu0 0
      %460 = vmatpush1.bf16.msra.mxu0 0
      %461 = vmatprep.subr.bf16.mxu0 0
      %462 = vmatpush1.bf16.msra.mxu0 0
      %463 = vmatprep.subr.bf16.mxu0 0
      %464 = vmatpush1.bf16.msra.mxu0 0
      %465 = vmatprep.subr.bf16.mxu0 0
      %466 = vmatpush1.bf16.msra.mxu0 0
      %467 = vmatprep.subr.bf16.mxu0 0
      %468 = vmatpush1.bf16.msra.mxu0 0
      %469 = vmatprep.subr.bf16.mxu0 0
      %470 = vmatpush1.bf16.msra.mxu0 %v412
      %471 = vmatprep.subr.bf16.mxu0 0
      %472 = vmatpush2.bf16.msra.mxu0 0
      %473 = vmatprep.subr.bf16.mxu0 0
      %474 = vmatpush2.bf16.msra.mxu0 0
      %475 = vmatprep.subr.bf16.mxu0 0
      %476 = vmatpush2.bf16.msra.mxu0 0
      %477 = vmatprep.subr.bf16.mxu0 0
      %478 = vmatpush2.bf16.msra.mxu0 0
      %479 = vmatprep.subr.bf16.mxu0 0
      %480 = vmatpush2.bf16.msra.mxu0 0
      %481 = vmatprep.subr.bf16.mxu0 0
      %482 = vmatpush2.bf16.msra.mxu0 0
      %483 = vmatprep.subr.bf16.mxu0 0
      %484 = vmatpush2.bf16.msra.mxu0 0
      %485 = vmatprep.subr.bf16.mxu0 0
      %486 = vmatpush2.bf16.msra.mxu0 0
      %487 = vmatprep.mubr.bf16.mxu0 0
      %488 = vmatmul.mubr.bf16.gmra.mxu0 %v403
      %v489 = vpop.f32.mrf.mxu0
      %v490 = vadd.f32 0.0, %v489
      %v491 = vpop.f32.mrf.mxu0
      %v492 = vpop.f32.mrf.mxu0
      %v493 = vpop.f32.mrf.mxu0
      %494 = vdwg.mxu0
      %v496 = vsel %vm401, %v253, 0
      %v499 = vsel %vm262, %v383, 0
      %v502 = vsel %vm262, %v391, 0
      %v505 = vsel %vm262, %v390, 0
      %507 = vmatprep.subr.bf16.mxu0 0
      %508 = vmatpush1.bf16.msra.mxu0 0
      %509 = vmatprep.subr.bf16.mxu0 0
      %510 = vmatpush1.bf16.msra.mxu0 0
      %511 = vmatprep.subr.bf16.mxu0 0
      %512 = vmatpush1.bf16.msra.mxu0 0
      %513 = vmatprep.subr.bf16.mxu0 0
      %514 = vmatpush1.bf16.msra.mxu0 0
      %515 = vmatprep.subr.bf16.mxu0 0
      %516 = vmatpush1.bf16.msra.mxu0 0
      %517 = vmatprep.subr.bf16.mxu0 0
      %518 = vmatpush1.bf16.msra.mxu0 0
      %519 = vmatprep.subr.bf16.mxu0 0
      %520 = vmatpush1.bf16.msra.mxu0 0
      %521 = vmatprep.subr.bf16.mxu0 %v502
      %522 = vmatpush1.bf16.msra.mxu0 %v499
      %523 = vmatprep.subr.bf16.mxu0 0
      %524 = vmatpush2.bf16.msra.mxu0 0
      %525 = vmatprep.subr.bf16.mxu0 0
      %526 = vmatpush2.bf16.msra.mxu0 0
      %527 = vmatprep.subr.bf16.mxu0 0
      %528 = vmatpush2.bf16.msra.mxu0 0
      %529 = vmatprep.subr.bf16.mxu0 0
      %530 = vmatpush2.bf16.msra.mxu0 0
      %531 = vmatprep.subr.bf16.mxu0 0
      %532 = vmatpush2.bf16.msra.mxu0 0
      %533 = vmatprep.subr.bf16.mxu0 0
      %534 = vmatpush2.bf16.msra.mxu0 0
      %535 = vmatprep.subr.bf16.mxu0 0
      %536 = vmatpush2.bf16.msra.mxu0 0
      %537 = vmatprep.subr.bf16.mxu0 0
      %538 = vmatpush2.bf16.msra.mxu0 0
      %539 = vmatprep.mubr.bf16.mxu0 0
      %540 = vmatmul.mubr.bf16.gmra.mxu0 %v496
      %v541 = vpop.f32.mrf.mxu0
      %v542 = vadd.f32 %v449, %v541
      %v543 = vpop.f32.mrf.mxu0
      %v544 = vadd.f32 %v451, %v543
      %v545 = vpop.f32.mrf.mxu0
      %v546 = vpop.f32.mrf.mxu0
      %547 = vdwg.mxu0
      %548 = vmatprep.subr.bf16.mxu0 0
      %549 = vmatpush1.bf16.msra.mxu0 0
      %550 = vmatprep.subr.bf16.mxu0 0
      %551 = vmatpush1.bf16.msra.mxu0 0
      %552 = vmatprep.subr.bf16.mxu0 0
      %553 = vmatpush1.bf16.msra.mxu0 0
      %554 = vmatprep.subr.bf16.mxu0 0
      %555 = vmatpush1.bf16.msra.mxu0 0
      %556 = vmatprep.subr.bf16.mxu0 0
      %557 = vmatpush1.bf16.msra.mxu0 0
      %558 = vmatprep.subr.bf16.mxu0 0
      %559 = vmatpush1.bf16.msra.mxu0 0
      %560 = vmatprep.subr.bf16.mxu0 0
      %561 = vmatpush1.bf16.msra.mxu0 0
      %562 = vmatprep.subr.bf16.mxu0 0
      %563 = vmatpush1.bf16.msra.mxu0 %v505
      %564 = vmatprep.subr.bf16.mxu0 0
      %565 = vmatpush2.bf16.msra.mxu0 0
      %566 = vmatprep.subr.bf16.mxu0 0
      %567 = vmatpush2.bf16.msra.mxu0 0
      %568 = vmatprep.subr.bf16.mxu0 0
      %569 = vmatpush2.bf16.msra.mxu0 0
      %570 = vmatprep.subr.bf16.mxu0 0
      %571 = vmatpush2.bf16.msra.mxu0 0
      %572 = vmatprep.subr.bf16.mxu0 0
      %573 = vmatpush2.bf16.msra.mxu0 0
      %574 = vmatprep.subr.bf16.mxu0 0
      %575 = vmatpush2.bf16.msra.mxu0 0
      %576 = vmatprep.subr.bf16.mxu0 0
      %577 = vmatpush2.bf16.msra.mxu0 0
      %578 = vmatprep.subr.bf16.mxu0 0
      %579 = vmatpush2.bf16.msra.mxu0 0
      %580 = vmatprep.mubr.bf16.mxu0 0
      %581 = vmatmul.mubr.bf16.gmra.mxu0 %v496
      %v582 = vpop.f32.mrf.mxu0
      %v583 = vadd.f32 %v490, %v582
      %v584 = vpop.f32.mrf.mxu0
      %v585 = vpop.f32.mrf.mxu0
      %v586 = vpop.f32.mrf.mxu0
      %587 = vdwg.mxu0
      %588 = vrot.lane.b32.xlu0 %v383, 126
      %v589 = vpop.permute.xlu0 %588
      %590 = vrot.lane.b32.xlu0 %v391, 126
      %v591 = vpop.permute.xlu0 %590
      %592 = vrot.lane.b32.xlu0 %v390, 126
      %v593 = vpop.permute.xlu0 %592
      %vm594 = vcmask 1031168
      %v595 = vsel %vm594, %v589, %v591
      %v596 = vsel %vm594, %v591, %v593
      %v598 = vsel %vm401, %v255, 0
      %v601 = vsel %vm262, %v595, 0
      %v604 = vsel %vm262, %v596, 0
      %v607 = vsel %vm262, %v593, 0
      %609 = vmatprep.subr.bf16.mxu0 0
      %610 = vmatpush1.bf16.msra.mxu0 0
      %611 = vmatprep.subr.bf16.mxu0 0
      %612 = vmatpush1.bf16.msra.mxu0 0
      %613 = vmatprep.subr.bf16.mxu0 0
      %614 = vmatpush1.bf16.msra.mxu0 0
      %615 = vmatprep.subr.bf16.mxu0 0
      %616 = vmatpush1.bf16.msra.mxu0 0
      %617 = vmatprep.subr.bf16.mxu0 0
      %618 = vmatpush1.bf16.msra.mxu0 0
      %619 = vmatprep.subr.bf16.mxu0 0
      %620 = vmatpush1.bf16.msra.mxu0 0
      %621 = vmatprep.subr.bf16.mxu0 0
      %622 = vmatpush1.bf16.msra.mxu0 0
      %623 = vmatprep.subr.bf16.mxu0 %v604
      %624 = vmatpush1.bf16.msra.mxu0 %v601
      %625 = vmatprep.subr.bf16.mxu0 0
      %626 = vmatpush2.bf16.msra.mxu0 0
      %627 = vmatprep.subr.bf16.mxu0 0
      %628 = vmatpush2.bf16.msra.mxu0 0
      %629 = vmatprep.subr.bf16.mxu0 0
      %630 = vmatpush2.bf16.msra.mxu0 0
      %631 = vmatprep.subr.bf16.mxu0 0
      %632 = vmatpush2.bf16.msra.mxu0 0
      %633 = vmatprep.subr.bf16.mxu0 0
      %634 = vmatpush2.bf16.msra.mxu0 0
      %635 = vmatprep.subr.bf16.mxu0 0
      %636 = vmatpush2.bf16.msra.mxu0 0
      %637 = vmatprep.subr.bf16.mxu0 0
      %638 = vmatpush2.bf16.msra.mxu0 0
      %639 = vmatprep.subr.bf16.mxu0 0
      %640 = vmatpush2.bf16.msra.mxu0 0
      %641 = vmatprep.mubr.bf16.mxu0 0
      %642 = vmatmul.mubr.bf16.gmra.mxu0 %v598
      %v643 = vpop.f32.mrf.mxu0
      %v644 = vadd.f32 0.0, %v643
      %v645 = vpop.f32.mrf.mxu0
      %v646 = vadd.f32 0.0, %v645
      %v647 = vpop.f32.mrf.mxu0
      %v648 = vpop.f32.mrf.mxu0
      %649 = vdwg.mxu0
      %650 = vmatprep.subr.bf16.mxu0 0
      %651 = vmatpush1.bf16.msra.mxu0 0
      %652 = vmatprep.subr.bf16.mxu0 0
      %653 = vmatpush1.bf16.msra.mxu0 0
      %654 = vmatprep.subr.bf16.mxu0 0
      %655 = vmatpush1.bf16.msra.mxu0 0
      %656 = vmatprep.subr.bf16.mxu0 0
      %657 = vmatpush1.bf16.msra.mxu0 0
      %658 = vmatprep.subr.bf16.mxu0 0
      %659 = vmatpush1.bf16.msra.mxu0 0
      %660 = vmatprep.subr.bf16.mxu0 0
      %661 = vmatpush1.bf16.msra.mxu0 0
      %662 = vmatprep.subr.bf16.mxu0 0
      %663 = vmatpush1.bf16.msra.mxu0 0
      %664 = vmatprep.subr.bf16.mxu0 0
      %665 = vmatpush1.bf16.msra.mxu0 %v607
      %666 = vmatprep.subr.bf16.mxu0 0
      %667 = vmatpush2.bf16.msra.mxu0 0
      %668 = vmatprep.subr.bf16.mxu0 0
      %669 = vmatpush2.bf16.msra.mxu0 0
      %670 = vmatprep.subr.bf16.mxu0 0
      %671 = vmatpush2.bf16.msra.mxu0 0
      %672 = vmatprep.subr.bf16.mxu0 0
      %673 = vmatpush2.bf16.msra.mxu0 0
      %674 = vmatprep.subr.bf16.mxu0 0
      %675 = vmatpush2.bf16.msra.mxu0 0
      %676 = vmatprep.subr.bf16.mxu0 0
      %677 = vmatpush2.bf16.msra.mxu0 0
      %678 = vmatprep.subr.bf16.mxu0 0
      %679 = vmatpush2.bf16.msra.mxu0 0
      %680 = vmatprep.subr.bf16.mxu0 0
      %681 = vmatpush2.bf16.msra.mxu0 0
      %682 = vmatprep.mubr.bf16.mxu0 0
      %683 = vmatmul.mubr.bf16.gmra.mxu0 %v598
      %v684 = vpop.f32.mrf.mxu0
      %v685 = vadd.f32 0.0, %v684
      %v686 = vpop.f32.mrf.mxu0
      %v687 = vpop.f32.mrf.mxu0
      %v688 = vpop.f32.mrf.mxu0
      %689 = vdwg.mxu0
      %v690 = vadd.f32 %v542, %v644
      %v691 = vadd.f32 %v544, %v646
      %v692 = vadd.f32 %v583, %v685
      %693 = vrot.lane.b32.xlu0 %v383, 110
      %v694 = vpop.permute.xlu0 %693
      %695 = vrot.lane.b32.xlu0 %v391, 110
      %v696 = vpop.permute.xlu0 %695
      %697 = vrot.lane.b32.xlu0 %v390, 110
      %v698 = vpop.permute.xlu0 %697
      %vm699 = vcmask 900096
      %v700 = vsel %vm699, %v694, %v696
      %v701 = vsel %vm699, %v696, %v698
      %v703 = vsel %vm401, %v256, 0
      %v706 = vsel %vm262, %v700, 0
      %v709 = vsel %vm262, %v701, 0
      %v712 = vsel %vm262, %v698, 0
      %714 = vmatprep.subr.bf16.mxu0 0
      %715 = vmatpush1.bf16.msra.mxu0 0
      %716 = vmatprep.subr.bf16.mxu0 0
      %717 = vmatpush1.bf16.msra.mxu0 0
      %718 = vmatprep.subr.bf16.mxu0 0
      %719 = vmatpush1.bf16.msra.mxu0 0
      %720 = vmatprep.subr.bf16.mxu0 0
      %721 = vmatpush1.bf16.msra.mxu0 0
      %722 = vmatprep.subr.bf16.mxu0 0
      %723 = vmatpush1.bf16.msra.mxu0 0
      %724 = vmatprep.subr.bf16.mxu0 0
      %725 = vmatpush1.bf16.msra.mxu0 0
      %726 = vmatprep.subr.bf16.mxu0 0
      %727 = vmatpush1.bf16.msra.mxu0 0
      %728 = vmatprep.subr.bf16.mxu0 %v709
      %729 = vmatpush1.bf16.msra.mxu0 %v706
      %730 = vmatprep.subr.bf16.mxu0 0
      %731 = vmatpush2.bf16.msra.mxu0 0
      %732 = vmatprep.subr.bf16.mxu0 0
      %733 = vmatpush2.bf16.msra.mxu0 0
      %734 = vmatprep.subr.bf16.mxu0 0
      %735 = vmatpush2.bf16.msra.mxu0 0
      %736 = vmatprep.subr.bf16.mxu0 0
      %737 = vmatpush2.bf16.msra.mxu0 0
      %738 = vmatprep.subr.bf16.mxu0 0
      %739 = vmatpush2.bf16.msra.mxu0 0
      %740 = vmatprep.subr.bf16.mxu0 0
      %741 = vmatpush2.bf16.msra.mxu0 0
      %742 = vmatprep.subr.bf16.mxu0 0
      %743 = vmatpush2.bf16.msra.mxu0 0
      %744 = vmatprep.subr.bf16.mxu0 0
      %745 = vmatpush2.bf16.msra.mxu0 0
      %746 = vmatprep.mubr.bf16.mxu0 0
      %747 = vmatmul.mubr.bf16.gmra.mxu0 %v703
      %v748 = vpop.f32.mrf.mxu0
      %v749 = vadd.f32 0.0, %v748
      %v750 = vpop.f32.mrf.mxu0
      %v751 = vadd.f32 0.0, %v750
      %v752 = vpop.f32.mrf.mxu0
      %v753 = vpop.f32.mrf.mxu0
      %754 = vdwg.mxu0
      %755 = vmatprep.subr.bf16.mxu0 0
      %756 = vmatpush1.bf16.msra.mxu0 0
      %757 = vmatprep.subr.bf16.mxu0 0
      %758 = vmatpush1.bf16.msra.mxu0 0
      %759 = vmatprep.subr.bf16.mxu0 0
      %760 = vmatpush1.bf16.msra.mxu0 0
      %761 = vmatprep.subr.bf16.mxu0 0
      %762 = vmatpush1.bf16.msra.mxu0 0
      %763 = vmatprep.subr.bf16.mxu0 0
      %764 = vmatpush1.bf16.msra.mxu0 0
      %765 = vmatprep.subr.bf16.mxu0 0
      %766 = vmatpush1.bf16.msra.mxu0 0
      %767 = vmatprep.subr.bf16.mxu0 0
      %768 = vmatpush1.bf16.msra.mxu0 0
      %769 = vmatprep.subr.bf16.mxu0 0
      %770 = vmatpush1.bf16.msra.mxu0 %v712
      %771 = vmatprep.subr.bf16.mxu0 0
      %772 = vmatpush2.bf16.msra.mxu0 0
      %773 = vmatprep.subr.bf16.mxu0 0
      %774 = vmatpush2.bf16.msra.mxu0 0
      %775 = vmatprep.subr.bf16.mxu0 0
      %776 = vmatpush2.bf16.msra.mxu0 0
      %777 = vmatprep.subr.bf16.mxu0 0
      %778 = vmatpush2.bf16.msra.mxu0 0
      %779 = vmatprep.subr.bf16.mxu0 0
      %780 = vmatpush2.bf16.msra.mxu0 0
      %781 = vmatprep.subr.bf16.mxu0 0
      %782 = vmatpush2.bf16.msra.mxu0 0
      %783 = vmatprep.subr.bf16.mxu0 0
      %784 = vmatpush2.bf16.msra.mxu0 0
      %785 = vmatprep.subr.bf16.mxu0 0
      %786 = vmatpush2.bf16.msra.mxu0 0
      %787 = vmatprep.mubr.bf16.mxu0 0
      %788 = vmatmul.mubr.bf16.gmra.mxu0 %v703
      %v789 = vpop.f32.mrf.mxu0
      %v790 = vadd.f32 0.0, %v789
      %v791 = vpop.f32.mrf.mxu0
      %v792 = vpop.f32.mrf.mxu0
      %v793 = vpop.f32.mrf.mxu0
      %794 = vdwg.mxu0
      %v795 = vadd.f32 %v690, %v749
      %v796 = vadd.f32 %v691, %v751
      %v797 = vadd.f32 %v692, %v790
      %798 = vrot.lane.b32.xlu0 %v383, 109
      %v799 = vpop.permute.xlu0 %798
      %800 = vrot.lane.b32.xlu0 %v391, 109
      %v801 = vpop.permute.xlu0 %800
      %802 = vrot.lane.b32.xlu0 %v390, 109
      %v803 = vpop.permute.xlu0 %802
      %vm804 = vcmask 891904
      %v805 = vsel %vm804, %v799, %v801
      %v806 = vsel %vm804, %v801, %v803
      %v808 = vsel %vm401, %v257, 0
      %v811 = vsel %vm262, %v805, 0
      %v814 = vsel %vm262, %v806, 0
      %v817 = vsel %vm262, %v803, 0
      %819 = vmatprep.subr.bf16.mxu0 0
      %820 = vmatpush1.bf16.msra.mxu0 0
      %821 = vmatprep.subr.bf16.mxu0 0
      %822 = vmatpush1.bf16.msra.mxu0 0
      %823 = vmatprep.subr.bf16.mxu0 0
      %824 = vmatpush1.bf16.msra.mxu0 0
      %825 = vmatprep.subr.bf16.mxu0 0
      %826 = vmatpush1.bf16.msra.mxu0 0
      %827 = vmatprep.subr.bf16.mxu0 0
      %828 = vmatpush1.bf16.msra.mxu0 0
      %829 = vmatprep.subr.bf16.mxu0 0
      %830 = vmatpush1.bf16.msra.mxu0 0
      %831 = vmatprep.subr.bf16.mxu0 0
      %832 = vmatpush1.bf16.msra.mxu0 0
      %833 = vmatprep.subr.bf16.mxu0 %v814
      %834 = vmatpush1.bf16.msra.mxu0 %v811
      %835 = vmatprep.subr.bf16.mxu0 0
      %836 = vmatpush2.bf16.msra.mxu0 0
      %837 = vmatprep.subr.bf16.mxu0 0
      %838 = vmatpush2.bf16.msra.mxu0 0
      %839 = vmatprep.subr.bf16.mxu0 0
      %840 = vmatpush2.bf16.msra.mxu0 0
      %841 = vmatprep.subr.bf16.mxu0 0
      %842 = vmatpush2.bf16.msra.mxu0 0
      %843 = vmatprep.subr.bf16.mxu0 0
      %844 = vmatpush2.bf16.msra.mxu0 0
      %845 = vmatprep.subr.bf16.mxu0 0
      %846 = vmatpush2.bf16.msra.mxu0 0
      %847 = vmatprep.subr.bf16.mxu0 0
      %848 = vmatpush2.bf16.msra.mxu0 0
      %849 = vmatprep.subr.bf16.mxu0 0
      %850 = vmatpush2.bf16.msra.mxu0 0
      %851 = vmatprep.mubr.bf16.mxu0 0
      %852 = vmatmul.mubr.bf16.gmra.mxu0 %v808
      %v853 = vpop.f32.mrf.mxu0
      %v854 = vadd.f32 0.0, %v853
      %v855 = vpop.f32.mrf.mxu0
      %v856 = vadd.f32 0.0, %v855
      %v857 = vpop.f32.mrf.mxu0
      %v858 = vpop.f32.mrf.mxu0
      %859 = vdwg.mxu0
      %860 = vmatprep.subr.bf16.mxu0 0
      %861 = vmatpush1.bf16.msra.mxu0 0
      %862 = vmatprep.subr.bf16.mxu0 0
      %863 = vmatpush1.bf16.msra.mxu0 0
      %864 = vmatprep.subr.bf16.mxu0 0
      %865 = vmatpush1.bf16.msra.mxu0 0
      %866 = vmatprep.subr.bf16.mxu0 0
      %867 = vmatpush1.bf16.msra.mxu0 0
      %868 = vmatprep.subr.bf16.mxu0 0
      %869 = vmatpush1.bf16.msra.mxu0 0
      %870 = vmatprep.subr.bf16.mxu0 0
      %871 = vmatpush1.bf16.msra.mxu0 0
      %872 = vmatprep.subr.bf16.mxu0 0
      %873 = vmatpush1.bf16.msra.mxu0 0
      %874 = vmatprep.subr.bf16.mxu0 0
      %875 = vmatpush1.bf16.msra.mxu0 %v817
      %876 = vmatprep.subr.bf16.mxu0 0
      %877 = vmatpush2.bf16.msra.mxu0 0
      %878 = vmatprep.subr.bf16.mxu0 0
      %879 = vmatpush2.bf16.msra.mxu0 0
      %880 = vmatprep.subr.bf16.mxu0 0
      %881 = vmatpush2.bf16.msra.mxu0 0
      %882 = vmatprep.subr.bf16.mxu0 0
      %883 = vmatpush2.bf16.msra.mxu0 0
      %884 = vmatprep.subr.bf16.mxu0 0
      %885 = vmatpush2.bf16.msra.mxu0 0
      %886 = vmatprep.subr.bf16.mxu0 0
      %887 = vmatpush2.bf16.msra.mxu0 0
      %888 = vmatprep.subr.bf16.mxu0 0
      %889 = vmatpush2.bf16.msra.mxu0 0
      %890 = vmatprep.subr.bf16.mxu0 0
      %891 = vmatpush2.bf16.msra.mxu0 0
      %892 = vmatprep.mubr.bf16.mxu0 0
      %893 = vmatmul.mubr.bf16.gmra.mxu0 %v808
      %v894 = vpop.f32.mrf.mxu0
      %v895 = vadd.f32 0.0, %v894
      %v896 = vpop.f32.mrf.mxu0
      %v897 = vpop.f32.mrf.mxu0
      %v898 = vpop.f32.mrf.mxu0
      %899 = vdwg.mxu0
      %v900 = vadd.f32 %v795, %v854
      %v901 = vadd.f32 %v796, %v856
      %v902 = vadd.f32 %v797, %v895
      %903 = vrot.lane.b32.xlu0 %v383, 108
      %v904 = vpop.permute.xlu0 %903
      %905 = vrot.lane.b32.xlu0 %v391, 108
      %v906 = vpop.permute.xlu0 %905
      %907 = vrot.lane.b32.xlu0 %v390, 108
      %v908 = vpop.permute.xlu0 %907
      %vm909 = vcmask 883712
      %v910 = vsel %vm909, %v904, %v906
      %v911 = vsel %vm909, %v906, %v908
      %v913 = vsel %vm401, %v258, 0
      %v916 = vsel %vm262, %v910, 0
      %v919 = vsel %vm262, %v911, 0
      %v922 = vsel %vm262, %v908, 0
      %924 = vmatprep.subr.bf16.mxu0 0
      %925 = vmatpush1.bf16.msra.mxu0 0
      %926 = vmatprep.subr.bf16.mxu0 0
      %927 = vmatpush1.bf16.msra.mxu0 0
      %928 = vmatprep.subr.bf16.mxu0 0
      %929 = vmatpush1.bf16.msra.mxu0 0
      %930 = vmatprep.subr.bf16.mxu0 0
      %931 = vmatpush1.bf16.msra.mxu0 0
      %932 = vmatprep.subr.bf16.mxu0 0
      %933 = vmatpush1.bf16.msra.mxu0 0
      %934 = vmatprep.subr.bf16.mxu0 0
      %935 = vmatpush1.bf16.msra.mxu0 0
      %936 = vmatprep.subr.bf16.mxu0 0
      %937 = vmatpush1.bf16.msra.mxu0 0
      %938 = vmatprep.subr.bf16.mxu0 %v919
      %939 = vmatpush1.bf16.msra.mxu0 %v916
      %940 = vmatprep.subr.bf16.mxu0 0
      %941 = vmatpush2.bf16.msra.mxu0 0
      %942 = vmatprep.subr.bf16.mxu0 0
      %943 = vmatpush2.bf16.msra.mxu0 0
      %944 = vmatprep.subr.bf16.mxu0 0
      %945 = vmatpush2.bf16.msra.mxu0 0
      %946 = vmatprep.subr.bf16.mxu0 0
      %947 = vmatpush2.bf16.msra.mxu0 0
      %948 = vmatprep.subr.bf16.mxu0 0
      %949 = vmatpush2.bf16.msra.mxu0 0
      %950 = vmatprep.subr.bf16.mxu0 0
      %951 = vmatpush2.bf16.msra.mxu0 0
      %952 = vmatprep.subr.bf16.mxu0 0
      %953 = vmatpush2.bf16.msra.mxu0 0
      %954 = vmatprep.subr.bf16.mxu0 0
      %955 = vmatpush2.bf16.msra.mxu0 0
      %956 = vmatprep.mubr.bf16.mxu0 0
      %957 = vmatmul.mubr.bf16.gmra.mxu0 %v913
      %v958 = vpop.f32.mrf.mxu0
      %v959 = vadd.f32 0.0, %v958
      %v960 = vpop.f32.mrf.mxu0
      %v961 = vadd.f32 0.0, %v960
      %v962 = vpop.f32.mrf.mxu0
      %v963 = vpop.f32.mrf.mxu0
      %964 = vdwg.mxu0
      %965 = vmatprep.subr.bf16.mxu0 0
      %966 = vmatpush1.bf16.msra.mxu0 0
      %967 = vmatprep.subr.bf16.mxu0 0
      %968 = vmatpush1.bf16.msra.mxu0 0
      %969 = vmatprep.subr.bf16.mxu0 0
      %970 = vmatpush1.bf16.msra.mxu0 0
      %971 = vmatprep.subr.bf16.mxu0 0
      %972 = vmatpush1.bf16.msra.mxu0 0
      %973 = vmatprep.subr.bf16.mxu0 0
      %974 = vmatpush1.bf16.msra.mxu0 0
      %975 = vmatprep.subr.bf16.mxu0 0
      %976 = vmatpush1.bf16.msra.mxu0 0
      %977 = vmatprep.subr.bf16.mxu0 0
      %978 = vmatpush1.bf16.msra.mxu0 0
      %979 = vmatprep.subr.bf16.mxu0 0
      %980 = vmatpush1.bf16.msra.mxu0 %v922
      %981 = vmatprep.subr.bf16.mxu0 0
      %982 = vmatpush2.bf16.msra.mxu0 0
      %983 = vmatprep.subr.bf16.mxu0 0
      %984 = vmatpush2.bf16.msra.mxu0 0
      %985 = vmatprep.subr.bf16.mxu0 0
      %986 = vmatpush2.bf16.msra.mxu0 0
      %987 = vmatprep.subr.bf16.mxu0 0
      %988 = vmatpush2.bf16.msra.mxu0 0
      %989 = vmatprep.subr.bf16.mxu0 0
      %990 = vmatpush2.bf16.msra.mxu0 0
      %991 = vmatprep.subr.bf16.mxu0 0
      %992 = vmatpush2.bf16.msra.mxu0 0
      %993 = vmatprep.subr.bf16.mxu0 0
      %994 = vmatpush2.bf16.msra.mxu0 0
      %995 = vmatprep.subr.bf16.mxu0 0
      %996 = vmatpush2.bf16.msra.mxu0 0
      %997 = vmatprep.mubr.bf16.mxu0 0
      %998 = vmatmul.mubr.bf16.gmra.mxu0 %v913
      %v999 = vpop.f32.mrf.mxu0
      %v1000 = vadd.f32 0.0, %v999
      %v1001 = vpop.f32.mrf.mxu0
      %v1002 = vpop.f32.mrf.mxu0
      %v1003 = vpop.f32.mrf.mxu0
      %1004 = vdwg.mxu0
      %v1005 = vadd.f32 %v900, %v959
      %v1006 = vadd.f32 %v901, %v961
      %v1007 = vadd.f32 %v902, %v1000
      %1008 = vrot.lane.b32.xlu0 %v383, 92
      %v1009 = vpop.permute.xlu0 %1008
      %1010 = vrot.lane.b32.xlu0 %v391, 92
      %v1011 = vpop.permute.xlu0 %1010
      %1012 = vrot.lane.b32.xlu0 %v390, 92
      %v1013 = vpop.permute.xlu0 %1012
      %vm1014 = vcmask 752640
      %v1015 = vsel %vm1014, %v1009, %v1011
      %v1016 = vsel %vm1014, %v1011, %v1013
      %v1018 = vsel %vm401, %v259, 0
      %v1021 = vsel %vm262, %v1015, 0
      %v1024 = vsel %vm262, %v1016, 0
      %v1027 = vsel %vm262, %v1013, 0
      %1029 = vmatprep.subr.bf16.mxu0 0
      %1030 = vmatpush1.bf16.msra.mxu0 0
      %1031 = vmatprep.subr.bf16.mxu0 0
      %1032 = vmatpush1.bf16.msra.mxu0 0
      %1033 = vmatprep.subr.bf16.mxu0 0
      %1034 = vmatpush1.bf16.msra.mxu0 0
      %1035 = vmatprep.subr.bf16.mxu0 0
      %1036 = vmatpush1.bf16.msra.mxu0 0
      %1037 = vmatprep.subr.bf16.mxu0 0
      %1038 = vmatpush1.bf16.msra.mxu0 0
      %1039 = vmatprep.subr.bf16.mxu0 0
      %1040 = vmatpush1.bf16.msra.mxu0 0
      %1041 = vmatprep.subr.bf16.mxu0 0
      %1042 = vmatpush1.bf16.msra.mxu0 0
      %1043 = vmatprep.subr.bf16.mxu0 %v1024
      %1044 = vmatpush1.bf16.msra.mxu0 %v1021
      %1045 = vmatprep.subr.bf16.mxu0 0
      %1046 = vmatpush2.bf16.msra.mxu0 0
      %1047 = vmatprep.subr.bf16.mxu0 0
      %1048 = vmatpush2.bf16.msra.mxu0 0
      %1049 = vmatprep.subr.bf16.mxu0 0
      %1050 = vmatpush2.bf16.msra.mxu0 0
      %1051 = vmatprep.subr.bf16.mxu0 0
      %1052 = vmatpush2.bf16.msra.mxu0 0
      %1053 = vmatprep.subr.bf16.mxu0 0
      %1054 = vmatpush2.bf16.msra.mxu0 0
      %1055 = vmatprep.subr.bf16.mxu0 0
      %1056 = vmatpush2.bf16.msra.mxu0 0
      %1057 = vmatprep.subr.bf16.mxu0 0
      %1058 = vmatpush2.bf16.msra.mxu0 0
      %1059 = vmatprep.subr.bf16.mxu0 0
      %1060 = vmatpush2.bf16.msra.mxu0 0
      %1061 = vmatprep.mubr.bf16.mxu0 0
      %1062 = vmatmul.mubr.bf16.gmra.mxu0 %v1018
      %v1063 = vpop.f32.mrf.mxu0
      %v1064 = vadd.f32 0.0, %v1063
      %v1065 = vpop.f32.mrf.mxu0
      %v1066 = vadd.f32 0.0, %v1065
      %v1067 = vpop.f32.mrf.mxu0
      %v1068 = vpop.f32.mrf.mxu0
      %1069 = vdwg.mxu0
      %1070 = vmatprep.subr.bf16.mxu0 0
      %1071 = vmatpush1.bf16.msra.mxu0 0
      %1072 = vmatprep.subr.bf16.mxu0 0
      %1073 = vmatpush1.bf16.msra.mxu0 0
      %1074 = vmatprep.subr.bf16.mxu0 0
      %1075 = vmatpush1.bf16.msra.mxu0 0
      %1076 = vmatprep.subr.bf16.mxu0 0
      %1077 = vmatpush1.bf16.msra.mxu0 0
      %1078 = vmatprep.subr.bf16.mxu0 0
      %1079 = vmatpush1.bf16.msra.mxu0 0
      %1080 = vmatprep.subr.bf16.mxu0 0
      %1081 = vmatpush1.bf16.msra.mxu0 0
      %1082 = vmatprep.subr.bf16.mxu0 0
      %1083 = vmatpush1.bf16.msra.mxu0 0
      %1084 = vmatprep.subr.bf16.mxu0 0
      %1085 = vmatpush1.bf16.msra.mxu0 %v1027
      %1086 = vmatprep.subr.bf16.mxu0 0
      %1087 = vmatpush2.bf16.msra.mxu0 0
      %1088 = vmatprep.subr.bf16.mxu0 0
      %1089 = vmatpush2.bf16.msra.mxu0 0
      %1090 = vmatprep.subr.bf16.mxu0 0
      %1091 = vmatpush2.bf16.msra.mxu0 0
      %1092 = vmatprep.subr.bf16.mxu0 0
      %1093 = vmatpush2.bf16.msra.mxu0 0
      %1094 = vmatprep.subr.bf16.mxu0 0
      %1095 = vmatpush2.bf16.msra.mxu0 0
      %1096 = vmatprep.subr.bf16.mxu0 0
      %1097 = vmatpush2.bf16.msra.mxu0 0
      %1098 = vmatprep.subr.bf16.mxu0 0
      %1099 = vmatpush2.bf16.msra.mxu0 0
      %1100 = vmatprep.subr.bf16.mxu0 0
      %1101 = vmatpush2.bf16.msra.mxu0 0
      %1102 = vmatprep.mubr.bf16.mxu0 0
      %1103 = vmatmul.mubr.bf16.gmra.mxu0 %v1018
      %v1104 = vpop.f32.mrf.mxu0
      %v1105 = vadd.f32 0.0, %v1104
      %v1106 = vpop.f32.mrf.mxu0
      %v1107 = vpop.f32.mrf.mxu0
      %v1108 = vpop.f32.mrf.mxu0
      %1109 = vdwg.mxu0
      %v1110 = vadd.f32 %v1005, %v1064
      %v1111 = vadd.f32 %v1006, %v1066
      %v1112 = vadd.f32 %v1007, %v1105
      %1113 = vrot.lane.b32.xlu0 %v383, 91
      %v1114 = vpop.permute.xlu0 %1113
      %1115 = vrot.lane.b32.xlu0 %v391, 91
      %v1116 = vpop.permute.xlu0 %1115
      %1117 = vrot.lane.b32.xlu0 %v390, 91
      %v1118 = vpop.permute.xlu0 %1117
      %vm1119 = vcmask 744448
      %v1120 = vsel %vm1119, %v1114, %v1116
      %v1121 = vsel %vm1119, %v1116, %v1118
      %v1123 = vsel %vm401, %v260, 0
      %v1126 = vsel %vm262, %v1120, 0
      %v1129 = vsel %vm262, %v1121, 0
      %v1132 = vsel %vm262, %v1118, 0
      %1134 = vmatprep.subr.bf16.mxu0 0
      %1135 = vmatpush1.bf16.msra.mxu0 0
      %1136 = vmatprep.subr.bf16.mxu0 0
      %1137 = vmatpush1.bf16.msra.mxu0 0
      %1138 = vmatprep.subr.bf16.mxu0 0
      %1139 = vmatpush1.bf16.msra.mxu0 0
      %1140 = vmatprep.subr.bf16.mxu0 0
      %1141 = vmatpush1.bf16.msra.mxu0 0
      %1142 = vmatprep.subr.bf16.mxu0 0
      %1143 = vmatpush1.bf16.msra.mxu0 0
      %1144 = vmatprep.subr.bf16.mxu0 0
      %1145 = vmatpush1.bf16.msra.mxu0 0
      %1146 = vmatprep.subr.bf16.mxu0 0
      %1147 = vmatpush1.bf16.msra.mxu0 0
      %1148 = vmatprep.subr.bf16.mxu0 %v1129
      %1149 = vmatpush1.bf16.msra.mxu0 %v1126
      %1150 = vmatprep.subr.bf16.mxu0 0
      %1151 = vmatpush2.bf16.msra.mxu0 0
      %1152 = vmatprep.subr.bf16.mxu0 0
      %1153 = vmatpush2.bf16.msra.mxu0 0
      %1154 = vmatprep.subr.bf16.mxu0 0
      %1155 = vmatpush2.bf16.msra.mxu0 0
      %1156 = vmatprep.subr.bf16.mxu0 0
      %1157 = vmatpush2.bf16.msra.mxu0 0
      %1158 = vmatprep.subr.bf16.mxu0 0
      %1159 = vmatpush2.bf16.msra.mxu0 0
      %1160 = vmatprep.subr.bf16.mxu0 0
      %1161 = vmatpush2.bf16.msra.mxu0 0
      %1162 = vmatprep.subr.bf16.mxu0 0
      %1163 = vmatpush2.bf16.msra.mxu0 0
      %1164 = vmatprep.subr.bf16.mxu0 0
      %1165 = vmatpush2.bf16.msra.mxu0 0
      %1166 = vmatprep.mubr.bf16.mxu0 0
      %1167 = vmatmul.mubr.bf16.gmra.mxu0 %v1123
      %v1168 = vpop.f32.mrf.mxu0
      %v1169 = vadd.f32 0.0, %v1168
      %v1170 = vpop.f32.mrf.mxu0
      %v1171 = vadd.f32 0.0, %v1170
      %v1172 = vpop.f32.mrf.mxu0
      %v1173 = vpop.f32.mrf.mxu0
      %1174 = vdwg.mxu0
      %1175 = vmatprep.subr.bf16.mxu0 0
      %1176 = vmatpush1.bf16.msra.mxu0 0
      %1177 = vmatprep.subr.bf16.mxu0 0
      %1178 = vmatpush1.bf16.msra.mxu0 0
      %1179 = vmatprep.subr.bf16.mxu0 0
      %1180 = vmatpush1.bf16.msra.mxu0 0
      %1181 = vmatprep.subr.bf16.mxu0 0
      %1182 = vmatpush1.bf16.msra.mxu0 0
      %1183 = vmatprep.subr.bf16.mxu0 0
      %1184 = vmatpush1.bf16.msra.mxu0 0
      %1185 = vmatprep.subr.bf16.mxu0 0
      %1186 = vmatpush1.bf16.msra.mxu0 0
      %1187 = vmatprep.subr.bf16.mxu0 0
      %1188 = vmatpush1.bf16.msra.mxu0 0
      %1189 = vmatprep.subr.bf16.mxu0 0
      %1190 = vmatpush1.bf16.msra.mxu0 %v1132
      %1191 = vmatprep.subr.bf16.mxu0 0
      %1192 = vmatpush2.bf16.msra.mxu0 0
      %1193 = vmatprep.subr.bf16.mxu0 0
      %1194 = vmatpush2.bf16.msra.mxu0 0
      %1195 = vmatprep.subr.bf16.mxu0 0
      %1196 = vmatpush2.bf16.msra.mxu0 0
      %1197 = vmatprep.subr.bf16.mxu0 0
      %1198 = vmatpush2.bf16.msra.mxu0 0
      %1199 = vmatprep.subr.bf16.mxu0 0
      %1200 = vmatpush2.bf16.msra.mxu0 0
      %1201 = vmatprep.subr.bf16.mxu0 0
      %1202 = vmatpush2.bf16.msra.mxu0 0
      %1203 = vmatprep.subr.bf16.mxu0 0
      %1204 = vmatpush2.bf16.msra.mxu0 0
      %1205 = vmatprep.subr.bf16.mxu0 0
      %1206 = vmatpush2.bf16.msra.mxu0 0
      %1207 = vmatprep.mubr.bf16.mxu0 0
      %1208 = vmatmul.mubr.bf16.gmra.mxu0 %v1123
      %v1209 = vpop.f32.mrf.mxu0
      %v1210 = vadd.f32 0.0, %v1209
      %v1211 = vpop.f32.mrf.mxu0
      %v1212 = vpop.f32.mrf.mxu0
      %v1213 = vpop.f32.mrf.mxu0
      %1214 = vdwg.mxu0
      %v1215 = vadd.f32 %v1110, %v1169
      %v1216 = vadd.f32 %v1111, %v1171
      %v1217 = vadd.f32 %v1112, %v1210
      %1218 = vrot.lane.b32.xlu0 %v383, 90
      %v1219 = vpop.permute.xlu0 %1218
      %1220 = vrot.lane.b32.xlu0 %v391, 90
      %v1221 = vpop.permute.xlu0 %1220
      %1222 = vrot.lane.b32.xlu0 %v390, 90
      %v1223 = vpop.permute.xlu0 %1222
      %vm1224 = vcmask 736256
      %v1225 = vsel %vm1224, %v1219, %v1221
      %v1226 = vsel %vm1224, %v1221, %v1223
      %v1228 = vsel %vm401, %v261, 0
      %v1231 = vsel %vm262, %v1225, 0
      %v1234 = vsel %vm262, %v1226, 0
      %v1237 = vsel %vm262, %v1223, 0
      %1239 = vmatprep.subr.bf16.mxu0 0
      %1240 = vmatpush1.bf16.msra.mxu0 0
      %1241 = vmatprep.subr.bf16.mxu0 0
      %1242 = vmatpush1.bf16.msra.mxu0 0
      %1243 = vmatprep.subr.bf16.mxu0 0
      %1244 = vmatpush1.bf16.msra.mxu0 0
      %1245 = vmatprep.subr.bf16.mxu0 0
      %1246 = vmatpush1.bf16.msra.mxu0 0
      %1247 = vmatprep.subr.bf16.mxu0 0
      %1248 = vmatpush1.bf16.msra.mxu0 0
      %1249 = vmatprep.subr.bf16.mxu0 0
      %1250 = vmatpush1.bf16.msra.mxu0 0
      %1251 = vmatprep.subr.bf16.mxu0 0
      %1252 = vmatpush1.bf16.msra.mxu0 0
      %1253 = vmatprep.subr.bf16.mxu0 %v1234
      %1254 = vmatpush1.bf16.msra.mxu0 %v1231
      %1255 = vmatprep.subr.bf16.mxu0 0
      %1256 = vmatpush2.bf16.msra.mxu0 0
      %1257 = vmatprep.subr.bf16.mxu0 0
      %1258 = vmatpush2.bf16.msra.mxu0 0
      %1259 = vmatprep.subr.bf16.mxu0 0
      %1260 = vmatpush2.bf16.msra.mxu0 0
      %1261 = vmatprep.subr.bf16.mxu0 0
      %1262 = vmatpush2.bf16.msra.mxu0 0
      %1263 = vmatprep.subr.bf16.mxu0 0
      %1264 = vmatpush2.bf16.msra.mxu0 0
      %1265 = vmatprep.subr.bf16.mxu0 0
      %1266 = vmatpush2.bf16.msra.mxu0 0
      %1267 = vmatprep.subr.bf16.mxu0 0
      %1268 = vmatpush2.bf16.msra.mxu0 0
      %1269 = vmatprep.subr.bf16.mxu0 0
      %1270 = vmatpush2.bf16.msra.mxu0 0
      %1271 = vmatprep.mubr.bf16.mxu0 0
      %1272 = vmatmul.mubr.bf16.gmra.mxu0 %v1228
      %v1273 = vpop.f32.mrf.mxu0
      %v1274 = vadd.f32 0.0, %v1273
      %v1275 = vpop.f32.mrf.mxu0
      %v1276 = vadd.f32 0.0, %v1275
      %v1277 = vpop.f32.mrf.mxu0
      %v1278 = vpop.f32.mrf.mxu0
      %1279 = vdwg.mxu0
      %1280 = vmatprep.subr.bf16.mxu0 0
      %1281 = vmatpush1.bf16.msra.mxu0 0
      %1282 = vmatprep.subr.bf16.mxu0 0
      %1283 = vmatpush1.bf16.msra.mxu0 0
      %1284 = vmatprep.subr.bf16.mxu0 0
      %1285 = vmatpush1.bf16.msra.mxu0 0
      %1286 = vmatprep.subr.bf16.mxu0 0
      %1287 = vmatpush1.bf16.msra.mxu0 0
      %1288 = vmatprep.subr.bf16.mxu0 0
      %1289 = vmatpush1.bf16.msra.mxu0 0
      %1290 = vmatprep.subr.bf16.mxu0 0
      %1291 = vmatpush1.bf16.msra.mxu0 0
      %1292 = vmatprep.subr.bf16.mxu0 0
      %1293 = vmatpush1.bf16.msra.mxu0 0
      %1294 = vmatprep.subr.bf16.mxu0 0
      %1295 = vmatpush1.bf16.msra.mxu0 %v1237
      %1296 = vmatprep.subr.bf16.mxu0 0
      %1297 = vmatpush2.bf16.msra.mxu0 0
      %1298 = vmatprep.subr.bf16.mxu0 0
      %1299 = vmatpush2.bf16.msra.mxu0 0
      %1300 = vmatprep.subr.bf16.mxu0 0
      %1301 = vmatpush2.bf16.msra.mxu0 0
      %1302 = vmatprep.subr.bf16.mxu0 0
      %1303 = vmatpush2.bf16.msra.mxu0 0
      %1304 = vmatprep.subr.bf16.mxu0 0
      %1305 = vmatpush2.bf16.msra.mxu0 0
      %1306 = vmatprep.subr.bf16.mxu0 0
      %1307 = vmatpush2.bf16.msra.mxu0 0
      %1308 = vmatprep.subr.bf16.mxu0 0
      %1309 = vmatpush2.bf16.msra.mxu0 0
      %1310 = vmatprep.subr.bf16.mxu0 0
      %1311 = vmatpush2.bf16.msra.mxu0 0
      %1312 = vmatprep.mubr.bf16.mxu0 0
      %1313 = vmatmul.mubr.bf16.gmra.mxu0 %v1228
      %v1314 = vpop.f32.mrf.mxu0
      %v1315 = vadd.f32 0.0, %v1314
      %v1316 = vpop.f32.mrf.mxu0
      %v1317 = vpop.f32.mrf.mxu0
      %v1318 = vpop.f32.mrf.mxu0
      %1319 = vdwg.mxu0
      %v1320 = vadd.f32 %v1215, %v1274
      %v1321 = vadd.f32 %v1216, %v1276
      %v1322 = vadd.f32 %v1217, %v1315
      %v1323 = vpack.c.bf16 %v1320, %v1320
      %v1324 = vpack.c.bf16 %v1321, %v1321
      %v1325 = vpack.c.bf16 %v1322, %v1322
      %v1329 = vunpack.c.l.b16 %v1323
      %v1330 = vunpack.c.l.b16 %v1324
      %v1331 = vunpack.c.l.b16 %v1325
      %v1332 = vpack.c.b16 %v1330, %v1329
      %v1333 = vpack.c.b16 %v1331, %v1331
      %1336 = vst [vmem:[%s237] sm:$0xff] %v1332
      %vm1337 = vcmask 257024
      %1338 = vst.msk [vmem:[%s237 + $0x8] sm:$0xf] %vm1337, %v1333
      %v1339 = vld [vmem:[%s2] sm:$0x7]
      %v1341 = vlaneseq
      %v1342 = vshrl.u32 %v1341, 7
      %v1343 = vsub.s32 0, %v1342
      %v1344 = vrot.slane %v1339, %v1343
      %v1345 = vlaneseq
      %v1346 = vshrl.u32 %v1345, 7
      %v1347 = vsub.s32 1, %v1346
      %v1348 = vrot.slane %v1339, %v1347
      %v1349 = vlaneseq
      %v1350 = vshrl.u32 %v1349, 7
      %v1351 = vsub.s32 2, %v1350
      %v1352 = vrot.slane %v1339, %v1351
      %v1356 = vmul.f32 %v1320, %v1344
      %v1357 = vmul.f32 %v1321, %v1348
      %v1358 = vmul.f32 %v1322, %v1352
      %v1359 = vadd.f32 %v1356, %v1357
      %vm1360 = vcmask 261120
      %v1361 = vsel %vm1360, %v1358, 0.0
      %v1362 = vadd.f32 %v1359, %v1361
      %1363 = vadd.xlane.f32.xlu0 %v1362
      %v1364 = vpop.xlane.xlu0 %1363
      %v1365 = vmul.f32 %v1320, %v1320
      %v1366 = vmul.f32 %v1321, %v1321
      %v1367 = vmul.f32 %v1322, %v1322
      %v1368 = vmul.f32 %v1365, %v1344
      %v1369 = vmul.f32 %v1366, %v1348
      %v1370 = vmul.f32 %v1367, %v1352
      %v1371 = vadd.f32 %v1368, %v1369
      %v1372 = vsel %vm1360, %v1370, 0.0
      %v1373 = vadd.f32 %v1371, %v1372
      %1374 = vadd.xlane.f32.xlu0 %v1373
      %v1375 = vpop.xlane.xlu0 %1374
      %vm1376 = vcmask 7168
      %1377 = vst.msk [vmem:[%s241] sm:$0xff] %vm1376, %v1364
      %1378 = vst.msk [vmem:[%s245] sm:$0xff] %vm1376, %v1375
      %p1379 = scmp.lt.s32.totalorder %s17, 1
      %s1380 = scalar_select %p1379, %s17, 1
      %s1381 = smul.addr %s1380, 3
      %s1382 = smul.addr %s1381, 4
      %s1383 = scalar_lea.vmem %s3, %s1382
      %p1384 = scmp.lt.s32.totalorder %s17, 1
      %s1385 = scalar_select %p1384, %s17, 1
      %s1386 = smul.addr %s1385, 8
      %s1387 = scalar_lea.vmem %s4, %s1386
      %p1388 = scmp.lt.s32.totalorder %s17, 1
      %s1389 = scalar_select %p1388, %s17, 1
      %s1390 = smul.addr %s1389, 8
      %s1391 = scalar_lea.vmem %s5, %s1390
      // Predicated region
      $region33: #{conv_block_forward.3} parent=31 // pred_check
        %p1392 = pneg %p103
      $region34: #{conv_block_forward.3} parent=31 // pred_check_branch
        %1394 = sbr.rel (%p1392) target = $region36
      $region35: #{conv_block_forward.3} parent=31 // pred_region
        _
      $region36: #{conv_block_forward.3} parent=31 // pred_fallthru
        _
      // Predicated region
      $region37: #{conv_block_forward.3} parent=31 // pred_check
        %p1395 = pneg %p129
      $region38: #{conv_block_forward.3} parent=31 // pred_check_branch
        %1397 = sbr.rel (%p1395) target = $region40
      $region39: #{conv_block_forward.3} parent=31 // pred_region
        _
      $region40: #{conv_block_forward.3} parent=31 // pred_fallthru
        _
      // Predicated region
      $region41: #{conv_block_forward.3} parent=31 // pred_check
        %p1398 = pneg %p155
      $region42: #{conv_block_forward.3} parent=31 // pred_check_branch
        %1400 = sbr.rel (%p1398) target = $region44
      $region43: #{conv_block_forward.3} parent=31 // pred_region
        _
      $region44: #{conv_block_forward.3} parent=31 // pred_fallthru
        _
    $region32: #{conv_block_forward.3} parent=5 // pred_fallthru
      _
    %p1401 = scmp.le.s32.totalorder 2, %s12
    // Predicated region
    $region45: #{conv_block_forward.3} parent=5 // pred_check
      %p1402 = pneg %p1401
    $region46: #{conv_block_forward.3} parent=5 // pred_check_branch
      %1404 = sbr.rel (%p1402) target = $region48
    $region47: #{conv_block_forward.3} parent=5 // pred_region
      %s1405 = ssub.s32 %s12, 2
      // Predicated region
      $region49: #{conv_block_forward.3} parent=47 // pred_check
        %p1406 = pneg %p109
      $region50: #{conv_block_forward.3} parent=47 // pred_check_branch
        %1408 = sbr.rel (%p1406) target = $region52
      $region51: #{conv_block_forward.3} parent=47 // pred_region
        %p1409 = scmp.lt.s32.totalorder %s18, 1
        %s1410 = scalar_select %p1409, %s18, 1
        %s1411 = smul.addr %s1410, 3
        %s1412 = smul.addr %s1411, 4
        %s1413 = scalar_lea.vmem %s3, %s1412
      $region52: #{conv_block_forward.3} parent=47 // pred_fallthru
        _
      // Predicated region
      $region53: #{conv_block_forward.3} parent=47 // pred_check
        %p1414 = pneg %p135
      $region54: #{conv_block_forward.3} parent=47 // pred_check_branch
        %1416 = sbr.rel (%p1414) target = $region56
      $region55: #{conv_block_forward.3} parent=47 // pred_region
        %p1417 = scmp.lt.s32.totalorder %s18, 1
        %s1418 = scalar_select %p1417, %s18, 1
        %s1419 = smul.addr %s1418, 8
        %s1420 = scalar_lea.vmem %s4, %s1419
      $region56: #{conv_block_forward.3} parent=47 // pred_fallthru
        _
      // Predicated region
      $region57: #{conv_block_forward.3} parent=47 // pred_check
        %p1421 = pneg %p161
      $region58: #{conv_block_forward.3} parent=47 // pred_check_branch
        %1423 = sbr.rel (%p1421) target = $region60
      $region59: #{conv_block_forward.3} parent=47 // pred_region
        %p1424 = scmp.lt.s32.totalorder %s18, 1
        %s1425 = scalar_select %p1424, %s18, 1
        %s1426 = smul.addr %s1425, 8
        %s1427 = scalar_lea.vmem %s5, %s1426
      $region60: #{conv_block_forward.3} parent=47 // pred_fallthru
        _
    $region48: #{conv_block_forward.3} parent=5 // pred_fallthru
      _
  $region6: #{conv_block_forward.3} parent=0 // loop_footer
    %s16 = sadd.s32 1, %s12
  $region7: #{conv_block_forward.3} parent=0 // loop_footer_branch
    %11 = sbr.rel target = $region3
  $region8: #{conv_block_forward.3} parent=0 // loop_exit
    _

</llo_original>
